<compile_context>
chip_gen: v7x
topology: tpu7x:2x2x1
jax: 0.10.0
libtpu: 0.0.40
codegen_flags: <defaults>
</compile_context>

<pallas_src>
import functools
import math

import jax
import jax.numpy as jnp
from jax.experimental import pallas as pl
from jax.experimental.pallas import tpu as pltpu

_MASK_VALUE = -1e30           # finite stand-in for -inf (no NaN from inf-inf)
_VMEM_LIMIT = 32 * 1024 * 1024  # safe on v5e (16 MiB default), v6e, v7x (64 MiB phys)


# ----------------------------------------------------------------------------
# helpers
# ----------------------------------------------------------------------------
def _pick_tile(n, cap, multiple):
    """Largest divisor of n that is <= cap and a multiple of `multiple`
    (or the full dim n, which is always a legal block extent)."""
    cap = min(n, max(1, cap))
    for t in range(cap, 0, -1):
        if n % t == 0 and (t % multiple == 0 or t == n):
            return t
    return n


def _pad_to(x, axis, mult):
    n = x.shape[axis]
    pad = (-n) % mult
    if pad == 0:
        return x
    widths = [(0, 0)] * x.ndim
    widths[axis] = (0, pad)
    return jnp.pad(x, widths)


def make_pos_encoding(d_model: int, max_seq_len: int) -> jnp.ndarray:
    """Replicates PosEncoding.__init__ buffer construction (float32)."""
    pos = jnp.arange(0, max_seq_len, dtype=jnp.float32)[:, None]
    mul = 1.0 / (10000.0 ** (jnp.arange(0, d_model, 2, dtype=jnp.float32) / d_model))
    tmp = pos * mul
    pe = jnp.ones((max_seq_len, d_model), dtype=jnp.float32)
    pe = pe.at[:, 0::2].set(jnp.sin(tmp))
    pe = pe.at[:, 1::2].set(jnp.cos(tmp))
    return pe[None, :, :]


# ----------------------------------------------------------------------------
# Kernel 1: fused embedding-scale + positional-encoding add
# ----------------------------------------------------------------------------
def _posenc_kernel(x_ref, pe_ref, o_ref, *, scale):
    o_ref[...] = (x_ref[...] * scale + pe_ref[...]).astype(o_ref.dtype)


def posenc_pallas(x, pe_table, scale=1.0):
    """out = x * scale + pe_table[:, :S, :]   (x: (B, S, D))."""
    B, S, D = x.shape
    assert D % 2 == 0, "d_model must be even for the sin/cos interleave"
    max_len = pe_table.shape[1]
    assert S <= max_len, "sequence length exceeds the positional-encoding table"

    pe = jax.lax.slice(pe_table, (0, 0, 0), (1, S, D)).astype(x.dtype)

    # Lane-dense view of the (S, D) trailing block.
    if D % 128 == 0:
        R, C = S, D
    elif (S * D) % 128 == 0:
        R, C = (S * D) // 128, 128
    else:
        R, C = S, D
    xv = x.reshape(B, R, C)
    pev = pe.reshape(1, R, C)

    itemsize = jnp.dtype(x.dtype).itemsize
    target_rows = max(1, (2 * 1024 * 1024) // (C * itemsize))   # ~2 MiB tiles
    tR = _pick_tile(R, target_rows, 8)

    # batch is the INNER grid axis: the shared pe block index does not change
    # across it, so its DMA is not re-issued per batch element.
    grid = (R // tR, B)

    out = pl.pallas_call(
        functools.partial(_posenc_kernel, scale=scale),
        out_shape=jax.ShapeDtypeStruct((B, R, C), x.dtype),
        grid=grid,
        in_specs=[
            pl.BlockSpec((1, tR, C), lambda r, b: (b, r, 0)),   # x tile
            pl.BlockSpec((1, tR, C), lambda r, b: (0, r, 0)),   # shared pe tile
        ],
        out_specs=pl.BlockSpec((1, tR, C), lambda r, b: (b, r, 0)),
        compiler_params=pltpu.CompilerParams(
            dimension_semantics=("parallel", "parallel"),
            vmem_limit_bytes=_VMEM_LIMIT,
        ),
    )(xv, pev)
    return out.reshape(B, S, D)


# ----------------------------------------------------------------------------
# Kernel 2: tiled matmul (Linear) with fused bias + optional fused ReLU
#           bf16 MXU inputs, f32 accumulation
# ----------------------------------------------------------------------------
def _matmul_kernel(a_ref, b_ref, bias_ref, o_ref, acc_ref, *, activation):
    @pl.when(pl.program_id(2) == 0)
    def _init():
        acc_ref[...] = jnp.zeros_like(acc_ref)

    acc_ref[...] += jnp.dot(a_ref[...].astype(jnp.bfloat16),
                            b_ref[...].astype(jnp.bfloat16),
                            preferred_element_type=jnp.float32)

    @pl.when(pl.program_id(2) == pl.num_programs(2) - 1)
    def _store():
        r = acc_ref[...] + bias_ref[...]
        if activation == "relu":
            r = jnp.maximum(r, 0.0)
        o_ref[...] = r.astype(o_ref.dtype)


def linear_pallas(x2d, w, bias=None, activation=None):
    """x2d: (M, K), w: (K, N) -> (M, N); fused bias add and optional ReLU."""
    M, K = x2d.shape
    K2, N = w.shape
    assert K == K2

    # Pad N to a multiple of 128 (lane-dense stores / full MXU panels) and M to
    # a multiple of 8; K keeps a full-dim fallback through _pick_tile.
    xp = _pad_to(x2d, 0, 8)
    wp = _pad_to(w, 1, 128)
    Mp = xp.shape[0]
    Np = wp.shape[1]
    if bias is None:
        bp = jnp.zeros((1, Np), jnp.float32)
    else:
        bp = _pad_to(bias.astype(jnp.float32).reshape(1, -1), 1, 128)

    tm = _pick_tile(Mp, 256, 8)
    tn = _pick_tile(Np, 512, 128)
    tk = _pick_tile(K, 1024, 128)
    grid = (Mp // tm, Np // tn, K // tk)

    out = pl.pallas_call(
        functools.partial(_matmul_kernel, activation=activation),
        out_shape=jax.ShapeDtypeStruct((Mp, Np), x2d.dtype),
        grid=grid,
        in_specs=[
            pl.BlockSpec((tm, tk), lambda i, j, k: (i, k)),
            pl.BlockSpec((tk, tn), lambda i, j, k: (k, j)),
            pl.BlockSpec((1, tn), lambda i, j, k: (0, j)),
        ],
        out_specs=pl.BlockSpec((tm, tn), lambda i, j, k: (i, j)),
        scratch_shapes=[pltpu.VMEM((tm, tn), jnp.float32)],
        compiler_params=pltpu.CompilerParams(
            dimension_semantics=("parallel", "parallel", "arbitrary"),
            vmem_limit_bytes=_VMEM_LIMIT),
    )(xp, wp, bp)

    if Mp != M or Np != N:
        out = out[:M, :N]
    return out


# ----------------------------------------------------------------------------
# Kernel 3: flash-style attention, all heads per block, in-kernel masks
# ----------------------------------------------------------------------------
def _attn_kernel(kpad_ref, q_ref, k_ref, v_ref, o_ref, m_scr, l_scr, acc_scr,
                 *, causal, use_pad, mask_value):
    _, n_head, tq, d_head = q_ref.shape
    tk = k_ref.shape[2]
    ki = pl.program_id(2)

    @pl.when(ki == 0)
    def _init():
        m_scr[...] = jnp.full_like(m_scr, mask_value)
        l_scr[...] = jnp.zeros_like(l_scr)
        acc_scr[...] = jnp.zeros_like(acc_scr)

    q = q_ref[0].astype(jnp.bfloat16)        # (H, tq, Dh)
    k = k_ref[0].astype(jnp.bfloat16)        # (H, tk, Dh)
    # scores (H, tq, tk): contract last axes, batch over heads (no k.T).
    s = jax.lax.dot_general(q, k, (((2,), (2,)), ((0,), (0,))),
                            preferred_element_type=jnp.float32)

    # Masks are built in-kernel from a tiny (1, 1, tk) pad-mask block / iota.
    if use_pad:
        kp = kpad_ref[0]                                         # (1, tk) int32
        s = s + jnp.where(kp != 0, mask_value, 0.0)[None, :, :]
    if causal:
        q_pos = pl.program_id(1) * tq + jax.lax.broadcasted_iota(jnp.int32, (tq, tk), 0)
        k_pos = ki * tk + jax.lax.broadcasted_iota(jnp.int32, (tq, tk), 1)
        s = s + jnp.where(k_pos > q_pos, mask_value, 0.0)[None, :, :]

    # Online softmax update.
    m_prev = m_scr[...]
    m_new = jnp.maximum(m_prev, jnp.max(s, axis=-1, keepdims=True))
    alpha = jnp.exp(m_prev - m_new)
    p = jnp.exp(s - m_new)
    l_scr[...] = alpha * l_scr[...] + jnp.sum(p, axis=-1, keepdims=True)
    pv = jax.lax.dot_general(p.astype(jnp.bfloat16), v_ref[0].astype(jnp.bfloat16),
                             (((2,), (1,)), ((0,), (0,))),
                             preferred_element_type=jnp.float32)
    acc_scr[...] = alpha * acc_scr[...] + pv
    m_scr[...] = m_new

    @pl.when(ki == pl.num_programs(2) - 1)
    def _finalize():
        denom = jnp.maximum(l_scr[...], 1e-30)   # guard (can't 0 in this model)
        o_ref[0] = (acc_scr[...] *
                    pl.reciprocal(denom, approx=True)).astype(o_ref.dtype)


def attention_pallas(q, k, v, kpad, *, causal, use_pad):
    """q: (B, H, Sq, Dh); k, v: (B, H, Sk, Dh); kpad: (B, 1, Sk) int32.
    Softmax scale is already folded into the Q projection weights."""
    B, H, Sq, Dh = q.shape
    Sk = k.shape[2]
    tq = _pick_tile(Sq, 256, 8)
    tk = _pick_tile(Sk, 512, 128)
    grid = (B, Sq // tq, Sk // tk)   # kv axis last ("arbitrary")

    return pl.pallas_call(
        functools.partial(_attn_kernel, causal=causal, use_pad=use_pad,
                          mask_value=_MASK_VALUE),
        out_shape=jax.ShapeDtypeStruct((B, H, Sq, Dh), q.dtype),
        grid=grid,
        in_specs=[
            pl.BlockSpec((1, 1, tk), lambda b, qi, ki: (b, 0, ki)),       # pad mask
            pl.BlockSpec((1, H, tq, Dh), lambda b, qi, ki: (b, 0, qi, 0)),
            pl.BlockSpec((1, H, tk, Dh), lambda b, qi, ki: (b, 0, ki, 0)),
            pl.BlockSpec((1, H, tk, Dh), lambda b, qi, ki: (b, 0, ki, 0)),
        ],
        out_specs=pl.BlockSpec((1, H, tq, Dh), lambda b, qi, ki: (b, 0, qi, 0)),
        scratch_shapes=[pltpu.VMEM((H, tq, 1), jnp.float32),    # m
                        pltpu.VMEM((H, tq, 1), jnp.float32),    # l
                        pltpu.VMEM((H, tq, Dh), jnp.float32)],  # acc
        compiler_params=pltpu.CompilerParams(
            dimension_semantics=("parallel", "parallel", "arbitrary"),
            vmem_limit_bytes=_VMEM_LIMIT),
    )(kpad, q, k, v)


# ----------------------------------------------------------------------------
# Kernel 4: fused residual-add + LayerNorm over the last dim
# ----------------------------------------------------------------------------
def _layernorm_kernel(x_ref, r_ref, g_ref, b_ref, o_ref, *, eps):
    x = x_ref[...].astype(jnp.float32) + r_ref[...].astype(jnp.float32)
    mean = jnp.mean(x, axis=-1, keepdims=True)
    var = jnp.mean((x - mean) ** 2, axis=-1, keepdims=True)
    y = (x - mean) * jax.lax.rsqrt(var + eps)
    o_ref[...] = (y * g_ref[...] + b_ref[...]).astype(o_ref.dtype)


def add_layernorm_pallas(x2d, r2d, g, b, eps=1e-5):
    """LayerNorm(x2d + r2d) over the last dim (residual add fused)."""
    R, D = x2d.shape
    tr = _pick_tile(R, 512, 8)
    return pl.pallas_call(
        functools.partial(_layernorm_kernel, eps=eps),
        out_shape=jax.ShapeDtypeStruct((R, D), x2d.dtype),
        grid=(R // tr,),
        in_specs=[
            pl.BlockSpec((tr, D), lambda i: (i, 0)),
            pl.BlockSpec((tr, D), lambda i: (i, 0)),
            pl.BlockSpec((1, D), lambda i: (0, 0)),
            pl.BlockSpec((1, D), lambda i: (0, 0)),
        ],
        out_specs=pl.BlockSpec((tr, D), lambda i: (i, 0)),
        compiler_params=pltpu.CompilerParams(
            dimension_semantics=("parallel",),
            vmem_limit_bytes=_VMEM_LIMIT),
    )(x2d, r2d, g.reshape(1, D), b.reshape(1, D))


# ----------------------------------------------------------------------------
# Pure-JAX reference primitives (same signatures & same bf16 MXU contract)
# ----------------------------------------------------------------------------
def linear_ref(x2d, w, bias=None, activation=None):
    y = jnp.dot(x2d.astype(jnp.bfloat16), w.astype(jnp.bfloat16),
                preferred_element_type=jnp.float32)
    if bias is not None:
        y = y + bias
    if activation == "relu":
        y = jnp.maximum(y, 0.0)
    return y.astype(x2d.dtype)


def attention_ref(q, k, v, kpad, *, causal, use_pad):
    qb, kb, vb = (t.astype(jnp.bfloat16) for t in (q, k, v))
    s = jnp.einsum("bhqd,bhkd->bhqk", qb, kb, preferred_element_type=jnp.float32)
    if use_pad:
        s = s + jnp.where(kpad[:, :, None, :] != 0, _MASK_VALUE, 0.0)
    if causal:
        Sq, Sk = s.shape[-2:]
        cm = jnp.triu(jnp.ones((Sq, Sk), dtype=bool), k=1)
        s = s + jnp.where(cm, _MASK_VALUE, 0.0)
    p = jax.nn.softmax(s, axis=-1)
    out = jnp.einsum("bhqk,bhkd->bhqd", p.astype(jnp.bfloat16), vb,
                     preferred_element_type=jnp.float32)
    return out.astype(q.dtype)


def add_layernorm_ref(x2d, r2d, g, b, eps=1e-5):
    x = x2d.astype(jnp.float32) + r2d.astype(jnp.float32)
    mean = jnp.mean(x, axis=-1, keepdims=True)
    var = jnp.mean((x - mean) ** 2, axis=-1, keepdims=True)
    return ((x - mean) * jax.lax.rsqrt(var + eps) * g + b).astype(x2d.dtype)


def posenc_ref(x, pe_table, scale=1.0):
    S = x.shape[1]
    return x * scale + pe_table[:, :S, :].astype(x.dtype)


PALLAS_OPS = dict(linear=linear_pallas, attention=attention_pallas,
                  layernorm=add_layernorm_pallas, posenc=posenc_pallas)
REF_OPS = dict(linear=linear_ref, attention=attention_ref,
               layernorm=add_layernorm_ref, posenc=posenc_ref)


# ----------------------------------------------------------------------------
# Model structure (mirrors the PyTorch modules; ops dispatch to Pallas or ref)
# ----------------------------------------------------------------------------
def _add_layer_norm_3d(ops, x, res, g, b):
    B, S, D = x.shape
    return ops["layernorm"](x.reshape(B * S, D), res.reshape(B * S, D),
                            g, b).reshape(B, S, D)


def _ffn_forward(ops, lp, x):
    B, S, D = x.shape
    h = ops["linear"](x.reshape(B * S, D), lp["ffn_w1"], activation="relu")
    return ops["linear"](h, lp["ffn_w2"]).reshape(B, S, D)


def _mha_forward(ops, lp, prefix, q_in, k_in, v_in, kpad, *, n_head, causal):
    B, Sq, d_model = q_in.shape
    Sk = k_in.shape[1]
    assert d_model % n_head == 0
    d_head = d_model // n_head
    scale = d_head ** (-0.5)

    def proj(x, w):
        S_ = x.shape[1]
        y = ops["linear"](x.reshape(B * S_, d_model), w)
        # TODO(synk): head-split transpose left to XLA (see header note).
        return y.reshape(B, S_, n_head, d_head).transpose(0, 2, 1, 3)

    qh = proj(q_in, lp[prefix + "qw"] * scale)   # fold softmax scale into Q proj
    kh = proj(k_in, lp[prefix + "kw"])
    vh = proj(v_in, lp[prefix + "vw"])

    if kpad is None:
        kpad_arr = jnp.zeros((B, 1, Sk), jnp.int32)
        use_pad = False
    else:
        kpad_arr = kpad.astype(jnp.int32).reshape(B, 1, Sk)
        use_pad = True

    ctx = ops["attention"](qh, kh, vh, kpad_arr, causal=causal, use_pad=use_pad)
    ctx = ctx.transpose(0, 2, 1, 3).reshape(B * Sq, d_model)
    return ops["linear"](ctx, lp[prefix + "ow"]).reshape(B, Sq, d_model)


def _encoder_layer(ops, lp, x, src_pad, *, n_head):
    mha = _mha_forward(ops, lp, "mha_", x, x, x, src_pad, n_head=n_head, causal=False)
    mha_out = _add_layer_norm_3d(ops, mha, x, lp["ln0_g"], lp["ln0_b"])
    ffn_out = _add_layer_norm_3d(ops, _ffn_forward(ops, lp, mha_out), mha_out,
                                 lp["ln1_g"], lp["ln1_b"])
    return ffn_out   # dropout = identity (inference)


def _decoder_layer(ops, lp, tgt, context, tgt_pad, ctx_pad, *, n_head):
    att = _mha_forward(ops, lp, "self_", tgt, tgt, tgt, None,
                       n_head=n_head, causal=True)
    if tgt_pad is not None:    # faithful to the source module's double pass
        att = _mha_forward(ops, lp, "self_", att, att, att, tgt_pad,
                           n_head=n_head, causal=False)
    self_out = _add_layer_norm_3d(ops, att, tgt, lp["ln0_g"], lp["ln0_b"])
    cross = _mha_forward(ops, lp, "cross_", self_out, context, context, ctx_pad,
                         n_head=n_head, causal=False)
    cross_out = _add_layer_norm_3d(ops, cross, self_out, lp["ln1_g"], lp["ln1_b"])
    ffn_out = _add_layer_norm_3d(ops, _ffn_forward(ops, lp, cross_out), cross_out,
                                 lp["ln2_g"], lp["ln2_b"])
    return ffn_out   # dropout = identity (inference)


def transformer_forward(params, src, tgt, ops, *, d_model, n_head, pad_idx):
    """Returns (logits, (encoder_out, decoder_layers_out)). The torch module
    only returns logits; the aux outputs are exposed for testing."""
    src_pad = (src == pad_idx)          # (B, S_src) bool key-pad mask
    tgt_pad = (tgt == pad_idx)          # (B, S_tgt)
    S_t = tgt.shape[1]

    emb_scale = math.sqrt(d_model)
    # Fused: emb * sqrt(d_model) + positional encoding (single Pallas kernel).
    src_x = ops["posenc"](jnp.take(params["src_emb"], src, axis=0), params["pe"], emb_scale)
    tgt_x = ops["posenc"](jnp.take(params["tgt_emb"], tgt, axis=0), params["pe"], emb_scale)

    enc = src_x
    for lp in params["enc_layers"]:
        enc = _encoder_layer(ops, lp, enc, src_pad, n_head=n_head)

    dec = tgt_x
    for lp in params["dec_layers"]:
        dec = _decoder_layer(ops, lp, dec, enc, tgt_pad, src_pad, n_head=n_head)

    # Faithful to the original Decoder.forward bug: it returns its input `x`,
    # not the processed `out`. The layer outputs are kept only as aux.
    decoder_out = tgt_x
    B = decoder_out.shape[0]
    logits = ops["linear"](decoder_out.reshape(B * S_t, d_model),
                           params["ow_w"], bias=params["ow_b"])
    logits = logits.reshape(B, S_t, -1)
    return logits, (enc, dec)


# ----------------------------------------------------------------------------
# Parameter construction
# ----------------------------------------------------------------------------
def _xavier(key, shape):
    fan_in, fan_out = shape
    a = math.sqrt(6.0 / (fan_in + fan_out))
    return jax.random.uniform(key, shape, jnp.float32, minval=-a, maxval=a)


def init_transformer_params(key, *, src_vocab, tgt_vocab, d_model, n_head, d_ff,
                            n_layer, max_len):
    keys = iter(jax.random.split(key, 256))
    nk = lambda: next(keys)

    def mha_params(prefix):
        return {prefix + n: _xavier(nk(), (d_model, d_model))
                for n in ("qw", "kw", "vw", "ow")}

    def ln_params(prefix):
        return {prefix + "g": jnp.ones((d_model,), jnp.float32),
                prefix + "b": jnp.zeros((d_model,), jnp.float32)}

    enc_layers = []
    for _ in range(n_layer):
        lp = {}
        lp.update(mha_params("mha_"))
        lp["ffn_w1"] = _xavier(nk(), (d_model, d_ff))
        lp["ffn_w2"] = _xavier(nk(), (d_ff, d_model))
        lp.update(ln_params("ln0_"))
        lp.update(ln_params("ln1_"))
        enc_layers.append(lp)

    dec_layers = []
    for _ in range(n_layer):
        lp = {}
        lp.update(mha_params("self_"))
        lp.update(mha_params("cross_"))
        lp["ffn_w1"] = _xavier(nk(), (d_model, d_ff))
        lp["ffn_w2"] = _xavier(nk(), (d_ff, d_model))
        lp.update(ln_params("ln0_"))
        lp.update(ln_params("ln1_"))
        lp.update(ln_params("ln2_"))
        dec_layers.append(lp)

    bound = 1.0 / math.sqrt(d_model)
    return {
        "src_emb": _xavier(nk(), (src_vocab, d_model)),
        "tgt_emb": _xavier(nk(), (tgt_vocab, d_model)),
        "pe": make_pos_encoding(d_model, max_len),
        "enc_layers": enc_layers,
        "dec_layers": dec_layers,
        "ow_w": _xavier(nk(), (d_model, tgt_vocab)),
        "ow_b": jax.random.uniform(nk(), (tgt_vocab,), jnp.float32, -bound, bound),
    }


# ----------------------------------------------------------------------------
if __name__ == "__main__":
    B, S = 2, 8
    d_model, n_head, d_ff, n_layer = 32, 4, 64, 2
    src_vocab, tgt_vocab, pad_idx, max_len = 11, 13, 0, 512

    key = jax.random.PRNGKey(0)
    k_param, k_src, k_tgt = jax.random.split(key, 3)
    params = init_transformer_params(
        k_param, src_vocab=src_vocab, tgt_vocab=tgt_vocab, d_model=d_model,
        n_head=n_head, d_ff=d_ff, n_layer=n_layer, max_len=max_len)

    src = jax.random.randint(k_src, (B, S), 1, src_vocab)
    tgt = jax.random.randint(k_tgt, (B, S), 1, tgt_vocab)
    # Put a pad token at the end of each sequence to exercise the pad masks.
    src = src.at[:, -1].set(pad_idx)
    tgt = tgt.at[:, -1].set(pad_idx)

    fwd_pallas = jax.jit(functools.partial(
        transformer_forward, ops=PALLAS_OPS,
        d_model=d_model, n_head=n_head, pad_idx=pad_idx))

    (logits, (enc_out, dec_out)) = fwd_pallas(params, src, tgt)
    logits = jax.block_until_ready(logits)

    ref_logits, (ref_enc, ref_dec) = transformer_forward(
        params, src, tgt, REF_OPS,
        d_model=d_model, n_head=n_head, pad_idx=pad_idx)

    # Tolerance covers bf16-MXU rounding differences between the fused Pallas
    # kernels (flash-ordered softmax, approx reciprocal) and the XLA reference.
    assert logits.shape == (B, S, tgt_vocab)
    assert bool(jnp.all(jnp.isfinite(logits)))
    assert bool(jnp.allclose(logits, ref_logits, rtol=3e-2, atol=3e-2)), "logits mismatch"
    assert bool(jnp.allclose(enc_out, ref_enc, rtol=3e-2, atol=3e-2)), "encoder mismatch"
    assert bool(jnp.allclose(dec_out, ref_dec, rtol=3e-2, atol=3e-2)), "decoder mismatch"

    print("KERNEL_OK")
</pallas_src>

<mosaic_0001>
module attributes {stable_mosaic.version = 11 : i64} {
  func.func @_posenc_kernel(%arg0: i32, %arg1: i32, %arg2: memref<1x2x128xf32, #tpu.memory_space<vmem>>, %arg3: memref<1x2x128xf32, #tpu.memory_space<vmem>>, %arg4: memref<1x2x128xf32, #tpu.memory_space<vmem>>) attributes {dimension_semantics = [#tpu.dimension_semantics<parallel>, #tpu.dimension_semantics<parallel>], iteration_bounds = array<i64: 1, 2>, scalar_prefetch = 0 : i64, scratch_operands = 0 : i64, tpu.core_type = #tpu.core_type<tc>, window_params = [{transform_indices = @transform_0, window_bounds = array<i64: 1, 2, 128>}, {transform_indices = @transform_1, window_bounds = array<i64: 1, 2, 128>}, {transform_indices = @transform_2, window_bounds = array<i64: 1, 2, 128>}]} {
    %c0 = arith.constant 0 : index
    %c0_0 = arith.constant 0 : index
    %c0_1 = arith.constant 0 : index
    %0 = vector.load %arg2[%c0, %c0_0, %c0_1] : memref<1x2x128xf32, #tpu.memory_space<vmem>>, vector<1x2x128xf32>
    %cst = arith.constant 5.65685415 : f32
    %1 = vector.broadcast %cst : f32 to vector<1x2x128xf32>
    %2 = arith.mulf %0, %1 : vector<1x2x128xf32>
    %c0_2 = arith.constant 0 : index
    %c0_3 = arith.constant 0 : index
    %c0_4 = arith.constant 0 : index
    %3 = vector.load %arg3[%c0_2, %c0_3, %c0_4] : memref<1x2x128xf32, #tpu.memory_space<vmem>>, vector<1x2x128xf32>
    %4 = arith.addf %2, %3 : vector<1x2x128xf32>
    %c0_5 = arith.constant 0 : index
    %c0_6 = arith.constant 0 : index
    %c0_7 = arith.constant 0 : index
    %5 = vector.load %arg4[%c0_5, %c0_6, %c0_7] : memref<1x2x128xf32, #tpu.memory_space<vmem>>, vector<1x2x128xf32>
    tpu.vector_store %arg4[%c0_5, %c0_6, %c0_7], %4 {strides = array<i32>} : memref<1x2x128xf32, #tpu.memory_space<vmem>>, vector<1x2x128xf32>,
    return
  }
  func.func @transform_0(%arg0: i32, %arg1: i32) -> (i32, i32, i32) {
    %c0_i32 = arith.constant 0 : i32
    %c0_i32_0 = arith.constant 0 : i32
    return %arg1, %arg0, %c0_i32 : i32, i32, i32
  }
  func.func @transform_1(%arg0: i32, %arg1: i32) -> (i32, i32, i32) {
    %c0_i32 = arith.constant 0 : i32
    %c0_i32_0 = arith.constant 0 : i32
    %c0_i32_1 = arith.constant 0 : i32
    return %c0_i32, %arg0, %c0_i32_0 : i32, i32, i32
  }
  func.func @transform_2(%arg0: i32, %arg1: i32) -> (i32, i32, i32) {
    %c0_i32 = arith.constant 0 : i32
    %c0_i32_0 = arith.constant 0 : i32
    return %arg1, %arg0, %c0_i32 : i32, i32, i32
  }
}

module attributes {stable_mosaic.version = 11 : i64} {
  func.func @_matmul_kernel(%arg0: i32, %arg1: i32, %arg2: i32, %arg3: memref<16x32xf32, #tpu.memory_space<vmem>>, %arg4: memref<32x128xf32, #tpu.memory_space<vmem>>, %arg5: memref<1x128xf32, #tpu.memory_space<vmem>>, %arg6: memref<16x128xf32, #tpu.memory_space<vmem>>, %arg7: memref<16x128xf32, #tpu.memory_space<vmem>>) attributes {dimension_semantics = [#tpu.dimension_semantics<parallel>, #tpu.dimension_semantics<parallel>, #tpu.dimension_semantics<arbitrary>], iteration_bounds = array<i64: 1, 1, 1>, scalar_prefetch = 0 : i64, scratch_operands = 1 : i64, tpu.core_type = #tpu.core_type<tc>, window_params = [{transform_indices = @transform_0, window_bounds = array<i64: 16, 32>}, {transform_indices = @transform_1, window_bounds = array<i64: 32, 128>}, {transform_indices = @transform_2, window_bounds = array<i64: 1, 128>}, {transform_indices = @transform_3, window_bounds = array<i64: 16, 128>}]} {
    %c0_i32 = arith.constant 0 : i32
    %0 = arith.cmpi eq, %arg2, %c0_i32 : i32
    %1 = arith.extui %0 : i1 to i32
    %c0_i32_0 = arith.constant 0 : i32
    %2 = arith.cmpi ne, %1, %c0_i32_0 : i32
    scf.if %2 {
      %cst_10 = arith.constant 0.000000e+00 : f32
      %14 = vector.broadcast %cst_10 : f32 to vector<16x128xf32>
      %c0_11 = arith.constant 0 : index
      %c0_12 = arith.constant 0 : index
      %15 = vector.load %arg7[%c0_11, %c0_12] : memref<16x128xf32, #tpu.memory_space<vmem>>, vector<16x128xf32>
      tpu.vector_store %arg7[%c0_11, %c0_12], %14 {strides = array<i32>} : memref<16x128xf32, #tpu.memory_space<vmem>>, vector<16x128xf32>,
    } else {
    }
    %c0 = arith.constant 0 : index
    %c0_1 = arith.constant 0 : index
    %3 = vector.load %arg7[%c0, %c0_1] : memref<16x128xf32, #tpu.memory_space<vmem>>, vector<16x128xf32>
    %c0_2 = arith.constant 0 : index
    %c0_3 = arith.constant 0 : index
    %4 = vector.load %arg3[%c0_2, %c0_3] : memref<16x32xf32, #tpu.memory_space<vmem>>, vector<16x32xf32>
    %5 = arith.truncf %4 : vector<16x32xf32> to vector<16x32xbf16>
    %c0_4 = arith.constant 0 : index
    %c0_5 = arith.constant 0 : index
    %6 = vector.load %arg4[%c0_4, %c0_5] : memref<32x128xf32, #tpu.memory_space<vmem>>, vector<32x128xf32>
    %7 = arith.truncf %6 : vector<32x128xf32> to vector<32x128xbf16>
    %cst = arith.constant dense<0.000000e+00> : vector<16x128xf32>
    %8 = tpu.matmul %5, %7, %cst {dimension_numbers = #tpu.dot_dimension_numbers<[1], [0], [0], [1], [0, 0, 1, 1], [], []>} : vector<16x32xbf16>, vector<32x128xbf16>, vector<16x128xf32> -> vector<16x128xf32>
    %9 = arith.addf %3, %8 : vector<16x128xf32>
    %c0_6 = arith.constant 0 : index
    %c0_7 = arith.constant 0 : index
    %10 = vector.load %arg7[%c0_6, %c0_7] : memref<16x128xf32, #tpu.memory_space<vmem>>, vector<16x128xf32>
    tpu.vector_store %arg7[%c0_6, %c0_7], %9 {strides = array<i32>} : memref<16x128xf32, #tpu.memory_space<vmem>>, vector<16x128xf32>,
    %c0_i32_8 = arith.constant 0 : i32
    %11 = arith.cmpi eq, %arg2, %c0_i32_8 : i32
    %12 = arith.extui %11 : i1 to i32
    %c0_i32_9 = arith.constant 0 : i32
    %13 = arith.cmpi ne, %12, %c0_i32_9 : i32
    scf.if %13 {
      %c0_10 = arith.constant 0 : index
      %c0_11 = arith.constant 0 : index
      %14 = vector.load %arg7[%c0_10, %c0_11] : memref<16x128xf32, #tpu.memory_space<vmem>>, vector<16x128xf32>
      %c0_12 = arith.constant 0 : index
      %c0_13 = arith.constant 0 : index
      %15 = vector.load %arg5[%c0_12, %c0_13] : memref<1x128xf32, #tpu.memory_space<vmem>>, vector<1x128xf32>
      %16 = vector.broadcast %15 : vector<1x128xf32> to vector<16x128xf32>
      %17 = arith.addf %14, %16 : vector<16x128xf32>
      %c0_14 = arith.constant 0 : index
      %c0_15 = arith.constant 0 : index
      %18 = vector.load %arg6[%c0_14, %c0_15] : memref<16x128xf32, #tpu.memory_space<vmem>>, vector<16x128xf32>
      tpu.vector_store %arg6[%c0_14, %c0_15], %17 {strides = array<i32>} : memref<16x128xf32, #tpu.memory_space<vmem>>, vector<16x128xf32>,
    } else {
    }
    return
  }
  func.func @transform_0(%arg0: i32, %arg1: i32, %arg2: i32) -> (i32, i32) {
    %c0_i32 = arith.constant 0 : i32
    return %arg0, %arg2 : i32, i32
  }
  func.func @transform_1(%arg0: i32, %arg1: i32, %arg2: i32) -> (i32, i32) {
    %c0_i32 = arith.constant 0 : i32
    return %arg2, %arg1 : i32, i32
  }
  func.func @transform_2(%arg0: i32, %arg1: i32, %arg2: i32) -> (i32, i32) {
    %c0_i32 = arith.constant 0 : i32
    %c0_i32_0 = arith.constant 0 : i32
    return %c0_i32, %arg1 : i32, i32
  }
  func.func @transform_3(%arg0: i32, %arg1: i32, %arg2: i32) -> (i32, i32) {
    %c0_i32 = arith.constant 0 : i32
    return %arg0, %arg1 : i32, i32
  }
}

module attributes {stable_mosaic.version = 11 : i64} {
  func.func @_attn_kernel(%arg0: i32, %arg1: i32, %arg2: i32, %arg3: memref<1x1x8xi32, #tpu.memory_space<vmem>>, %arg4: memref<1x4x8x8xf32, #tpu.memory_space<vmem>>, %arg5: memref<1x4x8x8xf32, #tpu.memory_space<vmem>>, %arg6: memref<1x4x8x8xf32, #tpu.memory_space<vmem>>, %arg7: memref<1x4x8x8xf32, #tpu.memory_space<vmem>>, %arg8: memref<4x8x1xf32, #tpu.memory_space<vmem>>, %arg9: memref<4x8x1xf32, #tpu.memory_space<vmem>>, %arg10: memref<4x8x8xf32, #tpu.memory_space<vmem>>) attributes {dimension_semantics = [#tpu.dimension_semantics<parallel>, #tpu.dimension_semantics<parallel>, #tpu.dimension_semantics<arbitrary>], iteration_bounds = array<i64: 2, 1, 1>, scalar_prefetch = 0 : i64, scratch_operands = 3 : i64, tpu.core_type = #tpu.core_type<tc>, window_params = [{transform_indices = @transform_0, window_bounds = array<i64: 1, 1, 8>}, {transform_indices = @transform_1, window_bounds = array<i64: 1, 4, 8, 8>}, {transform_indices = @transform_2, window_bounds = array<i64: 1, 4, 8, 8>}, {transform_indices = @transform_3, window_bounds = array<i64: 1, 4, 8, 8>}, {transform_indices = @transform_4, window_bounds = array<i64: 1, 4, 8, 8>}]} {
    %c0_i32 = arith.constant 0 : i32
    %0 = arith.cmpi eq, %arg2, %c0_i32 : i32
    %1 = arith.extui %0 : i1 to i32
    %c0_i32_0 = arith.constant 0 : i32
    %2 = arith.cmpi ne, %1, %c0_i32_0 : i32
    scf.if %2 {
      %cst_38 = arith.constant -1.000000e+30 : f32
      %54 = vector.broadcast %cst_38 : f32 to vector<4x8x1xf32>
      %c0_39 = arith.constant 0 : index
      %c0_40 = arith.constant 0 : index
      %c0_41 = arith.constant 0 : index
      %55 = vector.load %arg8[%c0_39, %c0_40, %c0_41] : memref<4x8x1xf32, #tpu.memory_space<vmem>>, vector<4x8x1xf32>
      tpu.vector_store %arg8[%c0_39, %c0_40, %c0_41], %54 {strides = array<i32>} : memref<4x8x1xf32, #tpu.memory_space<vmem>>, vector<4x8x1xf32>,
      %cst_42 = arith.constant 0.000000e+00 : f32
      %56 = vector.broadcast %cst_42 : f32 to vector<4x8x1xf32>
      %c0_43 = arith.constant 0 : index
      %c0_44 = arith.constant 0 : index
      %c0_45 = arith.constant 0 : index
      %57 = vector.load %arg9[%c0_43, %c0_44, %c0_45] : memref<4x8x1xf32, #tpu.memory_space<vmem>>, vector<4x8x1xf32>
      tpu.vector_store %arg9[%c0_43, %c0_44, %c0_45], %56 {strides = array<i32>} : memref<4x8x1xf32, #tpu.memory_space<vmem>>, vector<4x8x1xf32>,
      %cst_46 = arith.constant 0.000000e+00 : f32
      %58 = vector.broadcast %cst_46 : f32 to vector<4x8x8xf32>
      %c0_47 = arith.constant 0 : index
      %c0_48 = arith.constant 0 : index
      %c0_49 = arith.constant 0 : index
      %59 = vector.load %arg10[%c0_47, %c0_48, %c0_49] : memref<4x8x8xf32, #tpu.memory_space<vmem>>, vector<4x8x8xf32>
      tpu.vector_store %arg10[%c0_47, %c0_48, %c0_49], %58 {strides = array<i32>} : memref<4x8x8xf32, #tpu.memory_space<vmem>>, vector<4x8x8xf32>,
    } else {
    }
    %c0 = arith.constant 0 : index
    %c0_1 = arith.constant 0 : index
    %c0_2 = arith.constant 0 : index
    %c0_3 = arith.constant 0 : index
    %3 = vector.load %arg4[%c0, %c0_1, %c0_2, %c0_3] : memref<1x4x8x8xf32, #tpu.memory_space<vmem>>, vector<1x4x8x8xf32>
    %4 = vector.shape_cast %3 : vector<1x4x8x8xf32> to vector<4x8x8xf32>
    %5 = arith.truncf %4 : vector<4x8x8xf32> to vector<4x8x8xbf16>
    %c0_4 = arith.constant 0 : index
    %c0_5 = arith.constant 0 : index
    %c0_6 = arith.constant 0 : index
    %c0_7 = arith.constant 0 : index
    %6 = vector.load %arg5[%c0_4, %c0_5, %c0_6, %c0_7] : memref<1x4x8x8xf32, #tpu.memory_space<vmem>>, vector<1x4x8x8xf32>
    %7 = vector.shape_cast %6 : vector<1x4x8x8xf32> to vector<4x8x8xf32>
    %8 = arith.truncf %7 : vector<4x8x8xf32> to vector<4x8x8xbf16>
    %cst = arith.constant dense<0.000000e+00> : vector<4x8x8xf32>
    %9 = tpu.matmul %5, %8, %cst {dimension_numbers = #tpu.dot_dimension_numbers<[2], [2], [1], [1], [0, 0, 0, 1, 1, 1], [0], [0]>} : vector<4x8x8xbf16>, vector<4x8x8xbf16>, vector<4x8x8xf32> -> vector<4x8x8xf32>
    %c8_i32 = arith.constant 8 : i32
    %10 = arith.muli %arg1, %c8_i32 : i32
    %11 = tpu.iota {dimensions = array<i32: 0>} : vector<8x8xi32>
    %12 = vector.broadcast %10 : i32 to vector<8x8xi32>
    %13 = arith.addi %12, %11 : vector<8x8xi32>
    %c8_i32_8 = arith.constant 8 : i32
    %14 = arith.muli %arg2, %c8_i32_8 : i32
    %15 = tpu.iota {dimensions = array<i32: 1>} : vector<8x8xi32>
    %16 = vector.broadcast %14 : i32 to vector<8x8xi32>
    %17 = arith.addi %16, %15 : vector<8x8xi32>
    %18 = arith.cmpi sgt, %17, %13 : vector<8x8xi32>
    %cst_9 = arith.constant -1.000000e+30 : f32
    %cst_10 = arith.constant 0.000000e+00 : f32
    %19 = vector.broadcast %cst_9 : f32 to vector<8x8xf32>
    %20 = vector.broadcast %cst_10 : f32 to vector<8x8xf32>
    %21 = arith.select %18, %19, %20 : vector<8x8xi1>, vector<8x8xf32>
    %22 = vector.shape_cast %21 : vector<8x8xf32> to vector<1x8x8xf32>
    %23 = vector.broadcast %22 : vector<1x8x8xf32> to vector<4x8x8xf32>
    %24 = arith.addf %9, %23 : vector<4x8x8xf32>
    %c0_11 = arith.constant 0 : index
    %c0_12 = arith.constant 0 : index
    %c0_13 = arith.constant 0 : index
    %25 = vector.load %arg8[%c0_11, %c0_12, %c0_13] : memref<4x8x1xf32, #tpu.memory_space<vmem>>, vector<4x8x1xf32>
    %cst_14 = arith.constant dense<0xFF800000> : vector<4x8xf32>
    %26 = vector.multi_reduction <maximumf>, %24, %cst_14 [2] : vector<4x8x8xf32> to vector<4x8xf32>
    %27 = vector.shape_cast %26 : vector<4x8xf32> to vector<4x8x1xf32>
    %28 = arith.maximumf %25, %27 : vector<4x8x1xf32>
    %29 = arith.subf %25, %28 : vector<4x8x1xf32>
    %30 = math.exp %29 : vector<4x8x1xf32>
    %31 = vector.broadcast %28 : vector<4x8x1xf32> to vector<4x8x8xf32>
    %32 = arith.subf %24, %31 : vector<4x8x8xf32>
    %33 = math.exp %32 : vector<4x8x8xf32>
    %c0_15 = arith.constant 0 : index
    %c0_16 = arith.constant 0 : index
    %c0_17 = arith.constant 0 : index
    %34 = vector.load %arg9[%c0_15, %c0_16, %c0_17] : memref<4x8x1xf32, #tpu.memory_space<vmem>>, vector<4x8x1xf32>
    %35 = arith.mulf %30, %34 : vector<4x8x1xf32>
    %cst_18 = arith.constant dense<0.000000e+00> : vector<4x8xf32>
    %36 = vector.multi_reduction <add>, %33, %cst_18 [2] : vector<4x8x8xf32> to vector<4x8xf32>
    %37 = vector.shape_cast %36 : vector<4x8xf32> to vector<4x8x1xf32>
    %38 = arith.addf %35, %37 : vector<4x8x1xf32>
    %c0_19 = arith.constant 0 : index
    %c0_20 = arith.constant 0 : index
    %c0_21 = arith.constant 0 : index
    %39 = vector.load %arg9[%c0_19, %c0_20, %c0_21] : memref<4x8x1xf32, #tpu.memory_space<vmem>>, vector<4x8x1xf32>
    tpu.vector_store %arg9[%c0_19, %c0_20, %c0_21], %38 {strides = array<i32>} : memref<4x8x1xf32, #tpu.memory_space<vmem>>, vector<4x8x1xf32>,
    %40 = arith.truncf %33 : vector<4x8x8xf32> to vector<4x8x8xbf16>
    %c0_22 = arith.constant 0 : index
    %c0_23 = arith.constant 0 : index
    %c0_24 = arith.constant 0 : index
    %c0_25 = arith.constant 0 : index
    %41 = vector.load %arg6[%c0_22, %c0_23, %c0_24, %c0_25] : memref<1x4x8x8xf32, #tpu.memory_space<vmem>>, vector<1x4x8x8xf32>
    %42 = vector.shape_cast %41 : vector<1x4x8x8xf32> to vector<4x8x8xf32>
    %43 = arith.truncf %42 : vector<4x8x8xf32> to vector<4x8x8xbf16>
    %cst_26 = arith.constant dense<0.000000e+00> : vector<4x8x8xf32>
    %44 = tpu.matmul %40, %43, %cst_26 {dimension_numbers = #tpu.dot_dimension_numbers<[2], [1], [1], [2], [0, 0, 0, 1, 1, 2], [0], [0]>} : vector<4x8x8xbf16>, vector<4x8x8xbf16>, vector<4x8x8xf32> -> vector<4x8x8xf32>
    %c0_27 = arith.constant 0 : index
    %c0_28 = arith.constant 0 : index
    %c0_29 = arith.constant 0 : index
    %45 = vector.load %arg10[%c0_27, %c0_28, %c0_29] : memref<4x8x8xf32, #tpu.memory_space<vmem>>, vector<4x8x8xf32>
    %46 = vector.broadcast %30 : vector<4x8x1xf32> to vector<4x8x8xf32>
    %47 = arith.mulf %46, %45 : vector<4x8x8xf32>
    %48 = arith.addf %47, %44 : vector<4x8x8xf32>
    %c0_30 = arith.constant 0 : index
    %c0_31 = arith.constant 0 : index
    %c0_32 = arith.constant 0 : index
    %49 = vector.load %arg10[%c0_30, %c0_31, %c0_32] : memref<4x8x8xf32, #tpu.memory_space<vmem>>, vector<4x8x8xf32>
    tpu.vector_store %arg10[%c0_30, %c0_31, %c0_32], %48 {strides = array<i32>} : memref<4x8x8xf32, #tpu.memory_space<vmem>>, vector<4x8x8xf32>,
    %c0_33 = arith.constant 0 : index
    %c0_34 = arith.constant 0 : index
    %c0_35 = arith.constant 0 : index
    %50 = vector.load %arg8[%c0_33, %c0_34, %c0_35] : memref<4x8x1xf32, #tpu.memory_space<vmem>>, vector<4x8x1xf32>
    tpu.vector_store %arg8[%c0_33, %c0_34, %c0_35], %28 {strides = array<i32>} : memref<4x8x1xf32, #tpu.memory_space<vmem>>, vector<4x8x1xf32>,
    %c0_i32_36 = arith.constant 0 : i32
    %51 = arith.cmpi eq, %arg2, %c0_i32_36 : i32
    %52 = arith.extui %51 : i1 to i32
    %c0_i32_37 = arith.constant 0 : i32
    %53 = arith.cmpi ne, %52, %c0_i32_37 : i32
    scf.if %53 {
      %c0_38 = arith.constant 0 : index
      %c0_39 = arith.constant 0 : index
      %c0_40 = arith.constant 0 : index
      %54 = vector.load %arg9[%c0_38, %c0_39, %c0_40] : memref<4x8x1xf32, #tpu.memory_space<vmem>>, vector<4x8x1xf32>
      %cst_41 = arith.constant 1.000000e-30 : f32
      %55 = vector.broadcast %cst_41 : f32 to vector<4x8x1xf32>
      %56 = arith.maximumf %54, %55 : vector<4x8x1xf32>
      %c0_42 = arith.constant 0 : index
      %c0_43 = arith.constant 0 : index
      %c0_44 = arith.constant 0 : index
      %57 = vector.load %arg10[%c0_42, %c0_43, %c0_44] : memref<4x8x8xf32, #tpu.memory_space<vmem>>, vector<4x8x8xf32>
      %58 = tpu.reciprocal %56 {approx = true} : vector<4x8x1xf32> -> vector<4x8x1xf32>
      %59 = vector.broadcast %58 : vector<4x8x1xf32> to vector<4x8x8xf32>
      %60 = arith.mulf %57, %59 : vector<4x8x8xf32>
      %c0_45 = arith.constant 0 : index
      %c0_46 = arith.constant 0 : index
      %c0_47 = arith.constant 0 : index
      %c0_48 = arith.constant 0 : index
      %61 = vector.load %arg7[%c0_45, %c0_46, %c0_47, %c0_48] : memref<1x4x8x8xf32, #tpu.memory_space<vmem>>, vector<1x4x8x8xf32>
      %62 = vector.shape_cast %61 : vector<1x4x8x8xf32> to vector<4x8x8xf32>
      %63 = vector.shape_cast %60 : vector<4x8x8xf32> to vector<1x4x8x8xf32>
      tpu.vector_store %arg7[%c0_45, %c0_46, %c0_47, %c0_48], %63 {strides = array<i32>} : memref<1x4x8x8xf32, #tpu.memory_space<vmem>>, vector<1x4x8x8xf32>,
    } else {
    }
    return
  }
  func.func @transform_0(%arg0: i32, %arg1: i32, %arg2: i32) -> (i32, i32, i32) {
    %c0_i32 = arith.constant 0 : i32
    %c0_i32_0 = arith.constant 0 : i32
    return %arg0, %c0_i32, %arg2 : i32, i32, i32
  }
  func.func @transform_1(%arg0: i32, %arg1: i32, %arg2: i32) -> (i32, i32, i32, i32) {
    %c0_i32 = arith.constant 0 : i32
    %c0_i32_0 = arith.constant 0 : i32
    %c0_i32_1 = arith.constant 0 : i32
    return %arg0, %c0_i32, %arg1, %c0_i32_0 : i32, i32, i32, i32
  }
  func.func @transform_2(%arg0: i32, %arg1: i32, %arg2: i32) -> (i32, i32, i32, i32) {
    %c0_i32 = arith.constant 0 : i32
    %c0_i32_0 = arith.constant 0 : i32
    %c0_i32_1 = arith.constant 0 : i32
    return %arg0, %c0_i32, %arg2, %c0_i32_0 : i32, i32, i32, i32
  }
  func.func @transform_3(%arg0: i32, %arg1: i32, %arg2: i32) -> (i32, i32, i32, i32) {
    %c0_i32 = arith.constant 0 : i32
    %c0_i32_0 = arith.constant 0 : i32
    %c0_i32_1 = arith.constant 0 : i32
    return %arg0, %c0_i32, %arg2, %c0_i32_0 : i32, i32, i32, i32
  }
  func.func @transform_4(%arg0: i32, %arg1: i32, %arg2: i32) -> (i32, i32, i32, i32) {
    %c0_i32 = arith.constant 0 : i32
    %c0_i32_0 = arith.constant 0 : i32
    %c0_i32_1 = arith.constant 0 : i32
    return %arg0, %c0_i32, %arg1, %c0_i32_0 : i32, i32, i32, i32
  }
}

module attributes {stable_mosaic.version = 11 : i64} {
  func.func @_attn_kernel(%arg0: i32, %arg1: i32, %arg2: i32, %arg3: memref<1x1x8xi32, #tpu.memory_space<vmem>>, %arg4: memref<1x4x8x8xf32, #tpu.memory_space<vmem>>, %arg5: memref<1x4x8x8xf32, #tpu.memory_space<vmem>>, %arg6: memref<1x4x8x8xf32, #tpu.memory_space<vmem>>, %arg7: memref<1x4x8x8xf32, #tpu.memory_space<vmem>>, %arg8: memref<4x8x1xf32, #tpu.memory_space<vmem>>, %arg9: memref<4x8x1xf32, #tpu.memory_space<vmem>>, %arg10: memref<4x8x8xf32, #tpu.memory_space<vmem>>) attributes {dimension_semantics = [#tpu.dimension_semantics<parallel>, #tpu.dimension_semantics<parallel>, #tpu.dimension_semantics<arbitrary>], iteration_bounds = array<i64: 2, 1, 1>, scalar_prefetch = 0 : i64, scratch_operands = 3 : i64, tpu.core_type = #tpu.core_type<tc>, window_params = [{transform_indices = @transform_0, window_bounds = array<i64: 1, 1, 8>}, {transform_indices = @transform_1, window_bounds = array<i64: 1, 4, 8, 8>}, {transform_indices = @transform_2, window_bounds = array<i64: 1, 4, 8, 8>}, {transform_indices = @transform_3, window_bounds = array<i64: 1, 4, 8, 8>}, {transform_indices = @transform_4, window_bounds = array<i64: 1, 4, 8, 8>}]} {
    %c0_i32 = arith.constant 0 : i32
    %0 = arith.cmpi eq, %arg2, %c0_i32 : i32
    %1 = arith.extui %0 : i1 to i32
    %c0_i32_0 = arith.constant 0 : i32
    %2 = arith.cmpi ne, %1, %c0_i32_0 : i32
    scf.if %2 {
      %cst_41 = arith.constant -1.000000e+30 : f32
      %49 = vector.broadcast %cst_41 : f32 to vector<4x8x1xf32>
      %c0_42 = arith.constant 0 : index
      %c0_43 = arith.constant 0 : index
      %c0_44 = arith.constant 0 : index
      %50 = vector.load %arg8[%c0_42, %c0_43, %c0_44] : memref<4x8x1xf32, #tpu.memory_space<vmem>>, vector<4x8x1xf32>
      tpu.vector_store %arg8[%c0_42, %c0_43, %c0_44], %49 {strides = array<i32>} : memref<4x8x1xf32, #tpu.memory_space<vmem>>, vector<4x8x1xf32>,
      %cst_45 = arith.constant 0.000000e+00 : f32
      %51 = vector.broadcast %cst_45 : f32 to vector<4x8x1xf32>
      %c0_46 = arith.constant 0 : index
      %c0_47 = arith.constant 0 : index
      %c0_48 = arith.constant 0 : index
      %52 = vector.load %arg9[%c0_46, %c0_47, %c0_48] : memref<4x8x1xf32, #tpu.memory_space<vmem>>, vector<4x8x1xf32>
      tpu.vector_store %arg9[%c0_46, %c0_47, %c0_48], %51 {strides = array<i32>} : memref<4x8x1xf32, #tpu.memory_space<vmem>>, vector<4x8x1xf32>,
      %cst_49 = arith.constant 0.000000e+00 : f32
      %53 = vector.broadcast %cst_49 : f32 to vector<4x8x8xf32>
      %c0_50 = arith.constant 0 : index
      %c0_51 = arith.constant 0 : index
      %c0_52 = arith.constant 0 : index
      %54 = vector.load %arg10[%c0_50, %c0_51, %c0_52] : memref<4x8x8xf32, #tpu.memory_space<vmem>>, vector<4x8x8xf32>
      tpu.vector_store %arg10[%c0_50, %c0_51, %c0_52], %53 {strides = array<i32>} : memref<4x8x8xf32, #tpu.memory_space<vmem>>, vector<4x8x8xf32>,
    } else {
    }
    %c0 = arith.constant 0 : index
    %c0_1 = arith.constant 0 : index
    %c0_2 = arith.constant 0 : index
    %c0_3 = arith.constant 0 : index
    %3 = vector.load %arg4[%c0, %c0_1, %c0_2, %c0_3] : memref<1x4x8x8xf32, #tpu.memory_space<vmem>>, vector<1x4x8x8xf32>
    %4 = vector.shape_cast %3 : vector<1x4x8x8xf32> to vector<4x8x8xf32>
    %5 = arith.truncf %4 : vector<4x8x8xf32> to vector<4x8x8xbf16>
    %c0_4 = arith.constant 0 : index
    %c0_5 = arith.constant 0 : index
    %c0_6 = arith.constant 0 : index
    %c0_7 = arith.constant 0 : index
    %6 = vector.load %arg5[%c0_4, %c0_5, %c0_6, %c0_7] : memref<1x4x8x8xf32, #tpu.memory_space<vmem>>, vector<1x4x8x8xf32>
    %7 = vector.shape_cast %6 : vector<1x4x8x8xf32> to vector<4x8x8xf32>
    %8 = arith.truncf %7 : vector<4x8x8xf32> to vector<4x8x8xbf16>
    %cst = arith.constant dense<0.000000e+00> : vector<4x8x8xf32>
    %9 = tpu.matmul %5, %8, %cst {dimension_numbers = #tpu.dot_dimension_numbers<[2], [2], [1], [1], [0, 0, 0, 1, 1, 1], [0], [0]>} : vector<4x8x8xbf16>, vector<4x8x8xbf16>, vector<4x8x8xf32> -> vector<4x8x8xf32>
    %c0_8 = arith.constant 0 : index
    %c0_9 = arith.constant 0 : index
    %c0_10 = arith.constant 0 : index
    %10 = vector.load %arg3[%c0_8, %c0_9, %c0_10] : memref<1x1x8xi32, #tpu.memory_space<vmem>>, vector<1x1x8xi32>
    %11 = vector.shape_cast %10 : vector<1x1x8xi32> to vector<1x8xi32>
    %c0_i32_11 = arith.constant 0 : i32
    %12 = vector.broadcast %c0_i32_11 : i32 to vector<1x8xi32>
    %13 = arith.cmpi ne, %11, %12 : vector<1x8xi32>
    %cst_12 = arith.constant -1.000000e+30 : f32
    %cst_13 = arith.constant 0.000000e+00 : f32
    %14 = vector.broadcast %cst_12 : f32 to vector<1x8xf32>
    %15 = vector.broadcast %cst_13 : f32 to vector<1x8xf32>
    %16 = arith.select %13, %14, %15 : vector<1x8xi1>, vector<1x8xf32>
    %17 = vector.shape_cast %16 : vector<1x8xf32> to vector<1x1x8xf32>
    %18 = vector.broadcast %17 : vector<1x1x8xf32> to vector<4x8x8xf32>
    %19 = arith.addf %9, %18 : vector<4x8x8xf32>
    %c0_14 = arith.constant 0 : index
    %c0_15 = arith.constant 0 : index
    %c0_16 = arith.constant 0 : index
    %20 = vector.load %arg8[%c0_14, %c0_15, %c0_16] : memref<4x8x1xf32, #tpu.memory_space<vmem>>, vector<4x8x1xf32>
    %cst_17 = arith.constant dense<0xFF800000> : vector<4x8xf32>
    %21 = vector.multi_reduction <maximumf>, %19, %cst_17 [2] : vector<4x8x8xf32> to vector<4x8xf32>
    %22 = vector.shape_cast %21 : vector<4x8xf32> to vector<4x8x1xf32>
    %23 = arith.maximumf %20, %22 : vector<4x8x1xf32>
    %24 = arith.subf %20, %23 : vector<4x8x1xf32>
    %25 = math.exp %24 : vector<4x8x1xf32>
    %26 = vector.broadcast %23 : vector<4x8x1xf32> to vector<4x8x8xf32>
    %27 = arith.subf %19, %26 : vector<4x8x8xf32>
    %28 = math.exp %27 : vector<4x8x8xf32>
    %c0_18 = arith.constant 0 : index
    %c0_19 = arith.constant 0 : index
    %c0_20 = arith.constant 0 : index
    %29 = vector.load %arg9[%c0_18, %c0_19, %c0_20] : memref<4x8x1xf32, #tpu.memory_space<vmem>>, vector<4x8x1xf32>
    %30 = arith.mulf %25, %29 : vector<4x8x1xf32>
    %cst_21 = arith.constant dense<0.000000e+00> : vector<4x8xf32>
    %31 = vector.multi_reduction <add>, %28, %cst_21 [2] : vector<4x8x8xf32> to vector<4x8xf32>
    %32 = vector.shape_cast %31 : vector<4x8xf32> to vector<4x8x1xf32>
    %33 = arith.addf %30, %32 : vector<4x8x1xf32>
    %c0_22 = arith.constant 0 : index
    %c0_23 = arith.constant 0 : index
    %c0_24 = arith.constant 0 : index
    %34 = vector.load %arg9[%c0_22, %c0_23, %c0_24] : memref<4x8x1xf32, #tpu.memory_space<vmem>>, vector<4x8x1xf32>
    tpu.vector_store %arg9[%c0_22, %c0_23, %c0_24], %33 {strides = array<i32>} : memref<4x8x1xf32, #tpu.memory_space<vmem>>, vector<4x8x1xf32>,
    %35 = arith.truncf %28 : vector<4x8x8xf32> to vector<4x8x8xbf16>
    %c0_25 = arith.constant 0 : index
    %c0_26 = arith.constant 0 : index
    %c0_27 = arith.constant 0 : index
    %c0_28 = arith.constant 0 : index
    %36 = vector.load %arg6[%c0_25, %c0_26, %c0_27, %c0_28] : memref<1x4x8x8xf32, #tpu.memory_space<vmem>>, vector<1x4x8x8xf32>
    %37 = vector.shape_cast %36 : vector<1x4x8x8xf32> to vector<4x8x8xf32>
    %38 = arith.truncf %37 : vector<4x8x8xf32> to vector<4x8x8xbf16>
    %cst_29 = arith.constant dense<0.000000e+00> : vector<4x8x8xf32>
    %39 = tpu.matmul %35, %38, %cst_29 {dimension_numbers = #tpu.dot_dimension_numbers<[2], [1], [1], [2], [0, 0, 0, 1, 1, 2], [0], [0]>} : vector<4x8x8xbf16>, vector<4x8x8xbf16>, vector<4x8x8xf32> -> vector<4x8x8xf32>
    %c0_30 = arith.constant 0 : index
    %c0_31 = arith.constant 0 : index
    %c0_32 = arith.constant 0 : index
    %40 = vector.load %arg10[%c0_30, %c0_31, %c0_32] : memref<4x8x8xf32, #tpu.memory_space<vmem>>, vector<4x8x8xf32>
    %41 = vector.broadcast %25 : vector<4x8x1xf32> to vector<4x8x8xf32>
    %42 = arith.mulf %41, %40 : vector<4x8x8xf32>
    %43 = arith.addf %42, %39 : vector<4x8x8xf32>
    %c0_33 = arith.constant 0 : index
    %c0_34 = arith.constant 0 : index
    %c0_35 = arith.constant 0 : index
    %44 = vector.load %arg10[%c0_33, %c0_34, %c0_35] : memref<4x8x8xf32, #tpu.memory_space<vmem>>, vector<4x8x8xf32>
    tpu.vector_store %arg10[%c0_33, %c0_34, %c0_35], %43 {strides = array<i32>} : memref<4x8x8xf32, #tpu.memory_space<vmem>>, vector<4x8x8xf32>,
    %c0_36 = arith.constant 0 : index
    %c0_37 = arith.constant 0 : index
    %c0_38 = arith.constant 0 : index
    %45 = vector.load %arg8[%c0_36, %c0_37, %c0_38] : memref<4x8x1xf32, #tpu.memory_space<vmem>>, vector<4x8x1xf32>
    tpu.vector_store %arg8[%c0_36, %c0_37, %c0_38], %23 {strides = array<i32>} : memref<4x8x1xf32, #tpu.memory_space<vmem>>, vector<4x8x1xf32>,
    %c0_i32_39 = arith.constant 0 : i32
    %46 = arith.cmpi eq, %arg2, %c0_i32_39 : i32
    %47 = arith.extui %46 : i1 to i32
    %c0_i32_40 = arith.constant 0 : i32
    %48 = arith.cmpi ne, %47, %c0_i32_40 : i32
    scf.if %48 {
      %c0_41 = arith.constant 0 : index
      %c0_42 = arith.constant 0 : index
      %c0_43 = arith.constant 0 : index
      %49 = vector.load %arg9[%c0_41, %c0_42, %c0_43] : memref<4x8x1xf32, #tpu.memory_space<vmem>>, vector<4x8x1xf32>
      %cst_44 = arith.constant 1.000000e-30 : f32
      %50 = vector.broadcast %cst_44 : f32 to vector<4x8x1xf32>
      %51 = arith.maximumf %49, %50 : vector<4x8x1xf32>
      %c0_45 = arith.constant 0 : index
      %c0_46 = arith.constant 0 : index
      %c0_47 = arith.constant 0 : index
      %52 = vector.load %arg10[%c0_45, %c0_46, %c0_47] : memref<4x8x8xf32, #tpu.memory_space<vmem>>, vector<4x8x8xf32>
      %53 = tpu.reciprocal %51 {approx = true} : vector<4x8x1xf32> -> vector<4x8x1xf32>
      %54 = vector.broadcast %53 : vector<4x8x1xf32> to vector<4x8x8xf32>
      %55 = arith.mulf %52, %54 : vector<4x8x8xf32>
      %c0_48 = arith.constant 0 : index
      %c0_49 = arith.constant 0 : index
      %c0_50 = arith.constant 0 : index
      %c0_51 = arith.constant 0 : index
      %56 = vector.load %arg7[%c0_48, %c0_49, %c0_50, %c0_51] : memref<1x4x8x8xf32, #tpu.memory_space<vmem>>, vector<1x4x8x8xf32>
      %57 = vector.shape_cast %56 : vector<1x4x8x8xf32> to vector<4x8x8xf32>
      %58 = vector.shape_cast %55 : vector<4x8x8xf32> to vector<1x4x8x8xf32>
      tpu.vector_store %arg7[%c0_48, %c0_49, %c0_50, %c0_51], %58 {strides = array<i32>} : memref<1x4x8x8xf32, #tpu.memory_space<vmem>>, vector<1x4x8x8xf32>,
    } else {
    }
    return
  }
  func.func @transform_0(%arg0: i32, %arg1: i32, %arg2: i32) -> (i32, i32, i32) {
    %c0_i32 = arith.constant 0 : i32
    %c0_i32_0 = arith.constant 0 : i32
    return %arg0, %c0_i32, %arg2 : i32, i32, i32
  }
  func.func @transform_1(%arg0: i32, %arg1: i32, %arg2: i32) -> (i32, i32, i32, i32) {
    %c0_i32 = arith.constant 0 : i32
    %c0_i32_0 = arith.constant 0 : i32
    %c0_i32_1 = arith.constant 0 : i32
    return %arg0, %c0_i32, %arg1, %c0_i32_0 : i32, i32, i32, i32
  }
  func.func @transform_2(%arg0: i32, %arg1: i32, %arg2: i32) -> (i32, i32, i32, i32) {
    %c0_i32 = arith.constant 0 : i32
    %c0_i32_0 = arith.constant 0 : i32
    %c0_i32_1 = arith.constant 0 : i32
    return %arg0, %c0_i32, %arg2, %c0_i32_0 : i32, i32, i32, i32
  }
  func.func @transform_3(%arg0: i32, %arg1: i32, %arg2: i32) -> (i32, i32, i32, i32) {
    %c0_i32 = arith.constant 0 : i32
    %c0_i32_0 = arith.constant 0 : i32
    %c0_i32_1 = arith.constant 0 : i32
    return %arg0, %c0_i32, %arg2, %c0_i32_0 : i32, i32, i32, i32
  }
  func.func @transform_4(%arg0: i32, %arg1: i32, %arg2: i32) -> (i32, i32, i32, i32) {
    %c0_i32 = arith.constant 0 : i32
    %c0_i32_0 = arith.constant 0 : i32
    %c0_i32_1 = arith.constant 0 : i32
    return %arg0, %c0_i32, %arg1, %c0_i32_0 : i32, i32, i32, i32
  }
}

module attributes {stable_mosaic.version = 11 : i64} {
  func.func @_layernorm_kernel(%arg0: i32, %arg1: memref<16x32xf32, #tpu.memory_space<vmem>>, %arg2: memref<16x32xf32, #tpu.memory_space<vmem>>, %arg3: memref<1x32xf32, #tpu.memory_space<vmem>>, %arg4: memref<1x32xf32, #tpu.memory_space<vmem>>, %arg5: memref<16x32xf32, #tpu.memory_space<vmem>>) attributes {dimension_semantics = [#tpu.dimension_semantics<parallel>], iteration_bounds = array<i64: 1>, scalar_prefetch = 0 : i64, scratch_operands = 0 : i64, tpu.core_type = #tpu.core_type<tc>, window_params = [{transform_indices = @transform_0, window_bounds = array<i64: 16, 32>}, {transform_indices = @transform_1, window_bounds = array<i64: 16, 32>}, {pipeline_mode = #tpu.pipeline_mode<synchronous>, transform_indices = @transform_2, window_bounds = array<i64: 1, 32>}, {pipeline_mode = #tpu.pipeline_mode<synchronous>, transform_indices = @transform_3, window_bounds = array<i64: 1, 32>}, {transform_indices = @transform_4, window_bounds = array<i64: 16, 32>}]} {
    %c0 = arith.constant 0 : index
    %c0_0 = arith.constant 0 : index
    %0 = vector.load %arg1[%c0, %c0_0] : memref<16x32xf32, #tpu.memory_space<vmem>>, vector<16x32xf32>
    %c0_1 = arith.constant 0 : index
    %c0_2 = arith.constant 0 : index
    %1 = vector.load %arg2[%c0_1, %c0_2] : memref<16x32xf32, #tpu.memory_space<vmem>>, vector<16x32xf32>
    %2 = arith.addf %0, %1 : vector<16x32xf32>
    %cst = arith.constant dense<0.000000e+00> : vector<16xf32>
    %3 = vector.multi_reduction <add>, %2, %cst [1] : vector<16x32xf32> to vector<16xf32>
    %4 = vector.shape_cast %3 : vector<16xf32> to vector<16x1xf32>
    %cst_3 = arith.constant 3.200000e+01 : f32
    %5 = vector.broadcast %cst_3 : f32 to vector<16x1xf32>
    %6 = arith.divf %4, %5 : vector<16x1xf32>
    %7 = vector.broadcast %6 : vector<16x1xf32> to vector<16x32xf32>
    %8 = arith.subf %2, %7 : vector<16x32xf32>
    %9 = arith.mulf %8, %8 : vector<16x32xf32>
    %cst_4 = arith.constant dense<0.000000e+00> : vector<16xf32>
    %10 = vector.multi_reduction <add>, %9, %cst_4 [1] : vector<16x32xf32> to vector<16xf32>
    %11 = vector.shape_cast %10 : vector<16xf32> to vector<16x1xf32>
    %cst_5 = arith.constant 3.200000e+01 : f32
    %12 = vector.broadcast %cst_5 : f32 to vector<16x1xf32>
    %13 = arith.divf %11, %12 : vector<16x1xf32>
    %14 = vector.broadcast %6 : vector<16x1xf32> to vector<16x32xf32>
    %15 = arith.subf %2, %14 : vector<16x32xf32>
    %cst_6 = arith.constant 9.99999974E-6 : f32
    %16 = vector.broadcast %cst_6 : f32 to vector<16x1xf32>
    %17 = arith.addf %13, %16 : vector<16x1xf32>
    %18 = math.rsqrt %17 : vector<16x1xf32>
    %19 = vector.broadcast %18 : vector<16x1xf32> to vector<16x32xf32>
    %20 = arith.mulf %15, %19 : vector<16x32xf32>
    %c0_7 = arith.constant 0 : index
    %c0_8 = arith.constant 0 : index
    %21 = vector.load %arg3[%c0_7, %c0_8] : memref<1x32xf32, #tpu.memory_space<vmem>>, vector<1x32xf32>
    %22 = vector.broadcast %21 : vector<1x32xf32> to vector<16x32xf32>
    %23 = arith.mulf %20, %22 : vector<16x32xf32>
    %c0_9 = arith.constant 0 : index
    %c0_10 = arith.constant 0 : index
    %24 = vector.load %arg4[%c0_9, %c0_10] : memref<1x32xf32, #tpu.memory_space<vmem>>, vector<1x32xf32>
    %25 = vector.broadcast %24 : vector<1x32xf32> to vector<16x32xf32>
    %26 = arith.addf %23, %25 : vector<16x32xf32>
    %c0_11 = arith.constant 0 : index
    %c0_12 = arith.constant 0 : index
    %27 = vector.load %arg5[%c0_11, %c0_12] : memref<16x32xf32, #tpu.memory_space<vmem>>, vector<16x32xf32>
    tpu.vector_store %arg5[%c0_11, %c0_12], %26 {strides = array<i32>} : memref<16x32xf32, #tpu.memory_space<vmem>>, vector<16x32xf32>,
    return
  }
  func.func @transform_0(%arg0: i32) -> (i32, i32) {
    %c0_i32 = arith.constant 0 : i32
    %c0_i32_0 = arith.constant 0 : i32
    return %arg0, %c0_i32 : i32, i32
  }
  func.func @transform_1(%arg0: i32) -> (i32, i32) {
    %c0_i32 = arith.constant 0 : i32
    %c0_i32_0 = arith.constant 0 : i32
    return %arg0, %c0_i32 : i32, i32
  }
  func.func @transform_2(%arg0: i32) -> (i32, i32) {
    %c0_i32 = arith.constant 0 : i32
    %c0_i32_0 = arith.constant 0 : i32
    %c0_i32_1 = arith.constant 0 : i32
    return %c0_i32, %c0_i32_0 : i32, i32
  }
  func.func @transform_3(%arg0: i32) -> (i32, i32) {
    %c0_i32 = arith.constant 0 : i32
    %c0_i32_0 = arith.constant 0 : i32
    %c0_i32_1 = arith.constant 0 : i32
    return %c0_i32, %c0_i32_0 : i32, i32
  }
  func.func @transform_4(%arg0: i32) -> (i32, i32) {
    %c0_i32 = arith.constant 0 : i32
    %c0_i32_0 = arith.constant 0 : i32
    return %arg0, %c0_i32 : i32, i32
  }
}

module attributes {stable_mosaic.version = 11 : i64} {
  func.func @_matmul_kernel(%arg0: i32, %arg1: i32, %arg2: i32, %arg3: memref<16x64xf32, #tpu.memory_space<vmem>>, %arg4: memref<64x128xf32, #tpu.memory_space<vmem>>, %arg5: memref<1x128xf32, #tpu.memory_space<vmem>>, %arg6: memref<16x128xf32, #tpu.memory_space<vmem>>, %arg7: memref<16x128xf32, #tpu.memory_space<vmem>>) attributes {dimension_semantics = [#tpu.dimension_semantics<parallel>, #tpu.dimension_semantics<parallel>, #tpu.dimension_semantics<arbitrary>], iteration_bounds = array<i64: 1, 1, 1>, scalar_prefetch = 0 : i64, scratch_operands = 1 : i64, tpu.core_type = #tpu.core_type<tc>, window_params = [{transform_indices = @transform_0, window_bounds = array<i64: 16, 64>}, {transform_indices = @transform_1, window_bounds = array<i64: 64, 128>}, {transform_indices = @transform_2, window_bounds = array<i64: 1, 128>}, {transform_indices = @transform_3, window_bounds = array<i64: 16, 128>}]} {
    %c0_i32 = arith.constant 0 : i32
    %0 = arith.cmpi eq, %arg2, %c0_i32 : i32
    %1 = arith.extui %0 : i1 to i32
    %c0_i32_0 = arith.constant 0 : i32
    %2 = arith.cmpi ne, %1, %c0_i32_0 : i32
    scf.if %2 {
      %cst_10 = arith.constant 0.000000e+00 : f32
      %14 = vector.broadcast %cst_10 : f32 to vector<16x128xf32>
      %c0_11 = arith.constant 0 : index
      %c0_12 = arith.constant 0 : index
      %15 = vector.load %arg7[%c0_11, %c0_12] : memref<16x128xf32, #tpu.memory_space<vmem>>, vector<16x128xf32>
      tpu.vector_store %arg7[%c0_11, %c0_12], %14 {strides = array<i32>} : memref<16x128xf32, #tpu.memory_space<vmem>>, vector<16x128xf32>,
    } else {
    }
    %c0 = arith.constant 0 : index
    %c0_1 = arith.constant 0 : index
    %3 = vector.load %arg7[%c0, %c0_1] : memref<16x128xf32, #tpu.memory_space<vmem>>, vector<16x128xf32>
    %c0_2 = arith.constant 0 : index
    %c0_3 = arith.constant 0 : index
    %4 = vector.load %arg3[%c0_2, %c0_3] : memref<16x64xf32, #tpu.memory_space<vmem>>, vector<16x64xf32>
    %5 = arith.truncf %4 : vector<16x64xf32> to vector<16x64xbf16>
    %c0_4 = arith.constant 0 : index
    %c0_5 = arith.constant 0 : index
    %6 = vector.load %arg4[%c0_4, %c0_5] : memref<64x128xf32, #tpu.memory_space<vmem>>, vector<64x128xf32>
    %7 = arith.truncf %6 : vector<64x128xf32> to vector<64x128xbf16>
    %cst = arith.constant dense<0.000000e+00> : vector<16x128xf32>
    %8 = tpu.matmul %5, %7, %cst {dimension_numbers = #tpu.dot_dimension_numbers<[1], [0], [0], [1], [0, 0, 1, 1], [], []>} : vector<16x64xbf16>, vector<64x128xbf16>, vector<16x128xf32> -> vector<16x128xf32>
    %9 = arith.addf %3, %8 : vector<16x128xf32>
    %c0_6 = arith.constant 0 : index
    %c0_7 = arith.constant 0 : index
    %10 = vector.load %arg7[%c0_6, %c0_7] : memref<16x128xf32, #tpu.memory_space<vmem>>, vector<16x128xf32>
    tpu.vector_store %arg7[%c0_6, %c0_7], %9 {strides = array<i32>} : memref<16x128xf32, #tpu.memory_space<vmem>>, vector<16x128xf32>,
    %c0_i32_8 = arith.constant 0 : i32
    %11 = arith.cmpi eq, %arg2, %c0_i32_8 : i32
    %12 = arith.extui %11 : i1 to i32
    %c0_i32_9 = arith.constant 0 : i32
    %13 = arith.cmpi ne, %12, %c0_i32_9 : i32
    scf.if %13 {
      %c0_10 = arith.constant 0 : index
      %c0_11 = arith.constant 0 : index
      %14 = vector.load %arg7[%c0_10, %c0_11] : memref<16x128xf32, #tpu.memory_space<vmem>>, vector<16x128xf32>
      %c0_12 = arith.constant 0 : index
      %c0_13 = arith.constant 0 : index
      %15 = vector.load %arg5[%c0_12, %c0_13] : memref<1x128xf32, #tpu.memory_space<vmem>>, vector<1x128xf32>
      %16 = vector.broadcast %15 : vector<1x128xf32> to vector<16x128xf32>
      %17 = arith.addf %14, %16 : vector<16x128xf32>
      %c0_14 = arith.constant 0 : index
      %c0_15 = arith.constant 0 : index
      %18 = vector.load %arg6[%c0_14, %c0_15] : memref<16x128xf32, #tpu.memory_space<vmem>>, vector<16x128xf32>
      tpu.vector_store %arg6[%c0_14, %c0_15], %17 {strides = array<i32>} : memref<16x128xf32, #tpu.memory_space<vmem>>, vector<16x128xf32>,
    } else {
    }
    return
  }
  func.func @transform_0(%arg0: i32, %arg1: i32, %arg2: i32) -> (i32, i32) {
    %c0_i32 = arith.constant 0 : i32
    return %arg0, %arg2 : i32, i32
  }
  func.func @transform_1(%arg0: i32, %arg1: i32, %arg2: i32) -> (i32, i32) {
    %c0_i32 = arith.constant 0 : i32
    return %arg2, %arg1 : i32, i32
  }
  func.func @transform_2(%arg0: i32, %arg1: i32, %arg2: i32) -> (i32, i32) {
    %c0_i32 = arith.constant 0 : i32
    %c0_i32_0 = arith.constant 0 : i32
    return %c0_i32, %arg1 : i32, i32
  }
  func.func @transform_3(%arg0: i32, %arg1: i32, %arg2: i32) -> (i32, i32) {
    %c0_i32 = arith.constant 0 : i32
    return %arg0, %arg1 : i32, i32
  }
}

module attributes {stable_mosaic.version = 11 : i64} {
  func.func @_layernorm_kernel(%arg0: i32, %arg1: memref<16x32xf32, #tpu.memory_space<vmem>>, %arg2: memref<16x32xf32, #tpu.memory_space<vmem>>, %arg3: memref<1x32xf32, #tpu.memory_space<vmem>>, %arg4: memref<1x32xf32, #tpu.memory_space<vmem>>, %arg5: memref<16x32xf32, #tpu.memory_space<vmem>>) attributes {dimension_semantics = [#tpu.dimension_semantics<parallel>], iteration_bounds = array<i64: 1>, scalar_prefetch = 0 : i64, scratch_operands = 0 : i64, tpu.core_type = #tpu.core_type<tc>, window_params = [{transform_indices = @transform_0, window_bounds = array<i64: 16, 32>}, {transform_indices = @transform_1, window_bounds = array<i64: 16, 32>}, {pipeline_mode = #tpu.pipeline_mode<synchronous>, transform_indices = @transform_2, window_bounds = array<i64: 1, 32>}, {pipeline_mode = #tpu.pipeline_mode<synchronous>, transform_indices = @transform_3, window_bounds = array<i64: 1, 32>}, {transform_indices = @transform_4, window_bounds = array<i64: 16, 32>}]} {
    %c0 = arith.constant 0 : index
    %c0_0 = arith.constant 0 : index
    %0 = vector.load %arg1[%c0, %c0_0] : memref<16x32xf32, #tpu.memory_space<vmem>>, vector<16x32xf32>
    %c0_1 = arith.constant 0 : index
    %c0_2 = arith.constant 0 : index
    %1 = vector.load %arg2[%c0_1, %c0_2] : memref<16x32xf32, #tpu.memory_space<vmem>>, vector<16x32xf32>
    %2 = arith.addf %0, %1 : vector<16x32xf32>
    %cst = arith.constant dense<0.000000e+00> : vector<16xf32>
    %3 = vector.multi_reduction <add>, %2, %cst [1] : vector<16x32xf32> to vector<16xf32>
    %4 = vector.shape_cast %3 : vector<16xf32> to vector<16x1xf32>
    %cst_3 = arith.constant 3.200000e+01 : f32
    %5 = vector.broadcast %cst_3 : f32 to vector<16x1xf32>
    %6 = arith.divf %4, %5 : vector<16x1xf32>
    %7 = vector.broadcast %6 : vector<16x1xf32> to vector<16x32xf32>
    %8 = arith.subf %2, %7 : vector<16x32xf32>
    %9 = arith.mulf %8, %8 : vector<16x32xf32>
    %cst_4 = arith.constant dense<0.000000e+00> : vector<16xf32>
    %10 = vector.multi_reduction <add>, %9, %cst_4 [1] : vector<16x32xf32> to vector<16xf32>
    %11 = vector.shape_cast %10 : vector<16xf32> to vector<16x1xf32>
    %cst_5 = arith.constant 3.200000e+01 : f32
    %12 = vector.broadcast %cst_5 : f32 to vector<16x1xf32>
    %13 = arith.divf %11, %12 : vector<16x1xf32>
    %14 = vector.broadcast %6 : vector<16x1xf32> to vector<16x32xf32>
    %15 = arith.subf %2, %14 : vector<16x32xf32>
    %cst_6 = arith.constant 9.99999974E-6 : f32
    %16 = vector.broadcast %cst_6 : f32 to vector<16x1xf32>
    %17 = arith.addf %13, %16 : vector<16x1xf32>
    %18 = math.rsqrt %17 : vector<16x1xf32>
    %19 = vector.broadcast %18 : vector<16x1xf32> to vector<16x32xf32>
    %20 = arith.mulf %15, %19 : vector<16x32xf32>
    %c0_7 = arith.constant 0 : index
    %c0_8 = arith.constant 0 : index
    %21 = vector.load %arg3[%c0_7, %c0_8] : memref<1x32xf32, #tpu.memory_space<vmem>>, vector<1x32xf32>
    %22 = vector.broadcast %21 : vector<1x32xf32> to vector<16x32xf32>
    %23 = arith.mulf %20, %22 : vector<16x32xf32>
    %c0_9 = arith.constant 0 : index
    %c0_10 = arith.constant 0 : index
    %24 = vector.load %arg4[%c0_9, %c0_10] : memref<1x32xf32, #tpu.memory_space<vmem>>, vector<1x32xf32>
    %25 = vector.broadcast %24 : vector<1x32xf32> to vector<16x32xf32>
    %26 = arith.addf %23, %25 : vector<16x32xf32>
    %c0_11 = arith.constant 0 : index
    %c0_12 = arith.constant 0 : index
    %27 = vector.load %arg5[%c0_11, %c0_12] : memref<16x32xf32, #tpu.memory_space<vmem>>, vector<16x32xf32>
    tpu.vector_store %arg5[%c0_11, %c0_12], %26 {strides = array<i32>} : memref<16x32xf32, #tpu.memory_space<vmem>>, vector<16x32xf32>,
    return
  }
  func.func @transform_0(%arg0: i32) -> (i32, i32) {
    %c0_i32 = arith.constant 0 : i32
    %c0_i32_0 = arith.constant 0 : i32
    return %arg0, %c0_i32 : i32, i32
  }
  func.func @transform_1(%arg0: i32) -> (i32, i32) {
    %c0_i32 = arith.constant 0 : i32
    %c0_i32_0 = arith.constant 0 : i32
    return %arg0, %c0_i32 : i32, i32
  }
  func.func @transform_2(%arg0: i32) -> (i32, i32) {
    %c0_i32 = arith.constant 0 : i32
    %c0_i32_0 = arith.constant 0 : i32
    %c0_i32_1 = arith.constant 0 : i32
    return %c0_i32, %c0_i32_0 : i32, i32
  }
  func.func @transform_3(%arg0: i32) -> (i32, i32) {
    %c0_i32 = arith.constant 0 : i32
    %c0_i32_0 = arith.constant 0 : i32
    %c0_i32_1 = arith.constant 0 : i32
    return %c0_i32, %c0_i32_0 : i32, i32
  }
  func.func @transform_4(%arg0: i32) -> (i32, i32) {
    %c0_i32 = arith.constant 0 : i32
    %c0_i32_0 = arith.constant 0 : i32
    return %arg0, %c0_i32 : i32, i32
  }
}

module attributes {stable_mosaic.version = 11 : i64} {
  func.func @_matmul_kernel(%arg0: i32, %arg1: i32, %arg2: i32, %arg3: memref<16x32xf32, #tpu.memory_space<vmem>>, %arg4: memref<32x128xf32, #tpu.memory_space<vmem>>, %arg5: memref<1x128xf32, #tpu.memory_space<vmem>>, %arg6: memref<16x128xf32, #tpu.memory_space<vmem>>, %arg7: memref<16x128xf32, #tpu.memory_space<vmem>>) attributes {dimension_semantics = [#tpu.dimension_semantics<parallel>, #tpu.dimension_semantics<parallel>, #tpu.dimension_semantics<arbitrary>], iteration_bounds = array<i64: 1, 1, 1>, scalar_prefetch = 0 : i64, scratch_operands = 1 : i64, tpu.core_type = #tpu.core_type<tc>, window_params = [{transform_indices = @transform_0, window_bounds = array<i64: 16, 32>}, {transform_indices = @transform_1, window_bounds = array<i64: 32, 128>}, {transform_indices = @transform_2, window_bounds = array<i64: 1, 128>}, {transform_indices = @transform_3, window_bounds = array<i64: 16, 128>}]} {
    %c0_i32 = arith.constant 0 : i32
    %0 = arith.cmpi eq, %arg2, %c0_i32 : i32
    %1 = arith.extui %0 : i1 to i32
    %c0_i32_0 = arith.constant 0 : i32
    %2 = arith.cmpi ne, %1, %c0_i32_0 : i32
    scf.if %2 {
      %cst_10 = arith.constant 0.000000e+00 : f32
      %14 = vector.broadcast %cst_10 : f32 to vector<16x128xf32>
      %c0_11 = arith.constant 0 : index
      %c0_12 = arith.constant 0 : index
      %15 = vector.load %arg7[%c0_11, %c0_12] : memref<16x128xf32, #tpu.memory_space<vmem>>, vector<16x128xf32>
      tpu.vector_store %arg7[%c0_11, %c0_12], %14 {strides = array<i32>} : memref<16x128xf32, #tpu.memory_space<vmem>>, vector<16x128xf32>,
    } else {
    }
    %c0 = arith.constant 0 : index
    %c0_1 = arith.constant 0 : index
    %3 = vector.load %arg7[%c0, %c0_1] : memref<16x128xf32, #tpu.memory_space<vmem>>, vector<16x128xf32>
    %c0_2 = arith.constant 0 : index
    %c0_3 = arith.constant 0 : index
    %4 = vector.load %arg3[%c0_2, %c0_3] : memref<16x32xf32, #tpu.memory_space<vmem>>, vector<16x32xf32>
    %5 = arith.truncf %4 : vector<16x32xf32> to vector<16x32xbf16>
    %c0_4 = arith.constant 0 : index
    %c0_5 = arith.constant 0 : index
    %6 = vector.load %arg4[%c0_4, %c0_5] : memref<32x128xf32, #tpu.memory_space<vmem>>, vector<32x128xf32>
    %7 = arith.truncf %6 : vector<32x128xf32> to vector<32x128xbf16>
    %cst = arith.constant dense<0.000000e+00> : vector<16x128xf32>
    %8 = tpu.matmul %5, %7, %cst {dimension_numbers = #tpu.dot_dimension_numbers<[1], [0], [0], [1], [0, 0, 1, 1], [], []>} : vector<16x32xbf16>, vector<32x128xbf16>, vector<16x128xf32> -> vector<16x128xf32>
    %9 = arith.addf %3, %8 : vector<16x128xf32>
    %c0_6 = arith.constant 0 : index
    %c0_7 = arith.constant 0 : index
    %10 = vector.load %arg7[%c0_6, %c0_7] : memref<16x128xf32, #tpu.memory_space<vmem>>, vector<16x128xf32>
    tpu.vector_store %arg7[%c0_6, %c0_7], %9 {strides = array<i32>} : memref<16x128xf32, #tpu.memory_space<vmem>>, vector<16x128xf32>,
    %c0_i32_8 = arith.constant 0 : i32
    %11 = arith.cmpi eq, %arg2, %c0_i32_8 : i32
    %12 = arith.extui %11 : i1 to i32
    %c0_i32_9 = arith.constant 0 : i32
    %13 = arith.cmpi ne, %12, %c0_i32_9 : i32
    scf.if %13 {
      %c0_10 = arith.constant 0 : index
      %c0_11 = arith.constant 0 : index
      %14 = vector.load %arg7[%c0_10, %c0_11] : memref<16x128xf32, #tpu.memory_space<vmem>>, vector<16x128xf32>
      %c0_12 = arith.constant 0 : index
      %c0_13 = arith.constant 0 : index
      %15 = vector.load %arg5[%c0_12, %c0_13] : memref<1x128xf32, #tpu.memory_space<vmem>>, vector<1x128xf32>
      %16 = vector.broadcast %15 : vector<1x128xf32> to vector<16x128xf32>
      %17 = arith.addf %14, %16 : vector<16x128xf32>
      %cst_14 = arith.constant 0.000000e+00 : f32
      %18 = vector.broadcast %cst_14 : f32 to vector<16x128xf32>
      %19 = arith.maximumf %17, %18 : vector<16x128xf32>
      %c0_15 = arith.constant 0 : index
      %c0_16 = arith.constant 0 : index
      %20 = vector.load %arg6[%c0_15, %c0_16] : memref<16x128xf32, #tpu.memory_space<vmem>>, vector<16x128xf32>
      tpu.vector_store %arg6[%c0_15, %c0_16], %19 {strides = array<i32>} : memref<16x128xf32, #tpu.memory_space<vmem>>, vector<16x128xf32>,
    } else {
    }
    return
  }
  func.func @transform_0(%arg0: i32, %arg1: i32, %arg2: i32) -> (i32, i32) {
    %c0_i32 = arith.constant 0 : i32
    return %arg0, %arg2 : i32, i32
  }
  func.func @transform_1(%arg0: i32, %arg1: i32, %arg2: i32) -> (i32, i32) {
    %c0_i32 = arith.constant 0 : i32
    return %arg2, %arg1 : i32, i32
  }
  func.func @transform_2(%arg0: i32, %arg1: i32, %arg2: i32) -> (i32, i32) {
    %c0_i32 = arith.constant 0 : i32
    %c0_i32_0 = arith.constant 0 : i32
    return %c0_i32, %arg1 : i32, i32
  }
  func.func @transform_3(%arg0: i32, %arg1: i32, %arg2: i32) -> (i32, i32) {
    %c0_i32 = arith.constant 0 : i32
    return %arg0, %arg1 : i32, i32
  }
}

</mosaic_0001>

<llo_original>
// kernel: transformer_forward.82
$region0: #{transformer_forward.82}
  #allocation0 [shape = 'u32[]', space=smem, size = 0x4, offset = 0x4, fixed_abs, tag = 'smem constant byte address 0x4 - core index']
  #allocation1 [shape = 'u32[144,128]{1,0:T(1,128)}', space=vmem, size = 0x12000, scoped, tag = 'internal scratch']
  #allocation2 [shape = 'f32[16,128]{1,0:T(8,128)}', space=vmem, size = 0x2000, scoped, tag = 'scratch operand']
  %s0 = inlined_call_operand.vmem [shape: f32[16,32], index: 0, kind: input, shape index: {}]
  %s1 = inlined_call_operand.vmem [shape: f32[32,128], index: 1, kind: input, shape index: {}]
  %s2 = inlined_call_operand.vmem [shape: f32[1,128], index: 2, kind: input, shape index: {}]
  %s3 = inlined_call_operand.vmem [shape: f32[16,128], index: 3, kind: output, shape index: {}]
  %s4 = sld [smem:[#allocation0]]
  $region30: #{transformer_forward.82} parent=0
    _
  %s6 = ssub.s32 1, %s4
  %s7 = scalar_select 0, %s6, %s4
  // Predicated region
  $region2: #{transformer_forward.82} parent=0 // pred_check
    _
  $region3: #{transformer_forward.82} parent=0 // pred_check_branch
    %9 = sbr.rel (0) target = $region5
  $region4: #{transformer_forward.82} parent=0 // pred_region
    _
  $region5: #{transformer_forward.82} parent=0 // pred_fallthru
    _
  // Predicated region
  $region6: #{transformer_forward.82} parent=0 // pred_check
    _
  $region7: #{transformer_forward.82} parent=0 // pred_check_branch
    %11 = sbr.rel (0) target = $region9
  $region8: #{transformer_forward.82} parent=0 // pred_region
    _
  $region9: #{transformer_forward.82} parent=0 // pred_fallthru
    _
  // Predicated region
  $region10: #{transformer_forward.82} parent=0 // pred_check
    _
  $region11: #{transformer_forward.82} parent=0 // pred_check_branch
    %13 = sbr.rel (0) target = $region13
  $region12: #{transformer_forward.82} parent=0 // pred_region
    _
  $region13: #{transformer_forward.82} parent=0 // pred_fallthru
    _
  %p15 = scmp.eq.s32.totalorder 0, 0
  // Predicated region
  $region14: #{transformer_forward.82} parent=0 // pred_check
    %p16 = pneg %p15
  $region15: #{transformer_forward.82} parent=0 // pred_check_branch
    %18 = sbr.rel (%p16) target = $region17
  $region16: #{transformer_forward.82} parent=0 // pred_region
    %19 = vst [vmem:[#allocation2] sm:$0xff] 0.0
    %20 = vst [vmem:[#allocation2 + $0x8] sm:$0xff] 0.0
  $region17: #{transformer_forward.82} parent=0 // pred_fallthru
    _
  %v21 = vld [vmem:[#allocation2] sm:$0xff]
  %v22 = vld [vmem:[#allocation2 + $0x8] sm:$0xff]
  %v23 = vld [vmem:[%s0] sm:$0xff]
  %v24 = vld [vmem:[%s0 + $0x8] sm:$0xff]
  %v25 = vpack.c.bf16 %v24, %v23
  %v26 = vld [vmem:[%s1] sm:$0xff]
  %v27 = vld [vmem:[%s1 + $0x8] sm:$0xff]
  %v28 = vld [vmem:[%s1 + $0x10] sm:$0xff]
  %v29 = vld [vmem:[%s1 + $0x18] sm:$0xff]
  %v30 = vpack.c.bf16 %v27, %v26
  %v31 = vpack.c.bf16 %v29, %v28
  %vm32 = vcmask 261120
  %v34 = vsel %vm32, %v25, 0
  %36 = vmatprep.subr.bf16.mxu0 0
  %37 = vmatpush1.bf16.msra.mxu0 %v30
  %38 = vmatprep.subr.bf16.mxu0 0
  %39 = vmatpush1.bf16.msra.mxu0 %v31
  %40 = vmatprep.subr.bf16.mxu0 0
  %41 = vmatpush1.bf16.msra.mxu0 0
  %42 = vmatprep.subr.bf16.mxu0 0
  %43 = vmatpush1.bf16.msra.mxu0 0
  %44 = vmatprep.subr.bf16.mxu0 0
  %45 = vmatpush1.bf16.msra.mxu0 0
  %46 = vmatprep.subr.bf16.mxu0 0
  %47 = vmatpush1.bf16.msra.mxu0 0
  %48 = vmatprep.subr.bf16.mxu0 0
  %49 = vmatpush1.bf16.msra.mxu0 0
  %50 = vmatprep.subr.bf16.mxu0 0
  %51 = vmatpush1.bf16.msra.mxu0 0
  %52 = vmatprep.subr.bf16.mxu0 0
  %53 = vmatpush1.bf16.msra.mxu0 0
  %54 = vmatprep.subr.bf16.mxu0 0
  %55 = vmatpush1.bf16.msra.mxu0 0
  %56 = vmatprep.subr.bf16.mxu0 0
  %57 = vmatpush1.bf16.msra.mxu0 0
  %58 = vmatprep.subr.bf16.mxu0 0
  %59 = vmatpush1.bf16.msra.mxu0 0
  %60 = vmatprep.subr.bf16.mxu0 0
  %61 = vmatpush1.bf16.msra.mxu0 0
  %62 = vmatprep.subr.bf16.mxu0 0
  %63 = vmatpush1.bf16.msra.mxu0 0
  %64 = vmatprep.subr.bf16.mxu0 0
  %65 = vmatpush1.bf16.msra.mxu0 0
  %66 = vmatprep.subr.bf16.mxu0 0
  %67 = vmatpush1.bf16.msra.mxu0 0
  %68 = vmatprep.mubr.bf16.mxu0 0
  %69 = vmatmul.mubr.bf16.gmra.mrb[0].mxu0 %v34
  %v70 = vpop.f32.mrb[0].mxu0
  %v71 = vadd.f32 0.0, %v70
  %v72 = vpop.f32.mrb[0].mxu0
  %v73 = vpop.f32.mrb[0].mxu0
  %v74 = vadd.f32 0.0, %v73
  %v75 = vpop.f32.mrb[0].mxu0
  %76 = vdwg.mxu0
  %v77 = vadd.f32 %v21, %v71
  %v78 = vadd.f32 %v22, %v74
  %79 = vst [vmem:[#allocation2] sm:$0xff] %v77
  %80 = vst [vmem:[#allocation2 + $0x8] sm:$0xff] %v78
  // Predicated region
  $region18: #{transformer_forward.82} parent=0 // pred_check
    %p81 = pneg %p15
  $region19: #{transformer_forward.82} parent=0 // pred_check_branch
    %83 = sbr.rel (%p81) target = $region21
  $region20: #{transformer_forward.82} parent=0 // pred_region
    %v84 = vld [vmem:[#allocation2] sm:$0xff]
    %v85 = vld [vmem:[#allocation2 + $0x8] sm:$0xff]
    %v86 = vld [vmem:[%s2] sm:$0x1]
    %v88 = vlaneseq
    %v89 = vshrl.u32 %v88, 7
    %v90 = vsub.s32 0, %v89
    %v91 = vrot.slane %v86, %v90
    %v93 = vadd.f32 %v84, %v91
    %v94 = vadd.f32 %v85, %v91
    %95 = vst [vmem:[%s3] sm:$0xff] %v93
    %96 = vst [vmem:[%s3 + $0x8] sm:$0xff] %v94
  $region21: #{transformer_forward.82} parent=0 // pred_fallthru
    _
  // Predicated region
  $region22: #{transformer_forward.82} parent=0 // pred_check
    _
  $region23: #{transformer_forward.82} parent=0 // pred_check_branch
    %98 = sbr.rel (0) target = $region25
  $region24: #{transformer_forward.82} parent=0 // pred_region
    _
  $region25: #{transformer_forward.82} parent=0 // pred_fallthru
    _
  // Predicated region
  $region26: #{transformer_forward.82} parent=0 // pred_check
    _
  $region27: #{transformer_forward.82} parent=0 // pred_check_branch
    %100 = sbr.rel (0) target = $region29
  $region28: #{transformer_forward.82} parent=0 // pred_region
    _
  $region29: #{transformer_forward.82} parent=0 // pred_fallthru
    _

// kernel: transformer_forward.62
$region0: #{transformer_forward.62}
  #allocation0 [shape = 'u32[]', space=smem, size = 0x4, offset = 0x4, fixed_abs, tag = 'smem constant byte address 0x4 - core index']
  #allocation1 [shape = 'u32[144,128]{1,0:T(1,128)}', space=vmem, size = 0x12000, scoped, tag = 'internal scratch']
  %s0 = inlined_call_operand.vmem [shape: f32[2,2,128], index: 0, kind: input, shape index: {}]
  %s1 = inlined_call_operand.vmem [shape: f32[1,2,128], index: 1, kind: input, shape index: {}]
  %s2 = inlined_call_operand.vmem [shape: f32[2,2,128], index: 2, kind: output, shape index: {}]
  %s3 = sld [smem:[#allocation0]]
  $region41: #{transformer_forward.62} parent=0
    _
  %s5 = ssub.s32 1, %s3
  %s6 = scalar_select 0, %s5, %s3
  loop: start=0, step=1, limit=4
  $region2: #{transformer_forward.62} parent=0 // loop_pre_header
    _
  $region3: #{transformer_forward.62} parent=0 // loop_header
    %s8 = sphi 0, %s12
    %p9 = scmp.ge.s32.totalorder %s8, 4
    %s15 = sphi 0, %s27
    %s16 = sphi 0, %s23
    %s17 = sphi 0, %s15
    %s18 = sphi 0, %s16
    %s19 = sphi 0, %s17
    %s20 = sphi 0, %s18
    %s32 = sphi 0, %s34
    %s35 = sphi 0, %s32
    %s36 = sphi 0, %s35
    %s52 = sphi 0, %s36
    %s58 = sphi 0, %s60
    %s61 = sphi 0, %s58
    %s62 = sphi 0, %s61
    %s78 = sphi 0, %s62
    %s86 = sphi 0, %s88
    %s89 = sphi 0, %s86
    %s90 = sphi 0, %s89
    %s106 = sphi 0, %s90
  $region4: #{transformer_forward.62} parent=0 // loop_header_branch
    %11 = sbr.rel (%p9) target = $region8
  $region5: #{transformer_forward.62} parent=0 // loop_body
    %s13 = ssub.s32 %s8, 1
    %s14 = ssub.s32 %s8, 2
    %s21 = sadd.s32 1, %s16
    %p22 = scmp.ge.s32.totalorder %s21, 2
    %s23 = scalar_select %p22, 0, %s21
    %s24 = sadd.s32 1, %s15
    %s25 = scalar_select %p22, %s24, %s15
    %p26 = scmp.ge.s32.totalorder %s25, 1
    %s27 = scalar_select %p26, 0, %s25
    %s28 = ssub.s32 %s16, %s23
    %s29 = ssub.s32 %s15, %s27
    %s30 = sor.u32 %s28, %s29
    %p31 = scmp.eq.s32.totalorder %s30, 0
    %s33 = sadd.s32 %s32, 1
    %s34 = scalar_select %p31, %s32, %s33
    %p37 = pneg %p31
    %p38 = scmp.eq.s32.totalorder %s8, 1
    %p39 = por %p37, %p38
    %p40 = scmp.ne.s32.totalorder %s32, %s35
    %p41 = scmp.eq.s32.totalorder %s8, 0
    %p42 = por %p40, %p41
    %p43 = scmp.ne.s32.totalorder %s32, %s35
    %p44 = scmp.eq.s32.totalorder %s13, 1
    %p45 = por %p43, %p44
    %p46 = scmp.ne.s32.totalorder %s35, %s36
    %p47 = scmp.eq.s32.totalorder %s13, 0
    %p48 = por %p46, %p47
    %p49 = scmp.ne.s32.totalorder %s35, %s36
    %p50 = scmp.eq.s32.totalorder %s14, 1
    %p51 = por %p49, %p50
    %p53 = scmp.ne.s32.totalorder %s36, %s52
    %p54 = scmp.eq.s32.totalorder %s14, 0
    %p55 = por %p53, %p54
    %s56 = ssub.s32 %s15, %s27
    %p57 = scmp.eq.s32.totalorder %s56, 0
    %s59 = sadd.s32 %s58, 1
    %s60 = scalar_select %p57, %s58, %s59
    %p63 = pneg %p57
    %p64 = scmp.eq.s32.totalorder %s8, 1
    %p65 = por %p63, %p64
    %p66 = scmp.ne.s32.totalorder %s58, %s61
    %p67 = scmp.eq.s32.totalorder %s8, 0
    %p68 = por %p66, %p67
    %p69 = scmp.ne.s32.totalorder %s58, %s61
    %p70 = scmp.eq.s32.totalorder %s13, 1
    %p71 = por %p69, %p70
    %p72 = scmp.ne.s32.totalorder %s61, %s62
    %p73 = scmp.eq.s32.totalorder %s13, 0
    %p74 = por %p72, %p73
    %p75 = scmp.ne.s32.totalorder %s61, %s62
    %p76 = scmp.eq.s32.totalorder %s14, 1
    %p77 = por %p75, %p76
    %p79 = scmp.ne.s32.totalorder %s62, %s78
    %p80 = scmp.eq.s32.totalorder %s14, 0
    %p81 = por %p79, %p80
    %s82 = ssub.s32 %s16, %s23
    %s83 = ssub.s32 %s15, %s27
    %s84 = sor.u32 %s82, %s83
    %p85 = scmp.eq.s32.totalorder %s84, 0
    %s87 = sadd.s32 %s86, 1
    %s88 = scalar_select %p85, %s86, %s87
    %p91 = pneg %p85
    %p92 = scmp.eq.s32.totalorder %s8, 1
    %p93 = por %p91, %p92
    %p94 = scmp.ne.s32.totalorder %s86, %s89
    %p95 = scmp.eq.s32.totalorder %s8, 0
    %p96 = por %p94, %p95
    %p97 = scmp.ne.s32.totalorder %s86, %s89
    %p98 = scmp.eq.s32.totalorder %s13, 1
    %p99 = por %p97, %p98
    %p100 = scmp.ne.s32.totalorder %s89, %s90
    %p101 = scmp.eq.s32.totalorder %s13, 0
    %p102 = por %p100, %p101
    %p103 = scmp.ne.s32.totalorder %s89, %s90
    %p104 = scmp.eq.s32.totalorder %s14, 1
    %p105 = por %p103, %p104
    %p107 = scmp.ne.s32.totalorder %s90, %s106
    %p108 = scmp.eq.s32.totalorder %s14, 0
    %p109 = por %p107, %p108
    %p110 = scmp.le.s32.totalorder 1, %s8
    %p111 = scmp.lt.s32.totalorder %s8, 3
    %p112 = pnand %p110, %p111
    %p113 = pneg %p112
    // Predicated region
    $region9: #{transformer_forward.62} parent=5 // pred_check
      _
    $region10: #{transformer_forward.62} parent=5 // pred_check_branch
      %115 = sbr.rel (%p112) target = $region12
    $region11: #{transformer_forward.62} parent=5 // pred_region
      %s116 = ssub.s32 %s8, 1
      // Predicated region
      $region13: #{transformer_forward.62} parent=11 // pred_check
        %p117 = pneg %p74
      $region14: #{transformer_forward.62} parent=11 // pred_check_branch
        %119 = sbr.rel (%p117) target = $region16
      $region15: #{transformer_forward.62} parent=11 // pred_region
        %p120 = scmp.lt.s32.totalorder %s17, 0
        %s121 = scalar_select %p120, %s17, 0
        %s122 = smul.addr %s121, 2
        %s123 = scalar_lea.vmem %s1, %s122
      $region16: #{transformer_forward.62} parent=11 // pred_fallthru
        _
    $region12: #{transformer_forward.62} parent=5 // pred_fallthru
      _
    %p124 = scmp.lt.s32.totalorder %s8, 2
    // Predicated region
    $region17: #{transformer_forward.62} parent=5 // pred_check
      %p125 = pneg %p124
    $region18: #{transformer_forward.62} parent=5 // pred_check_branch
      %127 = sbr.rel (%p125) target = $region20
    $region19: #{transformer_forward.62} parent=5 // pred_region
      // Predicated region
      $region21: #{transformer_forward.62} parent=19 // pred_check
        %p128 = pneg %p42
      $region22: #{transformer_forward.62} parent=19 // pred_check_branch
        %130 = sbr.rel (%p128) target = $region24
      $region23: #{transformer_forward.62} parent=19 // pred_region
        %p131 = scmp.lt.s32.totalorder %s16, 1
        %s132 = scalar_select %p131, %s16, 1
        %p133 = scmp.lt.s32.totalorder %s15, 0
        %s134 = scalar_select %p133, %s15, 0
        %s135 = sadd.s32 %s134, %s132
        %s136 = smul.addr %s135, 2
        %s137 = scalar_lea.vmem %s0, %s136
      $region24: #{transformer_forward.62} parent=19 // pred_fallthru
        _
    $region20: #{transformer_forward.62} parent=5 // pred_fallthru
      _
    %p138 = scmp.le.s32.totalorder 1, %s8
    %p139 = scmp.lt.s32.totalorder %s8, 3
    %p140 = pnand %p138, %p139
    %p141 = pneg %p140
    // Predicated region
    $region25: #{transformer_forward.62} parent=5 // pred_check
      _
    $region26: #{transformer_forward.62} parent=5 // pred_check_branch
      %143 = sbr.rel (%p140) target = $region28
    $region27: #{transformer_forward.62} parent=5 // pred_region
      %s144 = ssub.s32 %s8, 1
      %p145 = scmp.lt.s32.totalorder %s18, 1
      %s146 = scalar_select %p145, %s18, 1
      %p147 = scmp.lt.s32.totalorder %s17, 0
      %s148 = scalar_select %p147, %s17, 0
      %s149 = sadd.s32 %s148, %s146
      %s150 = smul.addr %s149, 2
      %s151 = scalar_lea.vmem %s0, %s150
      %p152 = pneg %p48
      %p153 = pneg %p45
      %p154 = scmp.lt.s32.totalorder %s17, 0
      %s155 = scalar_select %p154, %s17, 0
      %s156 = smul.addr %s155, 2
      %s157 = scalar_lea.vmem %s1, %s156
      %p158 = pneg %p74
      %p159 = pneg %p71
      %p160 = pneg %p102
      %p161 = pneg %p99
      %p162 = scmp.lt.s32.totalorder %s18, 1
      %s163 = scalar_select %p162, %s18, 1
      %p164 = scmp.lt.s32.totalorder %s17, 0
      %s165 = scalar_select %p164, %s17, 0
      %s166 = sadd.s32 %s165, %s163
      %s167 = smul.addr %s166, 2
      %s168 = scalar_lea.vmem %s2, %s167
      %p169 = scmp.lt.s32.totalorder %s18, 1
      %s170 = scalar_select %p169, %s18, 1
      %p171 = scmp.lt.s32.totalorder %s17, 0
      %s172 = scalar_select %p171, %s17, 0
      %s173 = sadd.s32 %s172, %s170
      %s174 = smul.addr %s173, 2
      %s175 = scalar_lea.vmem %s0, %s174
      %p176 = scmp.lt.s32.totalorder %s17, 0
      %s177 = scalar_select %p176, %s17, 0
      %s178 = smul.addr %s177, 2
      %s179 = scalar_lea.vmem %s1, %s178
      %p180 = scmp.lt.s32.totalorder %s18, 1
      %s181 = scalar_select %p180, %s18, 1
      %p182 = scmp.lt.s32.totalorder %s17, 0
      %s183 = scalar_select %p182, %s17, 0
      %s184 = sadd.s32 %s183, %s181
      %s185 = smul.addr %s184, 2
      %s186 = scalar_lea.vmem %s2, %s185
      %v187 = vld [vmem:[%s175] sm:$0x3]
      %v188 = vmul.f32 %v187, 5.656854
      %v189 = vld [vmem:[%s179] sm:$0x3]
      %v190 = vadd.f32 %v188, %v189
      %191 = vst [vmem:[%s186] sm:$0x3] %v190
      %p192 = scmp.lt.s32.totalorder %s18, 1
      %s193 = scalar_select %p192, %s18, 1
      %p194 = scmp.lt.s32.totalorder %s17, 0
      %s195 = scalar_select %p194, %s17, 0
      %s196 = sadd.s32 %s195, %s193
      %s197 = smul.addr %s196, 2
      %s198 = scalar_lea.vmem %s2, %s197
      // Predicated region
      $region29: #{transformer_forward.62} parent=27 // pred_check
        %p199 = pneg %p99
      $region30: #{transformer_forward.62} parent=27 // pred_check_branch
        %201 = sbr.rel (%p199) target = $region32
      $region31: #{transformer_forward.62} parent=27 // pred_region
        _
      $region32: #{transformer_forward.62} parent=27 // pred_fallthru
        _
    $region28: #{transformer_forward.62} parent=5 // pred_fallthru
      _
    %p202 = scmp.le.s32.totalorder 2, %s8
    // Predicated region
    $region33: #{transformer_forward.62} parent=5 // pred_check
      %p203 = pneg %p202
    $region34: #{transformer_forward.62} parent=5 // pred_check_branch
      %205 = sbr.rel (%p203) target = $region36
    $region35: #{transformer_forward.62} parent=5 // pred_region
      %s206 = ssub.s32 %s8, 2
      // Predicated region
      $region37: #{transformer_forward.62} parent=35 // pred_check
        %p207 = pneg %p105
      $region38: #{transformer_forward.62} parent=35 // pred_check_branch
        %209 = sbr.rel (%p207) target = $region40
      $region39: #{transformer_forward.62} parent=35 // pred_region
        %p210 = scmp.lt.s32.totalorder %s20, 1
        %s211 = scalar_select %p210, %s20, 1
        %p212 = scmp.lt.s32.totalorder %s19, 0
        %s213 = scalar_select %p212, %s19, 0
        %s214 = sadd.s32 %s213, %s211
        %s215 = smul.addr %s214, 2
        %s216 = scalar_lea.vmem %s2, %s215
      $region40: #{transformer_forward.62} parent=35 // pred_fallthru
        _
    $region36: #{transformer_forward.62} parent=5 // pred_fallthru
      _
  $region6: #{transformer_forward.62} parent=0 // loop_footer
    %s12 = sadd.s32 1, %s8
  $region7: #{transformer_forward.62} parent=0 // loop_footer_branch
    %7 = sbr.rel target = $region3
  $region8: #{transformer_forward.62} parent=0 // loop_exit
    _

// kernel: transformer_forward.84
$region0: #{transformer_forward.84}
  #allocation0 [shape = 'u32[]', space=smem, size = 0x4, offset = 0x4, fixed_abs, tag = 'smem constant byte address 0x4 - core index']
  #allocation1 [shape = 'u32[144,128]{1,0:T(1,128)}', space=vmem, size = 0x12000, scoped, tag = 'internal scratch']
  #allocation2 [shape = 'f32[4,8,1]{2,1,0:T(8,128)}', space=vmem, size = 0x4000, scoped, tag = 'scratch operand']
  #allocation3 [shape = 'f32[4,8,1]{2,1,0:T(8,128)}', space=vmem, size = 0x4000, scoped, tag = 'scratch operand']
  #allocation4 [shape = 'f32[4,8,8]{2,1,0:T(8,128)}', space=vmem, size = 0x4000, scoped, tag = 'scratch operand']
  %s0 = inlined_call_operand.vmem [shape: s32[2,1,8], index: 0, kind: input, shape index: {}]
  %s1 = inlined_call_operand.vmem [shape: f32[2,4,8,8], index: 1, kind: input, shape index: {}]
  %s2 = inlined_call_operand.vmem [shape: f32[2,4,8,8], index: 2, kind: input, shape index: {}]
  %s3 = inlined_call_operand.vmem [shape: f32[2,4,8,8], index: 3, kind: input, shape index: {}]
  %s4 = inlined_call_operand.vmem [shape: f32[2,4,8,8], index: 4, kind: output, shape index: {}]
  %s5 = sld [smem:[#allocation0]]
  $region57: #{transformer_forward.84} parent=0
    _
  %s7 = ssub.s32 1, %s5
  %s8 = scalar_select 0, %s7, %s5
  loop: start=0, step=1, limit=4
  $region2: #{transformer_forward.84} parent=0 // loop_pre_header
    _
  $region3: #{transformer_forward.84} parent=0 // loop_header
    %s10 = sphi 0, %s14
    %p11 = scmp.ge.s32.totalorder %s10, 4
    %s17 = sphi 0, %s36
    %s18 = sphi 0, %s32
    %s19 = sphi 0, %s28
    %s20 = sphi 0, %s17
    %s21 = sphi 0, %s18
    %s22 = sphi 0, %s19
    %s23 = sphi 0, %s20
    %s24 = sphi 0, %s21
    %s25 = sphi 0, %s22
    %s41 = sphi 0, %s43
    %s44 = sphi 0, %s41
    %s45 = sphi 0, %s44
    %s61 = sphi 0, %s45
    %s69 = sphi 0, %s71
    %s72 = sphi 0, %s69
    %s73 = sphi 0, %s72
    %s89 = sphi 0, %s73
    %s97 = sphi 0, %s99
    %s100 = sphi 0, %s97
    %s101 = sphi 0, %s100
    %s117 = sphi 0, %s101
    %s125 = sphi 0, %s127
    %s128 = sphi 0, %s125
    %s129 = sphi 0, %s128
    %s145 = sphi 0, %s129
    %s153 = sphi 0, %s155
    %s156 = sphi 0, %s153
    %s157 = sphi 0, %s156
    %s173 = sphi 0, %s157
  $region4: #{transformer_forward.84} parent=0 // loop_header_branch
    %13 = sbr.rel (%p11) target = $region8
  $region5: #{transformer_forward.84} parent=0 // loop_body
    %s15 = ssub.s32 %s10, 1
    %s16 = ssub.s32 %s10, 2
    %s26 = sadd.s32 1, %s19
    %p27 = scmp.ge.s32.totalorder %s26, 1
    %s28 = scalar_select %p27, 0, %s26
    %s29 = sadd.s32 1, %s18
    %s30 = scalar_select %p27, %s29, %s18
    %p31 = scmp.ge.s32.totalorder %s30, 1
    %s32 = scalar_select %p31, 0, %s30
    %s33 = sadd.s32 1, %s17
    %s34 = scalar_select %p31, %s33, %s17
    %p35 = scmp.ge.s32.totalorder %s34, 2
    %s36 = scalar_select %p35, 0, %s34
    %s37 = ssub.s32 %s17, %s36
    %s38 = ssub.s32 %s19, %s28
    %s39 = sor.u32 %s37, %s38
    %p40 = scmp.eq.s32.totalorder %s39, 0
    %s42 = sadd.s32 %s41, 1
    %s43 = scalar_select %p40, %s41, %s42
    %p46 = pneg %p40
    %p47 = scmp.eq.s32.totalorder %s10, 1
    %p48 = por %p46, %p47
    %p49 = scmp.ne.s32.totalorder %s41, %s44
    %p50 = scmp.eq.s32.totalorder %s10, 0
    %p51 = por %p49, %p50
    %p52 = scmp.ne.s32.totalorder %s41, %s44
    %p53 = scmp.eq.s32.totalorder %s15, 1
    %p54 = por %p52, %p53
    %p55 = scmp.ne.s32.totalorder %s44, %s45
    %p56 = scmp.eq.s32.totalorder %s15, 0
    %p57 = por %p55, %p56
    %p58 = scmp.ne.s32.totalorder %s44, %s45
    %p59 = scmp.eq.s32.totalorder %s16, 1
    %p60 = por %p58, %p59
    %p62 = scmp.ne.s32.totalorder %s45, %s61
    %p63 = scmp.eq.s32.totalorder %s16, 0
    %p64 = por %p62, %p63
    %s65 = ssub.s32 %s17, %s36
    %s66 = ssub.s32 %s18, %s32
    %s67 = sor.u32 %s65, %s66
    %p68 = scmp.eq.s32.totalorder %s67, 0
    %s70 = sadd.s32 %s69, 1
    %s71 = scalar_select %p68, %s69, %s70
    %p74 = pneg %p68
    %p75 = scmp.eq.s32.totalorder %s10, 1
    %p76 = por %p74, %p75
    %p77 = scmp.ne.s32.totalorder %s69, %s72
    %p78 = scmp.eq.s32.totalorder %s10, 0
    %p79 = por %p77, %p78
    %p80 = scmp.ne.s32.totalorder %s69, %s72
    %p81 = scmp.eq.s32.totalorder %s15, 1
    %p82 = por %p80, %p81
    %p83 = scmp.ne.s32.totalorder %s72, %s73
    %p84 = scmp.eq.s32.totalorder %s15, 0
    %p85 = por %p83, %p84
    %p86 = scmp.ne.s32.totalorder %s72, %s73
    %p87 = scmp.eq.s32.totalorder %s16, 1
    %p88 = por %p86, %p87
    %p90 = scmp.ne.s32.totalorder %s73, %s89
    %p91 = scmp.eq.s32.totalorder %s16, 0
    %p92 = por %p90, %p91
    %s93 = ssub.s32 %s17, %s36
    %s94 = ssub.s32 %s19, %s28
    %s95 = sor.u32 %s93, %s94
    %p96 = scmp.eq.s32.totalorder %s95, 0
    %s98 = sadd.s32 %s97, 1
    %s99 = scalar_select %p96, %s97, %s98
    %p102 = pneg %p96
    %p103 = scmp.eq.s32.totalorder %s10, 1
    %p104 = por %p102, %p103
    %p105 = scmp.ne.s32.totalorder %s97, %s100
    %p106 = scmp.eq.s32.totalorder %s10, 0
    %p107 = por %p105, %p106
    %p108 = scmp.ne.s32.totalorder %s97, %s100
    %p109 = scmp.eq.s32.totalorder %s15, 1
    %p110 = por %p108, %p109
    %p111 = scmp.ne.s32.totalorder %s100, %s101
    %p112 = scmp.eq.s32.totalorder %s15, 0
    %p113 = por %p111, %p112
    %p114 = scmp.ne.s32.totalorder %s100, %s101
    %p115 = scmp.eq.s32.totalorder %s16, 1
    %p116 = por %p114, %p115
    %p118 = scmp.ne.s32.totalorder %s101, %s117
    %p119 = scmp.eq.s32.totalorder %s16, 0
    %p120 = por %p118, %p119
    %s121 = ssub.s32 %s17, %s36
    %s122 = ssub.s32 %s19, %s28
    %s123 = sor.u32 %s121, %s122
    %p124 = scmp.eq.s32.totalorder %s123, 0
    %s126 = sadd.s32 %s125, 1
    %s127 = scalar_select %p124, %s125, %s126
    %p130 = pneg %p124
    %p131 = scmp.eq.s32.totalorder %s10, 1
    %p132 = por %p130, %p131
    %p133 = scmp.ne.s32.totalorder %s125, %s128
    %p134 = scmp.eq.s32.totalorder %s10, 0
    %p135 = por %p133, %p134
    %p136 = scmp.ne.s32.totalorder %s125, %s128
    %p137 = scmp.eq.s32.totalorder %s15, 1
    %p138 = por %p136, %p137
    %p139 = scmp.ne.s32.totalorder %s128, %s129
    %p140 = scmp.eq.s32.totalorder %s15, 0
    %p141 = por %p139, %p140
    %p142 = scmp.ne.s32.totalorder %s128, %s129
    %p143 = scmp.eq.s32.totalorder %s16, 1
    %p144 = por %p142, %p143
    %p146 = scmp.ne.s32.totalorder %s129, %s145
    %p147 = scmp.eq.s32.totalorder %s16, 0
    %p148 = por %p146, %p147
    %s149 = ssub.s32 %s17, %s36
    %s150 = ssub.s32 %s18, %s32
    %s151 = sor.u32 %s149, %s150
    %p152 = scmp.eq.s32.totalorder %s151, 0
    %s154 = sadd.s32 %s153, 1
    %s155 = scalar_select %p152, %s153, %s154
    %p158 = pneg %p152
    %p159 = scmp.eq.s32.totalorder %s10, 1
    %p160 = por %p158, %p159
    %p161 = scmp.ne.s32.totalorder %s153, %s156
    %p162 = scmp.eq.s32.totalorder %s10, 0
    %p163 = por %p161, %p162
    %p164 = scmp.ne.s32.totalorder %s153, %s156
    %p165 = scmp.eq.s32.totalorder %s15, 1
    %p166 = por %p164, %p165
    %p167 = scmp.ne.s32.totalorder %s156, %s157
    %p168 = scmp.eq.s32.totalorder %s15, 0
    %p169 = por %p167, %p168
    %p170 = scmp.ne.s32.totalorder %s156, %s157
    %p171 = scmp.eq.s32.totalorder %s16, 1
    %p172 = por %p170, %p171
    %p174 = scmp.ne.s32.totalorder %s157, %s173
    %p175 = scmp.eq.s32.totalorder %s16, 0
    %p176 = por %p174, %p175
    %p177 = scmp.le.s32.totalorder 1, %s10
    %p178 = scmp.lt.s32.totalorder %s10, 3
    %p179 = pnand %p177, %p178
    %p180 = pneg %p179
    // Predicated region
    $region9: #{transformer_forward.84} parent=5 // pred_check
      _
    $region10: #{transformer_forward.84} parent=5 // pred_check_branch
      %182 = sbr.rel (%p179) target = $region12
    $region11: #{transformer_forward.84} parent=5 // pred_region
      %s183 = ssub.s32 %s10, 1
    $region12: #{transformer_forward.84} parent=5 // pred_fallthru
      _
    %p184 = scmp.lt.s32.totalorder %s10, 2
    // Predicated region
    $region13: #{transformer_forward.84} parent=5 // pred_check
      %p185 = pneg %p184
    $region14: #{transformer_forward.84} parent=5 // pred_check_branch
      %187 = sbr.rel (%p185) target = $region16
    $region15: #{transformer_forward.84} parent=5 // pred_region
      // Predicated region
      $region17: #{transformer_forward.84} parent=15 // pred_check
        %p188 = pneg %p51
      $region18: #{transformer_forward.84} parent=15 // pred_check_branch
        %190 = sbr.rel (%p188) target = $region20
      $region19: #{transformer_forward.84} parent=15 // pred_region
        %p191 = scmp.lt.s32.totalorder %s17, 1
        %s192 = scalar_select %p191, %s17, 1
        %p193 = scmp.lt.s32.totalorder %s19, 0
        %s194 = scalar_select %p193, %s19, 0
        %s195 = sadd.s32 %s194, %s192
        %s196 = scalar_lea.vmem %s0, %s195
      $region20: #{transformer_forward.84} parent=15 // pred_fallthru
        _
      // Predicated region
      $region21: #{transformer_forward.84} parent=15 // pred_check
        %p197 = pneg %p79
      $region22: #{transformer_forward.84} parent=15 // pred_check_branch
        %199 = sbr.rel (%p197) target = $region24
      $region23: #{transformer_forward.84} parent=15 // pred_region
        %p200 = scmp.lt.s32.totalorder %s17, 1
        %s201 = scalar_select %p200, %s17, 1
        %p202 = scmp.lt.s32.totalorder %s18, 0
        %s203 = scalar_select %p202, %s18, 0
        %s204 = smul.addr %s201, 4
        %s205 = sadd.s32 %s203, %s204
        %s206 = smul.addr %s205, 8
        %s207 = scalar_lea.vmem %s1, %s206
      $region24: #{transformer_forward.84} parent=15 // pred_fallthru
        _
      // Predicated region
      $region25: #{transformer_forward.84} parent=15 // pred_check
        %p208 = pneg %p107
      $region26: #{transformer_forward.84} parent=15 // pred_check_branch
        %210 = sbr.rel (%p208) target = $region28
      $region27: #{transformer_forward.84} parent=15 // pred_region
        %p211 = scmp.lt.s32.totalorder %s17, 1
        %s212 = scalar_select %p211, %s17, 1
        %p213 = scmp.lt.s32.totalorder %s19, 0
        %s214 = scalar_select %p213, %s19, 0
        %s215 = smul.addr %s212, 4
        %s216 = sadd.s32 %s214, %s215
        %s217 = smul.addr %s216, 8
        %s218 = scalar_lea.vmem %s2, %s217
      $region28: #{transformer_forward.84} parent=15 // pred_fallthru
        _
      // Predicated region
      $region29: #{transformer_forward.84} parent=15 // pred_check
        %p219 = pneg %p135
      $region30: #{transformer_forward.84} parent=15 // pred_check_branch
        %221 = sbr.rel (%p219) target = $region32
      $region31: #{transformer_forward.84} parent=15 // pred_region
        %p222 = scmp.lt.s32.totalorder %s17, 1
        %s223 = scalar_select %p222, %s17, 1
        %p224 = scmp.lt.s32.totalorder %s19, 0
        %s225 = scalar_select %p224, %s19, 0
        %s226 = smul.addr %s223, 4
        %s227 = sadd.s32 %s225, %s226
        %s228 = smul.addr %s227, 8
        %s229 = scalar_lea.vmem %s3, %s228
      $region32: #{transformer_forward.84} parent=15 // pred_fallthru
        _
    $region16: #{transformer_forward.84} parent=5 // pred_fallthru
      _
    %p230 = scmp.le.s32.totalorder 1, %s10
    %p231 = scmp.lt.s32.totalorder %s10, 3
    %p232 = pnand %p230, %p231
    %p233 = pneg %p232
    // Predicated region
    $region33: #{transformer_forward.84} parent=5 // pred_check
      _
    $region34: #{transformer_forward.84} parent=5 // pred_check_branch
      %235 = sbr.rel (%p232) target = $region36
    $region35: #{transformer_forward.84} parent=5 // pred_region
      %s236 = ssub.s32 %s10, 1
      %p237 = scmp.lt.s32.totalorder %s20, 1
      %s238 = scalar_select %p237, %s20, 1
      %p239 = scmp.lt.s32.totalorder %s22, 0
      %s240 = scalar_select %p239, %s22, 0
      %s241 = sadd.s32 %s240, %s238
      %s242 = scalar_lea.vmem %s0, %s241
      %p243 = pneg %p57
      %p244 = pneg %p54
      %p245 = scmp.lt.s32.totalorder %s20, 1
      %s246 = scalar_select %p245, %s20, 1
      %p247 = scmp.lt.s32.totalorder %s21, 0
      %s248 = scalar_select %p247, %s21, 0
      %s249 = smul.addr %s246, 4
      %s250 = sadd.s32 %s248, %s249
      %s251 = smul.addr %s250, 8
      %s252 = scalar_lea.vmem %s1, %s251
      %p253 = pneg %p85
      %p254 = pneg %p82
      %p255 = scmp.lt.s32.totalorder %s20, 1
      %s256 = scalar_select %p255, %s20, 1
      %p257 = scmp.lt.s32.totalorder %s22, 0
      %s258 = scalar_select %p257, %s22, 0
      %s259 = smul.addr %s256, 4
      %s260 = sadd.s32 %s258, %s259
      %s261 = smul.addr %s260, 8
      %s262 = scalar_lea.vmem %s2, %s261
      %p263 = pneg %p113
      %p264 = pneg %p110
      %p265 = scmp.lt.s32.totalorder %s20, 1
      %s266 = scalar_select %p265, %s20, 1
      %p267 = scmp.lt.s32.totalorder %s22, 0
      %s268 = scalar_select %p267, %s22, 0
      %s269 = smul.addr %s266, 4
      %s270 = sadd.s32 %s268, %s269
      %s271 = smul.addr %s270, 8
      %s272 = scalar_lea.vmem %s3, %s271
      %p273 = pneg %p141
      %p274 = pneg %p138
      %p275 = pneg %p169
      %p276 = pneg %p166
      %p277 = scmp.lt.s32.totalorder %s20, 1
      %s278 = scalar_select %p277, %s20, 1
      %p279 = scmp.lt.s32.totalorder %s21, 0
      %s280 = scalar_select %p279, %s21, 0
      %s281 = smul.addr %s278, 4
      %s282 = sadd.s32 %s280, %s281
      %s283 = smul.addr %s282, 8
      %s284 = scalar_lea.vmem %s4, %s283
      %p285 = scmp.lt.s32.totalorder %s20, 1
      %s286 = scalar_select %p285, %s20, 1
      %p287 = scmp.lt.s32.totalorder %s22, 0
      %s288 = scalar_select %p287, %s22, 0
      %s289 = sadd.s32 %s288, %s286
      %s290 = scalar_lea.vmem %s0, %s289
      %p291 = scmp.lt.s32.totalorder %s20, 1
      %s292 = scalar_select %p291, %s20, 1
      %p293 = scmp.lt.s32.totalorder %s21, 0
      %s294 = scalar_select %p293, %s21, 0
      %s295 = smul.addr %s292, 4
      %s296 = sadd.s32 %s294, %s295
      %s297 = smul.addr %s296, 8
      %s298 = scalar_lea.vmem %s1, %s297
      %p299 = scmp.lt.s32.totalorder %s20, 1
      %s300 = scalar_select %p299, %s20, 1
      %p301 = scmp.lt.s32.totalorder %s22, 0
      %s302 = scalar_select %p301, %s22, 0
      %s303 = smul.addr %s300, 4
      %s304 = sadd.s32 %s302, %s303
      %s305 = smul.addr %s304, 8
      %s306 = scalar_lea.vmem %s2, %s305
      %p307 = scmp.lt.s32.totalorder %s20, 1
      %s308 = scalar_select %p307, %s20, 1
      %p309 = scmp.lt.s32.totalorder %s22, 0
      %s310 = scalar_select %p309, %s22, 0
      %s311 = smul.addr %s308, 4
      %s312 = sadd.s32 %s310, %s311
      %s313 = smul.addr %s312, 8
      %s314 = scalar_lea.vmem %s3, %s313
      %p315 = scmp.lt.s32.totalorder %s20, 1
      %s316 = scalar_select %p315, %s20, 1
      %p317 = scmp.lt.s32.totalorder %s21, 0
      %s318 = scalar_select %p317, %s21, 0
      %s319 = smul.addr %s316, 4
      %s320 = sadd.s32 %s318, %s319
      %s321 = smul.addr %s320, 8
      %s322 = scalar_lea.vmem %s4, %s321
      %p324 = scmp.eq.s32.totalorder %s22, 0
      // Predicated region
      $region37: #{transformer_forward.84} parent=35 // pred_check
        %p325 = pneg %p324
      $region38: #{transformer_forward.84} parent=35 // pred_check_branch
        %327 = sbr.rel (%p325) target = $region40
      $region39: #{transformer_forward.84} parent=35 // pred_region
        %vm328 = vcmask 7168
        %329 = vst.msk [vmem:[#allocation2] sm:$0xff] %vm328, -1e+30
        %330 = vst.msk [vmem:[#allocation2 + $0x8] sm:$0xff] %vm328, -1e+30
        %331 = vst.msk [vmem:[#allocation2 + $0x10] sm:$0xff] %vm328, -1e+30
        %332 = vst.msk [vmem:[#allocation2 + $0x18] sm:$0xff] %vm328, -1e+30
        %333 = vst.msk [vmem:[#allocation3] sm:$0xff] %vm328, 0.0
        %334 = vst.msk [vmem:[#allocation3 + $0x8] sm:$0xff] %vm328, 0.0
        %335 = vst.msk [vmem:[#allocation3 + $0x10] sm:$0xff] %vm328, 0.0
        %336 = vst.msk [vmem:[#allocation3 + $0x18] sm:$0xff] %vm328, 0.0
        %vm337 = vcmask 64512
        %338 = vst.msk [vmem:[#allocation4] sm:$0xff] %vm337, 0.0
        %339 = vst.msk [vmem:[#allocation4 + $0x8] sm:$0xff] %vm337, 0.0
        %340 = vst.msk [vmem:[#allocation4 + $0x10] sm:$0xff] %vm337, 0.0
        %341 = vst.msk [vmem:[#allocation4 + $0x18] sm:$0xff] %vm337, 0.0
      $region40: #{transformer_forward.84} parent=35 // pred_fallthru
        _
      %v342 = vld [vmem:[%s298] sm:$0xff]
      %v343 = vld [vmem:[%s298 + $0x8] sm:$0xff]
      %v344 = vld [vmem:[%s298 + $0x10] sm:$0xff]
      %v345 = vld [vmem:[%s298 + $0x18] sm:$0xff]
      %v346 = vpack.c.bf16 %v342, %v342
      %v347 = vpack.c.bf16 %v343, %v343
      %v348 = vpack.c.bf16 %v344, %v344
      %v349 = vpack.c.bf16 %v345, %v345
      %v350 = vld [vmem:[%s306] sm:$0xff]
      %v351 = vld [vmem:[%s306 + $0x8] sm:$0xff]
      %v352 = vld [vmem:[%s306 + $0x10] sm:$0xff]
      %v353 = vld [vmem:[%s306 + $0x18] sm:$0xff]
      %v354 = vpack.c.bf16 %v350, %v350
      %v355 = vpack.c.bf16 %v351, %v351
      %v356 = vpack.c.bf16 %v352, %v352
      %v357 = vpack.c.bf16 %v353, %v353
      %s358 = smul.u32 %s21, 8
      %v359 = vlaneseq
      %v360 = vshrl.u32 %v359, 7
      %v361 = vstv %s358
      %v362 = vadd.s32 %v361, %v360
      %s363 = smul.u32 %s22, 8
      %v364 = vlaneseq
      %v365 = vand.u32 %v364, 127
      %v366 = vstv %s363
      %v367 = vadd.s32 %v366, %v365
      %vm368 = vcmp.gt.s32.totalorder %v367, %v362
      %v369 = vsel %vm368, -1e+30, 0.0
      %vm370 = vcmask 64512
      %v372 = vsel %vm370, %v346, 0
      %v375 = vsel %vm370, %v354, 0
      %377 = vmatprep.subr.bf16.mxu0 0
      %378 = vmatpush1.bf16.xpose.msra.mxu0 %v375
      %379 = vmatprep.subr.bf16.mxu0 0
      %380 = vmatpush1.bf16.xpose.msra.mxu0 0
      %381 = vmatprep.subr.bf16.mxu0 0
      %382 = vmatpush1.bf16.xpose.msra.mxu0 0
      %383 = vmatprep.subr.bf16.mxu0 0
      %384 = vmatpush1.bf16.xpose.msra.mxu0 0
      %385 = vmatprep.subr.bf16.mxu0 0
      %386 = vmatpush1.bf16.xpose.msra.mxu0 0
      %387 = vmatprep.subr.bf16.mxu0 0
      %388 = vmatpush1.bf16.xpose.msra.mxu0 0
      %389 = vmatprep.subr.bf16.mxu0 0
      %390 = vmatpush1.bf16.xpose.msra.mxu0 0
      %391 = vmatprep.subr.bf16.mxu0 0
      %392 = vmatpush1.bf16.xpose.msra.mxu0 0
      %393 = vmatprep.subr.bf16.mxu0 0
      %394 = vmatpush1.bf16.xpose.msra.mxu0 0
      %395 = vmatprep.subr.bf16.mxu0 0
      %396 = vmatpush1.bf16.xpose.msra.mxu0 0
      %397 = vmatprep.subr.bf16.mxu0 0
      %398 = vmatpush1.bf16.xpose.msra.mxu0 0
      %399 = vmatprep.subr.bf16.mxu0 0
      %400 = vmatpush1.bf16.xpose.msra.mxu0 0
      %401 = vmatprep.subr.bf16.mxu0 0
      %402 = vmatpush1.bf16.xpose.msra.mxu0 0
      %403 = vmatprep.subr.bf16.mxu0 0
      %404 = vmatpush1.bf16.xpose.msra.mxu0 0
      %405 = vmatprep.subr.bf16.mxu0 0
      %406 = vmatpush1.bf16.xpose.msra.mxu0 0
      %407 = vmatprep.subr.bf16.mxu0 0
      %408 = vmatpush1.bf16.xpose.msra.mxu0 0
      %409 = vmatprep.mubr.bf16.mxu0 0
      %410 = vmatmul.mubr.bf16.gmra.mrb[0].mxu0 %v372
      %v411 = vpop.f32.mrb[0].mxu0
      %v412 = vadd.f32 %v369, %v411
      %v413 = vpop.f32.mrb[0].mxu0
      %v414 = vpop.f32.mrb[0].mxu0
      %v415 = vpop.f32.mrb[0].mxu0
      %416 = vdwg.mxu0
      %v418 = vsel %vm370, %v347, 0
      %v421 = vsel %vm370, %v355, 0
      %423 = vmatprep.subr.bf16.mxu0 0
      %424 = vmatpush1.bf16.xpose.msra.mxu0 %v421
      %425 = vmatprep.subr.bf16.mxu0 0
      %426 = vmatpush1.bf16.xpose.msra.mxu0 0
      %427 = vmatprep.subr.bf16.mxu0 0
      %428 = vmatpush1.bf16.xpose.msra.mxu0 0
      %429 = vmatprep.subr.bf16.mxu0 0
      %430 = vmatpush1.bf16.xpose.msra.mxu0 0
      %431 = vmatprep.subr.bf16.mxu0 0
      %432 = vmatpush1.bf16.xpose.msra.mxu0 0
      %433 = vmatprep.subr.bf16.mxu0 0
      %434 = vmatpush1.bf16.xpose.msra.mxu0 0
      %435 = vmatprep.subr.bf16.mxu0 0
      %436 = vmatpush1.bf16.xpose.msra.mxu0 0
      %437 = vmatprep.subr.bf16.mxu0 0
      %438 = vmatpush1.bf16.xpose.msra.mxu0 0
      %439 = vmatprep.subr.bf16.mxu0 0
      %440 = vmatpush1.bf16.xpose.msra.mxu0 0
      %441 = vmatprep.subr.bf16.mxu0 0
      %442 = vmatpush1.bf16.xpose.msra.mxu0 0
      %443 = vmatprep.subr.bf16.mxu0 0
      %444 = vmatpush1.bf16.xpose.msra.mxu0 0
      %445 = vmatprep.subr.bf16.mxu0 0
      %446 = vmatpush1.bf16.xpose.msra.mxu0 0
      %447 = vmatprep.subr.bf16.mxu0 0
      %448 = vmatpush1.bf16.xpose.msra.mxu0 0
      %449 = vmatprep.subr.bf16.mxu0 0
      %450 = vmatpush1.bf16.xpose.msra.mxu0 0
      %451 = vmatprep.subr.bf16.mxu0 0
      %452 = vmatpush1.bf16.xpose.msra.mxu0 0
      %453 = vmatprep.subr.bf16.mxu0 0
      %454 = vmatpush1.bf16.xpose.msra.mxu0 0
      %455 = vmatprep.mubr.bf16.mxu0 0
      %456 = vmatmul.mubr.bf16.gmra.mrb[0].mxu0 %v418
      %v457 = vpop.f32.mrb[0].mxu0
      %v458 = vadd.f32 %v369, %v457
      %v459 = vpop.f32.mrb[0].mxu0
      %v460 = vpop.f32.mrb[0].mxu0
      %v461 = vpop.f32.mrb[0].mxu0
      %462 = vdwg.mxu0
      %v464 = vsel %vm370, %v348, 0
      %v467 = vsel %vm370, %v356, 0
      %469 = vmatprep.subr.bf16.mxu0 0
      %470 = vmatpush1.bf16.xpose.msra.mxu0 %v467
      %471 = vmatprep.subr.bf16.mxu0 0
      %472 = vmatpush1.bf16.xpose.msra.mxu0 0
      %473 = vmatprep.subr.bf16.mxu0 0
      %474 = vmatpush1.bf16.xpose.msra.mxu0 0
      %475 = vmatprep.subr.bf16.mxu0 0
      %476 = vmatpush1.bf16.xpose.msra.mxu0 0
      %477 = vmatprep.subr.bf16.mxu0 0
      %478 = vmatpush1.bf16.xpose.msra.mxu0 0
      %479 = vmatprep.subr.bf16.mxu0 0
      %480 = vmatpush1.bf16.xpose.msra.mxu0 0
      %481 = vmatprep.subr.bf16.mxu0 0
      %482 = vmatpush1.bf16.xpose.msra.mxu0 0
      %483 = vmatprep.subr.bf16.mxu0 0
      %484 = vmatpush1.bf16.xpose.msra.mxu0 0
      %485 = vmatprep.subr.bf16.mxu0 0
      %486 = vmatpush1.bf16.xpose.msra.mxu0 0
      %487 = vmatprep.subr.bf16.mxu0 0
      %488 = vmatpush1.bf16.xpose.msra.mxu0 0
      %489 = vmatprep.subr.bf16.mxu0 0
      %490 = vmatpush1.bf16.xpose.msra.mxu0 0
      %491 = vmatprep.subr.bf16.mxu0 0
      %492 = vmatpush1.bf16.xpose.msra.mxu0 0
      %493 = vmatprep.subr.bf16.mxu0 0
      %494 = vmatpush1.bf16.xpose.msra.mxu0 0
      %495 = vmatprep.subr.bf16.mxu0 0
      %496 = vmatpush1.bf16.xpose.msra.mxu0 0
      %497 = vmatprep.subr.bf16.mxu0 0
      %498 = vmatpush1.bf16.xpose.msra.mxu0 0
      %499 = vmatprep.subr.bf16.mxu0 0
      %500 = vmatpush1.bf16.xpose.msra.mxu0 0
      %501 = vmatprep.mubr.bf16.mxu0 0
      %502 = vmatmul.mubr.bf16.gmra.mrb[0].mxu0 %v464
      %v503 = vpop.f32.mrb[0].mxu0
      %v504 = vadd.f32 %v369, %v503
      %v505 = vpop.f32.mrb[0].mxu0
      %v506 = vpop.f32.mrb[0].mxu0
      %v507 = vpop.f32.mrb[0].mxu0
      %508 = vdwg.mxu0
      %v510 = vsel %vm370, %v349, 0
      %v513 = vsel %vm370, %v357, 0
      %515 = vmatprep.subr.bf16.mxu0 0
      %516 = vmatpush1.bf16.xpose.msra.mxu0 %v513
      %517 = vmatprep.subr.bf16.mxu0 0
      %518 = vmatpush1.bf16.xpose.msra.mxu0 0
      %519 = vmatprep.subr.bf16.mxu0 0
      %520 = vmatpush1.bf16.xpose.msra.mxu0 0
      %521 = vmatprep.subr.bf16.mxu0 0
      %522 = vmatpush1.bf16.xpose.msra.mxu0 0
      %523 = vmatprep.subr.bf16.mxu0 0
      %524 = vmatpush1.bf16.xpose.msra.mxu0 0
      %525 = vmatprep.subr.bf16.mxu0 0
      %526 = vmatpush1.bf16.xpose.msra.mxu0 0
      %527 = vmatprep.subr.bf16.mxu0 0
      %528 = vmatpush1.bf16.xpose.msra.mxu0 0
      %529 = vmatprep.subr.bf16.mxu0 0
      %530 = vmatpush1.bf16.xpose.msra.mxu0 0
      %531 = vmatprep.subr.bf16.mxu0 0
      %532 = vmatpush1.bf16.xpose.msra.mxu0 0
      %533 = vmatprep.subr.bf16.mxu0 0
      %534 = vmatpush1.bf16.xpose.msra.mxu0 0
      %535 = vmatprep.subr.bf16.mxu0 0
      %536 = vmatpush1.bf16.xpose.msra.mxu0 0
      %537 = vmatprep.subr.bf16.mxu0 0
      %538 = vmatpush1.bf16.xpose.msra.mxu0 0
      %539 = vmatprep.subr.bf16.mxu0 0
      %540 = vmatpush1.bf16.xpose.msra.mxu0 0
      %541 = vmatprep.subr.bf16.mxu0 0
      %542 = vmatpush1.bf16.xpose.msra.mxu0 0
      %543 = vmatprep.subr.bf16.mxu0 0
      %544 = vmatpush1.bf16.xpose.msra.mxu0 0
      %545 = vmatprep.subr.bf16.mxu0 0
      %546 = vmatpush1.bf16.xpose.msra.mxu0 0
      %547 = vmatprep.mubr.bf16.mxu0 0
      %548 = vmatmul.mubr.bf16.gmra.mrb[0].mxu0 %v510
      %v549 = vpop.f32.mrb[0].mxu0
      %v550 = vadd.f32 %v369, %v549
      %v551 = vpop.f32.mrb[0].mxu0
      %v552 = vpop.f32.mrb[0].mxu0
      %v553 = vpop.f32.mrb[0].mxu0
      %554 = vdwg.mxu0
      %v555 = vld [vmem:[#allocation2] sm:$0xff]
      %v556 = vld [vmem:[#allocation2 + $0x8] sm:$0xff]
      %v557 = vld [vmem:[#allocation2 + $0x10] sm:$0xff]
      %v558 = vld [vmem:[#allocation2 + $0x18] sm:$0xff]
      %v559 = vsel %vm370, %v412, -inf
      %560 = vmax.xlane.f32.xlu0 %v559
      %v561 = vpop.xlane.xlu0 %560
      %v562 = vsel %vm370, %v458, -inf
      %563 = vmax.xlane.f32.xlu0 %v562
      %v564 = vpop.xlane.xlu0 %563
      %v565 = vsel %vm370, %v504, -inf
      %566 = vmax.xlane.f32.xlu0 %v565
      %v567 = vpop.xlane.xlu0 %566
      %v568 = vsel %vm370, %v550, -inf
      %569 = vmax.xlane.f32.xlu0 %v568
      %v570 = vpop.xlane.xlu0 %569
      %v571 = vmax.f32 %v555, %v561
      %v572 = vmax.f32 %v556, %v564
      %v573 = vmax.f32 %v557, %v567
      %v574 = vmax.f32 %v558, %v570
      %v575 = vsub.f32 %v555, %v571
      %v576 = vsub.f32 %v556, %v572
      %v577 = vsub.f32 %v557, %v573
      %v578 = vsub.f32 %v558, %v574
      %v579 = vmul.f32 %v575, 1.442695
      %v580 = vpow.pop %v579
      %v581 = vmul.f32 %v576, 1.442695
      %v582 = vpow.pop %v581
      %v583 = vmul.f32 %v577, 1.442695
      %v584 = vpow.pop %v583
      %v585 = vmul.f32 %v578, 1.442695
      %v586 = vpow.pop %v585
      %588 = vset.pattern.permute.xlu0 0
      %589 = vperm.xlu0 %588, %v571
      %v590 = vpop.permute.xlu0 %589
      %593 = vset.pattern.permute.xlu0 0
      %594 = vperm.xlu0 %593, %v572
      %v595 = vpop.permute.xlu0 %594
      %598 = vset.pattern.permute.xlu0 0
      %599 = vperm.xlu0 %598, %v573
      %v600 = vpop.permute.xlu0 %599
      %603 = vset.pattern.permute.xlu0 0
      %604 = vperm.xlu0 %603, %v574
      %v605 = vpop.permute.xlu0 %604
      %v607 = vsub.f32 %v412, %v590
      %v608 = vsub.f32 %v458, %v595
      %v609 = vsub.f32 %v504, %v600
      %v610 = vsub.f32 %v550, %v605
      %v611 = vmul.f32 %v607, 1.442695
      %v612 = vpow.pop %v611
      %v613 = vmul.f32 %v608, 1.442695
      %v614 = vpow.pop %v613
      %v615 = vmul.f32 %v609, 1.442695
      %v616 = vpow.pop %v615
      %v617 = vmul.f32 %v610, 1.442695
      %v618 = vpow.pop %v617
      %v619 = vld [vmem:[#allocation3] sm:$0xff]
      %v620 = vld [vmem:[#allocation3 + $0x8] sm:$0xff]
      %v621 = vld [vmem:[#allocation3 + $0x10] sm:$0xff]
      %v622 = vld [vmem:[#allocation3 + $0x18] sm:$0xff]
      %v623 = vmul.f32 %v580, %v619
      %v624 = vmul.f32 %v582, %v620
      %v625 = vmul.f32 %v584, %v621
      %v626 = vmul.f32 %v586, %v622
      %v627 = vsel %vm370, %v612, 0.0
      %628 = vadd.xlane.f32.xlu0 %v627
      %v629 = vpop.xlane.xlu0 %628
      %v630 = vsel %vm370, %v614, 0.0
      %631 = vadd.xlane.f32.xlu0 %v630
      %v632 = vpop.xlane.xlu0 %631
      %v633 = vsel %vm370, %v616, 0.0
      %634 = vadd.xlane.f32.xlu0 %v633
      %v635 = vpop.xlane.xlu0 %634
      %v636 = vsel %vm370, %v618, 0.0
      %637 = vadd.xlane.f32.xlu0 %v636
      %v638 = vpop.xlane.xlu0 %637
      %v639 = vadd.f32 %v623, %v629
      %v640 = vadd.f32 %v624, %v632
      %v641 = vadd.f32 %v625, %v635
      %v642 = vadd.f32 %v626, %v638
      %vm643 = vcmask 7168
      %644 = vst.msk [vmem:[#allocation3] sm:$0xff] %vm643, %v639
      %645 = vst.msk [vmem:[#allocation3 + $0x8] sm:$0xff] %vm643, %v640
      %646 = vst.msk [vmem:[#allocation3 + $0x10] sm:$0xff] %vm643, %v641
      %647 = vst.msk [vmem:[#allocation3 + $0x18] sm:$0xff] %vm643, %v642
      %v648 = vpack.c.bf16 %v612, %v612
      %v649 = vpack.c.bf16 %v614, %v614
      %v650 = vpack.c.bf16 %v616, %v616
      %v651 = vpack.c.bf16 %v618, %v618
      %v652 = vld [vmem:[%s314] sm:$0xff]
      %v653 = vld [vmem:[%s314 + $0x8] sm:$0xff]
      %v654 = vld [vmem:[%s314 + $0x10] sm:$0xff]
      %v655 = vld [vmem:[%s314 + $0x18] sm:$0xff]
      %v656 = vpack.c.bf16 %v652, %v652
      %v657 = vpack.c.bf16 %v653, %v653
      %v658 = vpack.c.bf16 %v654, %v654
      %v659 = vpack.c.bf16 %v655, %v655
      %v661 = vsel %vm370, %v648, 0
      %vm663 = vcmask 1043456
      %v665 = vsel %vm663, %v656, 0
      %667 = vmatprep.subr.bf16.mxu0 0
      %668 = vmatpush1.bf16.msra.mxu0 %v665
      %669 = vmatprep.subr.bf16.mxu0 0
      %670 = vmatpush1.bf16.msra.mxu0 0
      %671 = vmatprep.subr.bf16.mxu0 0
      %672 = vmatpush1.bf16.msra.mxu0 0
      %673 = vmatprep.subr.bf16.mxu0 0
      %674 = vmatpush1.bf16.msra.mxu0 0
      %675 = vmatprep.subr.bf16.mxu0 0
      %676 = vmatpush1.bf16.msra.mxu0 0
      %677 = vmatprep.subr.bf16.mxu0 0
      %678 = vmatpush1.bf16.msra.mxu0 0
      %679 = vmatprep.subr.bf16.mxu0 0
      %680 = vmatpush1.bf16.msra.mxu0 0
      %681 = vmatprep.subr.bf16.mxu0 0
      %682 = vmatpush1.bf16.msra.mxu0 0
      %683 = vmatprep.subr.bf16.mxu0 0
      %684 = vmatpush1.bf16.msra.mxu0 0
      %685 = vmatprep.subr.bf16.mxu0 0
      %686 = vmatpush1.bf16.msra.mxu0 0
      %687 = vmatprep.subr.bf16.mxu0 0
      %688 = vmatpush1.bf16.msra.mxu0 0
      %689 = vmatprep.subr.bf16.mxu0 0
      %690 = vmatpush1.bf16.msra.mxu0 0
      %691 = vmatprep.subr.bf16.mxu0 0
      %692 = vmatpush1.bf16.msra.mxu0 0
      %693 = vmatprep.subr.bf16.mxu0 0
      %694 = vmatpush1.bf16.msra.mxu0 0
      %695 = vmatprep.subr.bf16.mxu0 0
      %696 = vmatpush1.bf16.msra.mxu0 0
      %697 = vmatprep.subr.bf16.mxu0 0
      %698 = vmatpush1.bf16.msra.mxu0 0
      %699 = vmatprep.mubr.bf16.mxu0 0
      %700 = vmatmul.mubr.bf16.gmra.mrb[0].mxu0 %v661
      %v701 = vpop.f32.mrb[0].mxu0
      %v702 = vadd.f32 0.0, %v701
      %v703 = vpop.f32.mrb[0].mxu0
      %v704 = vpop.f32.mrb[0].mxu0
      %v705 = vpop.f32.mrb[0].mxu0
      %706 = vdwg.mxu0
      %v708 = vsel %vm370, %v649, 0
      %v711 = vsel %vm663, %v657, 0
      %713 = vmatprep.subr.bf16.mxu0 0
      %714 = vmatpush1.bf16.msra.mxu0 %v711
      %715 = vmatprep.subr.bf16.mxu0 0
      %716 = vmatpush1.bf16.msra.mxu0 0
      %717 = vmatprep.subr.bf16.mxu0 0
      %718 = vmatpush1.bf16.msra.mxu0 0
      %719 = vmatprep.subr.bf16.mxu0 0
      %720 = vmatpush1.bf16.msra.mxu0 0
      %721 = vmatprep.subr.bf16.mxu0 0
      %722 = vmatpush1.bf16.msra.mxu0 0
      %723 = vmatprep.subr.bf16.mxu0 0
      %724 = vmatpush1.bf16.msra.mxu0 0
      %725 = vmatprep.subr.bf16.mxu0 0
      %726 = vmatpush1.bf16.msra.mxu0 0
      %727 = vmatprep.subr.bf16.mxu0 0
      %728 = vmatpush1.bf16.msra.mxu0 0
      %729 = vmatprep.subr.bf16.mxu0 0
      %730 = vmatpush1.bf16.msra.mxu0 0
      %731 = vmatprep.subr.bf16.mxu0 0
      %732 = vmatpush1.bf16.msra.mxu0 0
      %733 = vmatprep.subr.bf16.mxu0 0
      %734 = vmatpush1.bf16.msra.mxu0 0
      %735 = vmatprep.subr.bf16.mxu0 0
      %736 = vmatpush1.bf16.msra.mxu0 0
      %737 = vmatprep.subr.bf16.mxu0 0
      %738 = vmatpush1.bf16.msra.mxu0 0
      %739 = vmatprep.subr.bf16.mxu0 0
      %740 = vmatpush1.bf16.msra.mxu0 0
      %741 = vmatprep.subr.bf16.mxu0 0
      %742 = vmatpush1.bf16.msra.mxu0 0
      %743 = vmatprep.subr.bf16.mxu0 0
      %744 = vmatpush1.bf16.msra.mxu0 0
      %745 = vmatprep.mubr.bf16.mxu0 0
      %746 = vmatmul.mubr.bf16.gmra.mrb[0].mxu0 %v708
      %v747 = vpop.f32.mrb[0].mxu0
      %v748 = vadd.f32 0.0, %v747
      %v749 = vpop.f32.mrb[0].mxu0
      %v750 = vpop.f32.mrb[0].mxu0
      %v751 = vpop.f32.mrb[0].mxu0
      %752 = vdwg.mxu0
      %v754 = vsel %vm370, %v650, 0
      %v757 = vsel %vm663, %v658, 0
      %759 = vmatprep.subr.bf16.mxu0 0
      %760 = vmatpush1.bf16.msra.mxu0 %v757
      %761 = vmatprep.subr.bf16.mxu0 0
      %762 = vmatpush1.bf16.msra.mxu0 0
      %763 = vmatprep.subr.bf16.mxu0 0
      %764 = vmatpush1.bf16.msra.mxu0 0
      %765 = vmatprep.subr.bf16.mxu0 0
      %766 = vmatpush1.bf16.msra.mxu0 0
      %767 = vmatprep.subr.bf16.mxu0 0
      %768 = vmatpush1.bf16.msra.mxu0 0
      %769 = vmatprep.subr.bf16.mxu0 0
      %770 = vmatpush1.bf16.msra.mxu0 0
      %771 = vmatprep.subr.bf16.mxu0 0
      %772 = vmatpush1.bf16.msra.mxu0 0
      %773 = vmatprep.subr.bf16.mxu0 0
      %774 = vmatpush1.bf16.msra.mxu0 0
      %775 = vmatprep.subr.bf16.mxu0 0
      %776 = vmatpush1.bf16.msra.mxu0 0
      %777 = vmatprep.subr.bf16.mxu0 0
      %778 = vmatpush1.bf16.msra.mxu0 0
      %779 = vmatprep.subr.bf16.mxu0 0
      %780 = vmatpush1.bf16.msra.mxu0 0
      %781 = vmatprep.subr.bf16.mxu0 0
      %782 = vmatpush1.bf16.msra.mxu0 0
      %783 = vmatprep.subr.bf16.mxu0 0
      %784 = vmatpush1.bf16.msra.mxu0 0
      %785 = vmatprep.subr.bf16.mxu0 0
      %786 = vmatpush1.bf16.msra.mxu0 0
      %787 = vmatprep.subr.bf16.mxu0 0
      %788 = vmatpush1.bf16.msra.mxu0 0
      %789 = vmatprep.subr.bf16.mxu0 0
      %790 = vmatpush1.bf16.msra.mxu0 0
      %791 = vmatprep.mubr.bf16.mxu0 0
      %792 = vmatmul.mubr.bf16.gmra.mrb[0].mxu0 %v754
      %v793 = vpop.f32.mrb[0].mxu0
      %v794 = vadd.f32 0.0, %v793
      %v795 = vpop.f32.mrb[0].mxu0
      %v796 = vpop.f32.mrb[0].mxu0
      %v797 = vpop.f32.mrb[0].mxu0
      %798 = vdwg.mxu0
      %v800 = vsel %vm370, %v651, 0
      %v803 = vsel %vm663, %v659, 0
      %805 = vmatprep.subr.bf16.mxu0 0
      %806 = vmatpush1.bf16.msra.mxu0 %v803
      %807 = vmatprep.subr.bf16.mxu0 0
      %808 = vmatpush1.bf16.msra.mxu0 0
      %809 = vmatprep.subr.bf16.mxu0 0
      %810 = vmatpush1.bf16.msra.mxu0 0
      %811 = vmatprep.subr.bf16.mxu0 0
      %812 = vmatpush1.bf16.msra.mxu0 0
      %813 = vmatprep.subr.bf16.mxu0 0
      %814 = vmatpush1.bf16.msra.mxu0 0
      %815 = vmatprep.subr.bf16.mxu0 0
      %816 = vmatpush1.bf16.msra.mxu0 0
      %817 = vmatprep.subr.bf16.mxu0 0
      %818 = vmatpush1.bf16.msra.mxu0 0
      %819 = vmatprep.subr.bf16.mxu0 0
      %820 = vmatpush1.bf16.msra.mxu0 0
      %821 = vmatprep.subr.bf16.mxu0 0
      %822 = vmatpush1.bf16.msra.mxu0 0
      %823 = vmatprep.subr.bf16.mxu0 0
      %824 = vmatpush1.bf16.msra.mxu0 0
      %825 = vmatprep.subr.bf16.mxu0 0
      %826 = vmatpush1.bf16.msra.mxu0 0
      %827 = vmatprep.subr.bf16.mxu0 0
      %828 = vmatpush1.bf16.msra.mxu0 0
      %829 = vmatprep.subr.bf16.mxu0 0
      %830 = vmatpush1.bf16.msra.mxu0 0
      %831 = vmatprep.subr.bf16.mxu0 0
      %832 = vmatpush1.bf16.msra.mxu0 0
      %833 = vmatprep.subr.bf16.mxu0 0
      %834 = vmatpush1.bf16.msra.mxu0 0
      %835 = vmatprep.subr.bf16.mxu0 0
      %836 = vmatpush1.bf16.msra.mxu0 0
      %837 = vmatprep.mubr.bf16.mxu0 0
      %838 = vmatmul.mubr.bf16.gmra.mrb[0].mxu0 %v800
      %v839 = vpop.f32.mrb[0].mxu0
      %v840 = vadd.f32 0.0, %v839
      %v841 = vpop.f32.mrb[0].mxu0
      %v842 = vpop.f32.mrb[0].mxu0
      %v843 = vpop.f32.mrb[0].mxu0
      %844 = vdwg.mxu0
      %v845 = vld [vmem:[#allocation4] sm:$0xff]
      %v846 = vld [vmem:[#allocation4 + $0x8] sm:$0xff]
      %v847 = vld [vmem:[#allocation4 + $0x10] sm:$0xff]
      %v848 = vld [vmem:[#allocation4 + $0x18] sm:$0xff]
      %850 = vset.pattern.permute.xlu0 0
      %851 = vperm.xlu0 %850, %v580
      %v852 = vpop.permute.xlu0 %851
      %855 = vset.pattern.permute.xlu0 0
      %856 = vperm.xlu0 %855, %v582
      %v857 = vpop.permute.xlu0 %856
      %860 = vset.pattern.permute.xlu0 0
      %861 = vperm.xlu0 %860, %v584
      %v862 = vpop.permute.xlu0 %861
      %865 = vset.pattern.permute.xlu0 0
      %866 = vperm.xlu0 %865, %v586
      %v867 = vpop.permute.xlu0 %866
      %v869 = vmul.f32 %v852, %v845
      %v870 = vmul.f32 %v857, %v846
      %v871 = vmul.f32 %v862, %v847
      %v872 = vmul.f32 %v867, %v848
      %v873 = vadd.f32 %v869, %v702
      %v874 = vadd.f32 %v870, %v748
      %v875 = vadd.f32 %v871, %v794
      %v876 = vadd.f32 %v872, %v840
      %877 = vst.msk [vmem:[#allocation4] sm:$0xff] %vm370, %v873
      %878 = vst.msk [vmem:[#allocation4 + $0x8] sm:$0xff] %vm370, %v874
      %879 = vst.msk [vmem:[#allocation4 + $0x10] sm:$0xff] %vm370, %v875
      %880 = vst.msk [vmem:[#allocation4 + $0x18] sm:$0xff] %vm370, %v876
      %881 = vst.msk [vmem:[#allocation2] sm:$0xff] %vm643, %v571
      %882 = vst.msk [vmem:[#allocation2 + $0x8] sm:$0xff] %vm643, %v572
      %883 = vst.msk [vmem:[#allocation2 + $0x10] sm:$0xff] %vm643, %v573
      %884 = vst.msk [vmem:[#allocation2 + $0x18] sm:$0xff] %vm643, %v574
      // Predicated region
      $region41: #{transformer_forward.84} parent=35 // pred_check
        %p885 = pneg %p324
      $region42: #{transformer_forward.84} parent=35 // pred_check_branch
        %887 = sbr.rel (%p885) target = $region44
      $region43: #{transformer_forward.84} parent=35 // pred_region
        %v888 = vld [vmem:[#allocation3] sm:$0xff]
        %v889 = vld [vmem:[#allocation3 + $0x8] sm:$0xff]
        %v890 = vld [vmem:[#allocation3 + $0x10] sm:$0xff]
        %v891 = vld [vmem:[#allocation3 + $0x18] sm:$0xff]
        %v892 = vmax.f32 %v888, 1e-30
        %v893 = vmax.f32 %v889, 1e-30
        %v894 = vmax.f32 %v890, 1e-30
        %v895 = vmax.f32 %v891, 1e-30
        %v896 = vld [vmem:[#allocation4] sm:$0xff]
        %v897 = vld [vmem:[#allocation4 + $0x8] sm:$0xff]
        %v898 = vld [vmem:[#allocation4 + $0x10] sm:$0xff]
        %v899 = vld [vmem:[#allocation4 + $0x18] sm:$0xff]
        %v900 = vrcp.pop %v892
        %v901 = vrcp.pop %v893
        %v902 = vrcp.pop %v894
        %v903 = vrcp.pop %v895
        %905 = vset.pattern.permute.xlu0 0
        %906 = vperm.xlu0 %905, %v900
        %v907 = vpop.permute.xlu0 %906
        %910 = vset.pattern.permute.xlu0 0
        %911 = vperm.xlu0 %910, %v901
        %v912 = vpop.permute.xlu0 %911
        %915 = vset.pattern.permute.xlu0 0
        %916 = vperm.xlu0 %915, %v902
        %v917 = vpop.permute.xlu0 %916
        %920 = vset.pattern.permute.xlu0 0
        %921 = vperm.xlu0 %920, %v903
        %v922 = vpop.permute.xlu0 %921
        %v924 = vmul.f32 %v896, %v907
        %v925 = vmul.f32 %v897, %v912
        %v926 = vmul.f32 %v898, %v917
        %v927 = vmul.f32 %v899, %v922
        %928 = vst.msk [vmem:[%s322] sm:$0xff] %vm370, %v924
        %929 = vst.msk [vmem:[%s322 + $0x8] sm:$0xff] %vm370, %v925
        %930 = vst.msk [vmem:[%s322 + $0x10] sm:$0xff] %vm370, %v926
        %931 = vst.msk [vmem:[%s322 + $0x18] sm:$0xff] %vm370, %v927
      $region44: #{transformer_forward.84} parent=35 // pred_fallthru
        _
      %p932 = scmp.lt.s32.totalorder %s20, 1
      %s933 = scalar_select %p932, %s20, 1
      %p934 = scmp.lt.s32.totalorder %s21, 0
      %s935 = scalar_select %p934, %s21, 0
      %s936 = smul.addr %s933, 4
      %s937 = sadd.s32 %s935, %s936
      %s938 = smul.addr %s937, 8
      %s939 = scalar_lea.vmem %s4, %s938
      // Predicated region
      $region45: #{transformer_forward.84} parent=35 // pred_check
        %p940 = pneg %p166
      $region46: #{transformer_forward.84} parent=35 // pred_check_branch
        %942 = sbr.rel (%p940) target = $region48
      $region47: #{transformer_forward.84} parent=35 // pred_region
        _
      $region48: #{transformer_forward.84} parent=35 // pred_fallthru
        _
    $region36: #{transformer_forward.84} parent=5 // pred_fallthru
      _
    %p943 = scmp.le.s32.totalorder 2, %s10
    // Predicated region
    $region49: #{transformer_forward.84} parent=5 // pred_check
      %p944 = pneg %p943
    $region50: #{transformer_forward.84} parent=5 // pred_check_branch
      %946 = sbr.rel (%p944) target = $region52
    $region51: #{transformer_forward.84} parent=5 // pred_region
      %s947 = ssub.s32 %s10, 2
      // Predicated region
      $region53: #{transformer_forward.84} parent=51 // pred_check
        %p948 = pneg %p172
      $region54: #{transformer_forward.84} parent=51 // pred_check_branch
        %950 = sbr.rel (%p948) target = $region56
      $region55: #{transformer_forward.84} parent=51 // pred_region
        %p951 = scmp.lt.s32.totalorder %s23, 1
        %s952 = scalar_select %p951, %s23, 1
        %p953 = scmp.lt.s32.totalorder %s24, 0
        %s954 = scalar_select %p953, %s24, 0
        %s955 = smul.addr %s952, 4
        %s956 = sadd.s32 %s954, %s955
        %s957 = smul.addr %s956, 8
        %s958 = scalar_lea.vmem %s4, %s957
      $region56: #{transformer_forward.84} parent=51 // pred_fallthru
        _
    $region52: #{transformer_forward.84} parent=5 // pred_fallthru
      _
  $region6: #{transformer_forward.84} parent=0 // loop_footer
    %s14 = sadd.s32 1, %s10
  $region7: #{transformer_forward.84} parent=0 // loop_footer_branch
    %9 = sbr.rel target = $region3
  $region8: #{transformer_forward.84} parent=0 // loop_exit
    _

// kernel: transformer_forward.89
$region0: #{transformer_forward.89}
  #allocation0 [shape = 'u32[]', space=smem, size = 0x4, offset = 0x4, fixed_abs, tag = 'smem constant byte address 0x4 - core index']
  #allocation1 [shape = 'u32[144,128]{1,0:T(1,128)}', space=vmem, size = 0x12000, scoped, tag = 'internal scratch']
  #allocation2 [shape = 'f32[4,8,1]{2,1,0:T(8,128)}', space=vmem, size = 0x4000, scoped, tag = 'scratch operand']
  #allocation3 [shape = 'f32[4,8,1]{2,1,0:T(8,128)}', space=vmem, size = 0x4000, scoped, tag = 'scratch operand']
  #allocation4 [shape = 'f32[4,8,8]{2,1,0:T(8,128)}', space=vmem, size = 0x4000, scoped, tag = 'scratch operand']
  %s0 = inlined_call_operand.vmem [shape: s32[2,1,8], index: 0, kind: input, shape index: {}]
  %s1 = inlined_call_operand.vmem [shape: f32[2,4,8,8], index: 1, kind: input, shape index: {}]
  %s2 = inlined_call_operand.vmem [shape: f32[2,4,8,8], index: 2, kind: input, shape index: {}]
  %s3 = inlined_call_operand.vmem [shape: f32[2,4,8,8], index: 3, kind: input, shape index: {}]
  %s4 = inlined_call_operand.vmem [shape: f32[2,4,8,8], index: 4, kind: output, shape index: {}]
  %s5 = sld [smem:[#allocation0]]
  $region57: #{transformer_forward.89} parent=0
    _
  %s7 = ssub.s32 1, %s5
  %s8 = scalar_select 0, %s7, %s5
  loop: start=0, step=1, limit=4
  $region2: #{transformer_forward.89} parent=0 // loop_pre_header
    _
  $region3: #{transformer_forward.89} parent=0 // loop_header
    %s10 = sphi 0, %s14
    %p11 = scmp.ge.s32.totalorder %s10, 4
    %s17 = sphi 0, %s36
    %s18 = sphi 0, %s32
    %s19 = sphi 0, %s28
    %s20 = sphi 0, %s17
    %s21 = sphi 0, %s18
    %s22 = sphi 0, %s19
    %s23 = sphi 0, %s20
    %s24 = sphi 0, %s21
    %s25 = sphi 0, %s22
    %s41 = sphi 0, %s43
    %s44 = sphi 0, %s41
    %s45 = sphi 0, %s44
    %s61 = sphi 0, %s45
    %s69 = sphi 0, %s71
    %s72 = sphi 0, %s69
    %s73 = sphi 0, %s72
    %s89 = sphi 0, %s73
    %s97 = sphi 0, %s99
    %s100 = sphi 0, %s97
    %s101 = sphi 0, %s100
    %s117 = sphi 0, %s101
    %s125 = sphi 0, %s127
    %s128 = sphi 0, %s125
    %s129 = sphi 0, %s128
    %s145 = sphi 0, %s129
    %s153 = sphi 0, %s155
    %s156 = sphi 0, %s153
    %s157 = sphi 0, %s156
    %s173 = sphi 0, %s157
  $region4: #{transformer_forward.89} parent=0 // loop_header_branch
    %13 = sbr.rel (%p11) target = $region8
  $region5: #{transformer_forward.89} parent=0 // loop_body
    %s15 = ssub.s32 %s10, 1
    %s16 = ssub.s32 %s10, 2
    %s26 = sadd.s32 1, %s19
    %p27 = scmp.ge.s32.totalorder %s26, 1
    %s28 = scalar_select %p27, 0, %s26
    %s29 = sadd.s32 1, %s18
    %s30 = scalar_select %p27, %s29, %s18
    %p31 = scmp.ge.s32.totalorder %s30, 1
    %s32 = scalar_select %p31, 0, %s30
    %s33 = sadd.s32 1, %s17
    %s34 = scalar_select %p31, %s33, %s17
    %p35 = scmp.ge.s32.totalorder %s34, 2
    %s36 = scalar_select %p35, 0, %s34
    %s37 = ssub.s32 %s17, %s36
    %s38 = ssub.s32 %s19, %s28
    %s39 = sor.u32 %s37, %s38
    %p40 = scmp.eq.s32.totalorder %s39, 0
    %s42 = sadd.s32 %s41, 1
    %s43 = scalar_select %p40, %s41, %s42
    %p46 = pneg %p40
    %p47 = scmp.eq.s32.totalorder %s10, 1
    %p48 = por %p46, %p47
    %p49 = scmp.ne.s32.totalorder %s41, %s44
    %p50 = scmp.eq.s32.totalorder %s10, 0
    %p51 = por %p49, %p50
    %p52 = scmp.ne.s32.totalorder %s41, %s44
    %p53 = scmp.eq.s32.totalorder %s15, 1
    %p54 = por %p52, %p53
    %p55 = scmp.ne.s32.totalorder %s44, %s45
    %p56 = scmp.eq.s32.totalorder %s15, 0
    %p57 = por %p55, %p56
    %p58 = scmp.ne.s32.totalorder %s44, %s45
    %p59 = scmp.eq.s32.totalorder %s16, 1
    %p60 = por %p58, %p59
    %p62 = scmp.ne.s32.totalorder %s45, %s61
    %p63 = scmp.eq.s32.totalorder %s16, 0
    %p64 = por %p62, %p63
    %s65 = ssub.s32 %s17, %s36
    %s66 = ssub.s32 %s18, %s32
    %s67 = sor.u32 %s65, %s66
    %p68 = scmp.eq.s32.totalorder %s67, 0
    %s70 = sadd.s32 %s69, 1
    %s71 = scalar_select %p68, %s69, %s70
    %p74 = pneg %p68
    %p75 = scmp.eq.s32.totalorder %s10, 1
    %p76 = por %p74, %p75
    %p77 = scmp.ne.s32.totalorder %s69, %s72
    %p78 = scmp.eq.s32.totalorder %s10, 0
    %p79 = por %p77, %p78
    %p80 = scmp.ne.s32.totalorder %s69, %s72
    %p81 = scmp.eq.s32.totalorder %s15, 1
    %p82 = por %p80, %p81
    %p83 = scmp.ne.s32.totalorder %s72, %s73
    %p84 = scmp.eq.s32.totalorder %s15, 0
    %p85 = por %p83, %p84
    %p86 = scmp.ne.s32.totalorder %s72, %s73
    %p87 = scmp.eq.s32.totalorder %s16, 1
    %p88 = por %p86, %p87
    %p90 = scmp.ne.s32.totalorder %s73, %s89
    %p91 = scmp.eq.s32.totalorder %s16, 0
    %p92 = por %p90, %p91
    %s93 = ssub.s32 %s17, %s36
    %s94 = ssub.s32 %s19, %s28
    %s95 = sor.u32 %s93, %s94
    %p96 = scmp.eq.s32.totalorder %s95, 0
    %s98 = sadd.s32 %s97, 1
    %s99 = scalar_select %p96, %s97, %s98
    %p102 = pneg %p96
    %p103 = scmp.eq.s32.totalorder %s10, 1
    %p104 = por %p102, %p103
    %p105 = scmp.ne.s32.totalorder %s97, %s100
    %p106 = scmp.eq.s32.totalorder %s10, 0
    %p107 = por %p105, %p106
    %p108 = scmp.ne.s32.totalorder %s97, %s100
    %p109 = scmp.eq.s32.totalorder %s15, 1
    %p110 = por %p108, %p109
    %p111 = scmp.ne.s32.totalorder %s100, %s101
    %p112 = scmp.eq.s32.totalorder %s15, 0
    %p113 = por %p111, %p112
    %p114 = scmp.ne.s32.totalorder %s100, %s101
    %p115 = scmp.eq.s32.totalorder %s16, 1
    %p116 = por %p114, %p115
    %p118 = scmp.ne.s32.totalorder %s101, %s117
    %p119 = scmp.eq.s32.totalorder %s16, 0
    %p120 = por %p118, %p119
    %s121 = ssub.s32 %s17, %s36
    %s122 = ssub.s32 %s19, %s28
    %s123 = sor.u32 %s121, %s122
    %p124 = scmp.eq.s32.totalorder %s123, 0
    %s126 = sadd.s32 %s125, 1
    %s127 = scalar_select %p124, %s125, %s126
    %p130 = pneg %p124
    %p131 = scmp.eq.s32.totalorder %s10, 1
    %p132 = por %p130, %p131
    %p133 = scmp.ne.s32.totalorder %s125, %s128
    %p134 = scmp.eq.s32.totalorder %s10, 0
    %p135 = por %p133, %p134
    %p136 = scmp.ne.s32.totalorder %s125, %s128
    %p137 = scmp.eq.s32.totalorder %s15, 1
    %p138 = por %p136, %p137
    %p139 = scmp.ne.s32.totalorder %s128, %s129
    %p140 = scmp.eq.s32.totalorder %s15, 0
    %p141 = por %p139, %p140
    %p142 = scmp.ne.s32.totalorder %s128, %s129
    %p143 = scmp.eq.s32.totalorder %s16, 1
    %p144 = por %p142, %p143
    %p146 = scmp.ne.s32.totalorder %s129, %s145
    %p147 = scmp.eq.s32.totalorder %s16, 0
    %p148 = por %p146, %p147
    %s149 = ssub.s32 %s17, %s36
    %s150 = ssub.s32 %s18, %s32
    %s151 = sor.u32 %s149, %s150
    %p152 = scmp.eq.s32.totalorder %s151, 0
    %s154 = sadd.s32 %s153, 1
    %s155 = scalar_select %p152, %s153, %s154
    %p158 = pneg %p152
    %p159 = scmp.eq.s32.totalorder %s10, 1
    %p160 = por %p158, %p159
    %p161 = scmp.ne.s32.totalorder %s153, %s156
    %p162 = scmp.eq.s32.totalorder %s10, 0
    %p163 = por %p161, %p162
    %p164 = scmp.ne.s32.totalorder %s153, %s156
    %p165 = scmp.eq.s32.totalorder %s15, 1
    %p166 = por %p164, %p165
    %p167 = scmp.ne.s32.totalorder %s156, %s157
    %p168 = scmp.eq.s32.totalorder %s15, 0
    %p169 = por %p167, %p168
    %p170 = scmp.ne.s32.totalorder %s156, %s157
    %p171 = scmp.eq.s32.totalorder %s16, 1
    %p172 = por %p170, %p171
    %p174 = scmp.ne.s32.totalorder %s157, %s173
    %p175 = scmp.eq.s32.totalorder %s16, 0
    %p176 = por %p174, %p175
    %p177 = scmp.le.s32.totalorder 1, %s10
    %p178 = scmp.lt.s32.totalorder %s10, 3
    %p179 = pnand %p177, %p178
    %p180 = pneg %p179
    // Predicated region
    $region9: #{transformer_forward.89} parent=5 // pred_check
      _
    $region10: #{transformer_forward.89} parent=5 // pred_check_branch
      %182 = sbr.rel (%p179) target = $region12
    $region11: #{transformer_forward.89} parent=5 // pred_region
      %s183 = ssub.s32 %s10, 1
    $region12: #{transformer_forward.89} parent=5 // pred_fallthru
      _
    %p184 = scmp.lt.s32.totalorder %s10, 2
    // Predicated region
    $region13: #{transformer_forward.89} parent=5 // pred_check
      %p185 = pneg %p184
    $region14: #{transformer_forward.89} parent=5 // pred_check_branch
      %187 = sbr.rel (%p185) target = $region16
    $region15: #{transformer_forward.89} parent=5 // pred_region
      // Predicated region
      $region17: #{transformer_forward.89} parent=15 // pred_check
        %p188 = pneg %p51
      $region18: #{transformer_forward.89} parent=15 // pred_check_branch
        %190 = sbr.rel (%p188) target = $region20
      $region19: #{transformer_forward.89} parent=15 // pred_region
        %p191 = scmp.lt.s32.totalorder %s17, 1
        %s192 = scalar_select %p191, %s17, 1
        %p193 = scmp.lt.s32.totalorder %s19, 0
        %s194 = scalar_select %p193, %s19, 0
        %s195 = sadd.s32 %s194, %s192
        %s196 = scalar_lea.vmem %s0, %s195
      $region20: #{transformer_forward.89} parent=15 // pred_fallthru
        _
      // Predicated region
      $region21: #{transformer_forward.89} parent=15 // pred_check
        %p197 = pneg %p79
      $region22: #{transformer_forward.89} parent=15 // pred_check_branch
        %199 = sbr.rel (%p197) target = $region24
      $region23: #{transformer_forward.89} parent=15 // pred_region
        %p200 = scmp.lt.s32.totalorder %s17, 1
        %s201 = scalar_select %p200, %s17, 1
        %p202 = scmp.lt.s32.totalorder %s18, 0
        %s203 = scalar_select %p202, %s18, 0
        %s204 = smul.addr %s201, 4
        %s205 = sadd.s32 %s203, %s204
        %s206 = smul.addr %s205, 8
        %s207 = scalar_lea.vmem %s1, %s206
      $region24: #{transformer_forward.89} parent=15 // pred_fallthru
        _
      // Predicated region
      $region25: #{transformer_forward.89} parent=15 // pred_check
        %p208 = pneg %p107
      $region26: #{transformer_forward.89} parent=15 // pred_check_branch
        %210 = sbr.rel (%p208) target = $region28
      $region27: #{transformer_forward.89} parent=15 // pred_region
        %p211 = scmp.lt.s32.totalorder %s17, 1
        %s212 = scalar_select %p211, %s17, 1
        %p213 = scmp.lt.s32.totalorder %s19, 0
        %s214 = scalar_select %p213, %s19, 0
        %s215 = smul.addr %s212, 4
        %s216 = sadd.s32 %s214, %s215
        %s217 = smul.addr %s216, 8
        %s218 = scalar_lea.vmem %s2, %s217
      $region28: #{transformer_forward.89} parent=15 // pred_fallthru
        _
      // Predicated region
      $region29: #{transformer_forward.89} parent=15 // pred_check
        %p219 = pneg %p135
      $region30: #{transformer_forward.89} parent=15 // pred_check_branch
        %221 = sbr.rel (%p219) target = $region32
      $region31: #{transformer_forward.89} parent=15 // pred_region
        %p222 = scmp.lt.s32.totalorder %s17, 1
        %s223 = scalar_select %p222, %s17, 1
        %p224 = scmp.lt.s32.totalorder %s19, 0
        %s225 = scalar_select %p224, %s19, 0
        %s226 = smul.addr %s223, 4
        %s227 = sadd.s32 %s225, %s226
        %s228 = smul.addr %s227, 8
        %s229 = scalar_lea.vmem %s3, %s228
      $region32: #{transformer_forward.89} parent=15 // pred_fallthru
        _
    $region16: #{transformer_forward.89} parent=5 // pred_fallthru
      _
    %p230 = scmp.le.s32.totalorder 1, %s10
    %p231 = scmp.lt.s32.totalorder %s10, 3
    %p232 = pnand %p230, %p231
    %p233 = pneg %p232
    // Predicated region
    $region33: #{transformer_forward.89} parent=5 // pred_check
      _
    $region34: #{transformer_forward.89} parent=5 // pred_check_branch
      %235 = sbr.rel (%p232) target = $region36
    $region35: #{transformer_forward.89} parent=5 // pred_region
      %s236 = ssub.s32 %s10, 1
      %p237 = scmp.lt.s32.totalorder %s20, 1
      %s238 = scalar_select %p237, %s20, 1
      %p239 = scmp.lt.s32.totalorder %s22, 0
      %s240 = scalar_select %p239, %s22, 0
      %s241 = sadd.s32 %s240, %s238
      %s242 = scalar_lea.vmem %s0, %s241
      %p243 = pneg %p57
      %p244 = pneg %p54
      %p245 = scmp.lt.s32.totalorder %s20, 1
      %s246 = scalar_select %p245, %s20, 1
      %p247 = scmp.lt.s32.totalorder %s21, 0
      %s248 = scalar_select %p247, %s21, 0
      %s249 = smul.addr %s246, 4
      %s250 = sadd.s32 %s248, %s249
      %s251 = smul.addr %s250, 8
      %s252 = scalar_lea.vmem %s1, %s251
      %p253 = pneg %p85
      %p254 = pneg %p82
      %p255 = scmp.lt.s32.totalorder %s20, 1
      %s256 = scalar_select %p255, %s20, 1
      %p257 = scmp.lt.s32.totalorder %s22, 0
      %s258 = scalar_select %p257, %s22, 0
      %s259 = smul.addr %s256, 4
      %s260 = sadd.s32 %s258, %s259
      %s261 = smul.addr %s260, 8
      %s262 = scalar_lea.vmem %s2, %s261
      %p263 = pneg %p113
      %p264 = pneg %p110
      %p265 = scmp.lt.s32.totalorder %s20, 1
      %s266 = scalar_select %p265, %s20, 1
      %p267 = scmp.lt.s32.totalorder %s22, 0
      %s268 = scalar_select %p267, %s22, 0
      %s269 = smul.addr %s266, 4
      %s270 = sadd.s32 %s268, %s269
      %s271 = smul.addr %s270, 8
      %s272 = scalar_lea.vmem %s3, %s271
      %p273 = pneg %p141
      %p274 = pneg %p138
      %p275 = pneg %p169
      %p276 = pneg %p166
      %p277 = scmp.lt.s32.totalorder %s20, 1
      %s278 = scalar_select %p277, %s20, 1
      %p279 = scmp.lt.s32.totalorder %s21, 0
      %s280 = scalar_select %p279, %s21, 0
      %s281 = smul.addr %s278, 4
      %s282 = sadd.s32 %s280, %s281
      %s283 = smul.addr %s282, 8
      %s284 = scalar_lea.vmem %s4, %s283
      %p285 = scmp.lt.s32.totalorder %s20, 1
      %s286 = scalar_select %p285, %s20, 1
      %p287 = scmp.lt.s32.totalorder %s22, 0
      %s288 = scalar_select %p287, %s22, 0
      %s289 = sadd.s32 %s288, %s286
      %s290 = scalar_lea.vmem %s0, %s289
      %p291 = scmp.lt.s32.totalorder %s20, 1
      %s292 = scalar_select %p291, %s20, 1
      %p293 = scmp.lt.s32.totalorder %s21, 0
      %s294 = scalar_select %p293, %s21, 0
      %s295 = smul.addr %s292, 4
      %s296 = sadd.s32 %s294, %s295
      %s297 = smul.addr %s296, 8
      %s298 = scalar_lea.vmem %s1, %s297
      %p299 = scmp.lt.s32.totalorder %s20, 1
      %s300 = scalar_select %p299, %s20, 1
      %p301 = scmp.lt.s32.totalorder %s22, 0
      %s302 = scalar_select %p301, %s22, 0
      %s303 = smul.addr %s300, 4
      %s304 = sadd.s32 %s302, %s303
      %s305 = smul.addr %s304, 8
      %s306 = scalar_lea.vmem %s2, %s305
      %p307 = scmp.lt.s32.totalorder %s20, 1
      %s308 = scalar_select %p307, %s20, 1
      %p309 = scmp.lt.s32.totalorder %s22, 0
      %s310 = scalar_select %p309, %s22, 0
      %s311 = smul.addr %s308, 4
      %s312 = sadd.s32 %s310, %s311
      %s313 = smul.addr %s312, 8
      %s314 = scalar_lea.vmem %s3, %s313
      %p315 = scmp.lt.s32.totalorder %s20, 1
      %s316 = scalar_select %p315, %s20, 1
      %p317 = scmp.lt.s32.totalorder %s21, 0
      %s318 = scalar_select %p317, %s21, 0
      %s319 = smul.addr %s316, 4
      %s320 = sadd.s32 %s318, %s319
      %s321 = smul.addr %s320, 8
      %s322 = scalar_lea.vmem %s4, %s321
      %p324 = scmp.eq.s32.totalorder %s22, 0
      // Predicated region
      $region37: #{transformer_forward.89} parent=35 // pred_check
        %p325 = pneg %p324
      $region38: #{transformer_forward.89} parent=35 // pred_check_branch
        %327 = sbr.rel (%p325) target = $region40
      $region39: #{transformer_forward.89} parent=35 // pred_region
        %vm328 = vcmask 7168
        %329 = vst.msk [vmem:[#allocation2] sm:$0xff] %vm328, -1e+30
        %330 = vst.msk [vmem:[#allocation2 + $0x8] sm:$0xff] %vm328, -1e+30
        %331 = vst.msk [vmem:[#allocation2 + $0x10] sm:$0xff] %vm328, -1e+30
        %332 = vst.msk [vmem:[#allocation2 + $0x18] sm:$0xff] %vm328, -1e+30
        %333 = vst.msk [vmem:[#allocation3] sm:$0xff] %vm328, 0.0
        %334 = vst.msk [vmem:[#allocation3 + $0x8] sm:$0xff] %vm328, 0.0
        %335 = vst.msk [vmem:[#allocation3 + $0x10] sm:$0xff] %vm328, 0.0
        %336 = vst.msk [vmem:[#allocation3 + $0x18] sm:$0xff] %vm328, 0.0
        %vm337 = vcmask 64512
        %338 = vst.msk [vmem:[#allocation4] sm:$0xff] %vm337, 0.0
        %339 = vst.msk [vmem:[#allocation4 + $0x8] sm:$0xff] %vm337, 0.0
        %340 = vst.msk [vmem:[#allocation4 + $0x10] sm:$0xff] %vm337, 0.0
        %341 = vst.msk [vmem:[#allocation4 + $0x18] sm:$0xff] %vm337, 0.0
      $region40: #{transformer_forward.89} parent=35 // pred_fallthru
        _
      %v342 = vld [vmem:[%s298] sm:$0xff]
      %v343 = vld [vmem:[%s298 + $0x8] sm:$0xff]
      %v344 = vld [vmem:[%s298 + $0x10] sm:$0xff]
      %v345 = vld [vmem:[%s298 + $0x18] sm:$0xff]
      %v346 = vpack.c.bf16 %v342, %v342
      %v347 = vpack.c.bf16 %v343, %v343
      %v348 = vpack.c.bf16 %v344, %v344
      %v349 = vpack.c.bf16 %v345, %v345
      %v350 = vld [vmem:[%s306] sm:$0xff]
      %v351 = vld [vmem:[%s306 + $0x8] sm:$0xff]
      %v352 = vld [vmem:[%s306 + $0x10] sm:$0xff]
      %v353 = vld [vmem:[%s306 + $0x18] sm:$0xff]
      %v354 = vpack.c.bf16 %v350, %v350
      %v355 = vpack.c.bf16 %v351, %v351
      %v356 = vpack.c.bf16 %v352, %v352
      %v357 = vpack.c.bf16 %v353, %v353
      %v358 = vld [vmem:[%s290] sm:$0x1]
      %vm359 = vcmp.ne.s32.totalorder %v358, 0
      %v360 = vsel %vm359, -1e+30, 0.0
      %v362 = vlaneseq
      %v363 = vshrl.u32 %v362, 7
      %v364 = vsub.s32 0, %v363
      %v365 = vrot.slane %v360, %v364
      %vm367 = vcmask 64512
      %v369 = vsel %vm367, %v346, 0
      %v372 = vsel %vm367, %v354, 0
      %374 = vmatprep.subr.bf16.mxu0 0
      %375 = vmatpush1.bf16.xpose.msra.mxu0 %v372
      %376 = vmatprep.subr.bf16.mxu0 0
      %377 = vmatpush1.bf16.xpose.msra.mxu0 0
      %378 = vmatprep.subr.bf16.mxu0 0
      %379 = vmatpush1.bf16.xpose.msra.mxu0 0
      %380 = vmatprep.subr.bf16.mxu0 0
      %381 = vmatpush1.bf16.xpose.msra.mxu0 0
      %382 = vmatprep.subr.bf16.mxu0 0
      %383 = vmatpush1.bf16.xpose.msra.mxu0 0
      %384 = vmatprep.subr.bf16.mxu0 0
      %385 = vmatpush1.bf16.xpose.msra.mxu0 0
      %386 = vmatprep.subr.bf16.mxu0 0
      %387 = vmatpush1.bf16.xpose.msra.mxu0 0
      %388 = vmatprep.subr.bf16.mxu0 0
      %389 = vmatpush1.bf16.xpose.msra.mxu0 0
      %390 = vmatprep.subr.bf16.mxu0 0
      %391 = vmatpush1.bf16.xpose.msra.mxu0 0
      %392 = vmatprep.subr.bf16.mxu0 0
      %393 = vmatpush1.bf16.xpose.msra.mxu0 0
      %394 = vmatprep.subr.bf16.mxu0 0
      %395 = vmatpush1.bf16.xpose.msra.mxu0 0
      %396 = vmatprep.subr.bf16.mxu0 0
      %397 = vmatpush1.bf16.xpose.msra.mxu0 0
      %398 = vmatprep.subr.bf16.mxu0 0
      %399 = vmatpush1.bf16.xpose.msra.mxu0 0
      %400 = vmatprep.subr.bf16.mxu0 0
      %401 = vmatpush1.bf16.xpose.msra.mxu0 0
      %402 = vmatprep.subr.bf16.mxu0 0
      %403 = vmatpush1.bf16.xpose.msra.mxu0 0
      %404 = vmatprep.subr.bf16.mxu0 0
      %405 = vmatpush1.bf16.xpose.msra.mxu0 0
      %406 = vmatprep.mubr.bf16.mxu0 0
      %407 = vmatmul.mubr.bf16.gmra.mrb[0].mxu0 %v369
      %v408 = vpop.f32.mrb[0].mxu0
      %v409 = vadd.f32 %v365, %v408
      %v410 = vpop.f32.mrb[0].mxu0
      %v411 = vpop.f32.mrb[0].mxu0
      %v412 = vpop.f32.mrb[0].mxu0
      %413 = vdwg.mxu0
      %v415 = vsel %vm367, %v347, 0
      %v418 = vsel %vm367, %v355, 0
      %420 = vmatprep.subr.bf16.mxu0 0
      %421 = vmatpush1.bf16.xpose.msra.mxu0 %v418
      %422 = vmatprep.subr.bf16.mxu0 0
      %423 = vmatpush1.bf16.xpose.msra.mxu0 0
      %424 = vmatprep.subr.bf16.mxu0 0
      %425 = vmatpush1.bf16.xpose.msra.mxu0 0
      %426 = vmatprep.subr.bf16.mxu0 0
      %427 = vmatpush1.bf16.xpose.msra.mxu0 0
      %428 = vmatprep.subr.bf16.mxu0 0
      %429 = vmatpush1.bf16.xpose.msra.mxu0 0
      %430 = vmatprep.subr.bf16.mxu0 0
      %431 = vmatpush1.bf16.xpose.msra.mxu0 0
      %432 = vmatprep.subr.bf16.mxu0 0
      %433 = vmatpush1.bf16.xpose.msra.mxu0 0
      %434 = vmatprep.subr.bf16.mxu0 0
      %435 = vmatpush1.bf16.xpose.msra.mxu0 0
      %436 = vmatprep.subr.bf16.mxu0 0
      %437 = vmatpush1.bf16.xpose.msra.mxu0 0
      %438 = vmatprep.subr.bf16.mxu0 0
      %439 = vmatpush1.bf16.xpose.msra.mxu0 0
      %440 = vmatprep.subr.bf16.mxu0 0
      %441 = vmatpush1.bf16.xpose.msra.mxu0 0
      %442 = vmatprep.subr.bf16.mxu0 0
      %443 = vmatpush1.bf16.xpose.msra.mxu0 0
      %444 = vmatprep.subr.bf16.mxu0 0
      %445 = vmatpush1.bf16.xpose.msra.mxu0 0
      %446 = vmatprep.subr.bf16.mxu0 0
      %447 = vmatpush1.bf16.xpose.msra.mxu0 0
      %448 = vmatprep.subr.bf16.mxu0 0
      %449 = vmatpush1.bf16.xpose.msra.mxu0 0
      %450 = vmatprep.subr.bf16.mxu0 0
      %451 = vmatpush1.bf16.xpose.msra.mxu0 0
      %452 = vmatprep.mubr.bf16.mxu0 0
      %453 = vmatmul.mubr.bf16.gmra.mrb[0].mxu0 %v415
      %v454 = vpop.f32.mrb[0].mxu0
      %v455 = vadd.f32 %v365, %v454
      %v456 = vpop.f32.mrb[0].mxu0
      %v457 = vpop.f32.mrb[0].mxu0
      %v458 = vpop.f32.mrb[0].mxu0
      %459 = vdwg.mxu0
      %v461 = vsel %vm367, %v348, 0
      %v464 = vsel %vm367, %v356, 0
      %466 = vmatprep.subr.bf16.mxu0 0
      %467 = vmatpush1.bf16.xpose.msra.mxu0 %v464
      %468 = vmatprep.subr.bf16.mxu0 0
      %469 = vmatpush1.bf16.xpose.msra.mxu0 0
      %470 = vmatprep.subr.bf16.mxu0 0
      %471 = vmatpush1.bf16.xpose.msra.mxu0 0
      %472 = vmatprep.subr.bf16.mxu0 0
      %473 = vmatpush1.bf16.xpose.msra.mxu0 0
      %474 = vmatprep.subr.bf16.mxu0 0
      %475 = vmatpush1.bf16.xpose.msra.mxu0 0
      %476 = vmatprep.subr.bf16.mxu0 0
      %477 = vmatpush1.bf16.xpose.msra.mxu0 0
      %478 = vmatprep.subr.bf16.mxu0 0
      %479 = vmatpush1.bf16.xpose.msra.mxu0 0
      %480 = vmatprep.subr.bf16.mxu0 0
      %481 = vmatpush1.bf16.xpose.msra.mxu0 0
      %482 = vmatprep.subr.bf16.mxu0 0
      %483 = vmatpush1.bf16.xpose.msra.mxu0 0
      %484 = vmatprep.subr.bf16.mxu0 0
      %485 = vmatpush1.bf16.xpose.msra.mxu0 0
      %486 = vmatprep.subr.bf16.mxu0 0
      %487 = vmatpush1.bf16.xpose.msra.mxu0 0
      %488 = vmatprep.subr.bf16.mxu0 0
      %489 = vmatpush1.bf16.xpose.msra.mxu0 0
      %490 = vmatprep.subr.bf16.mxu0 0
      %491 = vmatpush1.bf16.xpose.msra.mxu0 0
      %492 = vmatprep.subr.bf16.mxu0 0
      %493 = vmatpush1.bf16.xpose.msra.mxu0 0
      %494 = vmatprep.subr.bf16.mxu0 0
      %495 = vmatpush1.bf16.xpose.msra.mxu0 0
      %496 = vmatprep.subr.bf16.mxu0 0
      %497 = vmatpush1.bf16.xpose.msra.mxu0 0
      %498 = vmatprep.mubr.bf16.mxu0 0
      %499 = vmatmul.mubr.bf16.gmra.mrb[0].mxu0 %v461
      %v500 = vpop.f32.mrb[0].mxu0
      %v501 = vadd.f32 %v365, %v500
      %v502 = vpop.f32.mrb[0].mxu0
      %v503 = vpop.f32.mrb[0].mxu0
      %v504 = vpop.f32.mrb[0].mxu0
      %505 = vdwg.mxu0
      %v507 = vsel %vm367, %v349, 0
      %v510 = vsel %vm367, %v357, 0
      %512 = vmatprep.subr.bf16.mxu0 0
      %513 = vmatpush1.bf16.xpose.msra.mxu0 %v510
      %514 = vmatprep.subr.bf16.mxu0 0
      %515 = vmatpush1.bf16.xpose.msra.mxu0 0
      %516 = vmatprep.subr.bf16.mxu0 0
      %517 = vmatpush1.bf16.xpose.msra.mxu0 0
      %518 = vmatprep.subr.bf16.mxu0 0
      %519 = vmatpush1.bf16.xpose.msra.mxu0 0
      %520 = vmatprep.subr.bf16.mxu0 0
      %521 = vmatpush1.bf16.xpose.msra.mxu0 0
      %522 = vmatprep.subr.bf16.mxu0 0
      %523 = vmatpush1.bf16.xpose.msra.mxu0 0
      %524 = vmatprep.subr.bf16.mxu0 0
      %525 = vmatpush1.bf16.xpose.msra.mxu0 0
      %526 = vmatprep.subr.bf16.mxu0 0
      %527 = vmatpush1.bf16.xpose.msra.mxu0 0
      %528 = vmatprep.subr.bf16.mxu0 0
      %529 = vmatpush1.bf16.xpose.msra.mxu0 0
      %530 = vmatprep.subr.bf16.mxu0 0
      %531 = vmatpush1.bf16.xpose.msra.mxu0 0
      %532 = vmatprep.subr.bf16.mxu0 0
      %533 = vmatpush1.bf16.xpose.msra.mxu0 0
      %534 = vmatprep.subr.bf16.mxu0 0
      %535 = vmatpush1.bf16.xpose.msra.mxu0 0
      %536 = vmatprep.subr.bf16.mxu0 0
      %537 = vmatpush1.bf16.xpose.msra.mxu0 0
      %538 = vmatprep.subr.bf16.mxu0 0
      %539 = vmatpush1.bf16.xpose.msra.mxu0 0
      %540 = vmatprep.subr.bf16.mxu0 0
      %541 = vmatpush1.bf16.xpose.msra.mxu0 0
      %542 = vmatprep.subr.bf16.mxu0 0
      %543 = vmatpush1.bf16.xpose.msra.mxu0 0
      %544 = vmatprep.mubr.bf16.mxu0 0
      %545 = vmatmul.mubr.bf16.gmra.mrb[0].mxu0 %v507
      %v546 = vpop.f32.mrb[0].mxu0
      %v547 = vadd.f32 %v365, %v546
      %v548 = vpop.f32.mrb[0].mxu0
      %v549 = vpop.f32.mrb[0].mxu0
      %v550 = vpop.f32.mrb[0].mxu0
      %551 = vdwg.mxu0
      %v552 = vld [vmem:[#allocation2] sm:$0xff]
      %v553 = vld [vmem:[#allocation2 + $0x8] sm:$0xff]
      %v554 = vld [vmem:[#allocation2 + $0x10] sm:$0xff]
      %v555 = vld [vmem:[#allocation2 + $0x18] sm:$0xff]
      %v556 = vsel %vm367, %v409, -inf
      %557 = vmax.xlane.f32.xlu0 %v556
      %v558 = vpop.xlane.xlu0 %557
      %v559 = vsel %vm367, %v455, -inf
      %560 = vmax.xlane.f32.xlu0 %v559
      %v561 = vpop.xlane.xlu0 %560
      %v562 = vsel %vm367, %v501, -inf
      %563 = vmax.xlane.f32.xlu0 %v562
      %v564 = vpop.xlane.xlu0 %563
      %v565 = vsel %vm367, %v547, -inf
      %566 = vmax.xlane.f32.xlu0 %v565
      %v567 = vpop.xlane.xlu0 %566
      %v568 = vmax.f32 %v552, %v558
      %v569 = vmax.f32 %v553, %v561
      %v570 = vmax.f32 %v554, %v564
      %v571 = vmax.f32 %v555, %v567
      %v572 = vsub.f32 %v552, %v568
      %v573 = vsub.f32 %v553, %v569
      %v574 = vsub.f32 %v554, %v570
      %v575 = vsub.f32 %v555, %v571
      %v576 = vmul.f32 %v572, 1.442695
      %v577 = vpow.pop %v576
      %v578 = vmul.f32 %v573, 1.442695
      %v579 = vpow.pop %v578
      %v580 = vmul.f32 %v574, 1.442695
      %v581 = vpow.pop %v580
      %v582 = vmul.f32 %v575, 1.442695
      %v583 = vpow.pop %v582
      %585 = vset.pattern.permute.xlu0 0
      %586 = vperm.xlu0 %585, %v568
      %v587 = vpop.permute.xlu0 %586
      %590 = vset.pattern.permute.xlu0 0
      %591 = vperm.xlu0 %590, %v569
      %v592 = vpop.permute.xlu0 %591
      %595 = vset.pattern.permute.xlu0 0
      %596 = vperm.xlu0 %595, %v570
      %v597 = vpop.permute.xlu0 %596
      %600 = vset.pattern.permute.xlu0 0
      %601 = vperm.xlu0 %600, %v571
      %v602 = vpop.permute.xlu0 %601
      %v604 = vsub.f32 %v409, %v587
      %v605 = vsub.f32 %v455, %v592
      %v606 = vsub.f32 %v501, %v597
      %v607 = vsub.f32 %v547, %v602
      %v608 = vmul.f32 %v604, 1.442695
      %v609 = vpow.pop %v608
      %v610 = vmul.f32 %v605, 1.442695
      %v611 = vpow.pop %v610
      %v612 = vmul.f32 %v606, 1.442695
      %v613 = vpow.pop %v612
      %v614 = vmul.f32 %v607, 1.442695
      %v615 = vpow.pop %v614
      %v616 = vld [vmem:[#allocation3] sm:$0xff]
      %v617 = vld [vmem:[#allocation3 + $0x8] sm:$0xff]
      %v618 = vld [vmem:[#allocation3 + $0x10] sm:$0xff]
      %v619 = vld [vmem:[#allocation3 + $0x18] sm:$0xff]
      %v620 = vmul.f32 %v577, %v616
      %v621 = vmul.f32 %v579, %v617
      %v622 = vmul.f32 %v581, %v618
      %v623 = vmul.f32 %v583, %v619
      %v624 = vsel %vm367, %v609, 0.0
      %625 = vadd.xlane.f32.xlu0 %v624
      %v626 = vpop.xlane.xlu0 %625
      %v627 = vsel %vm367, %v611, 0.0
      %628 = vadd.xlane.f32.xlu0 %v627
      %v629 = vpop.xlane.xlu0 %628
      %v630 = vsel %vm367, %v613, 0.0
      %631 = vadd.xlane.f32.xlu0 %v630
      %v632 = vpop.xlane.xlu0 %631
      %v633 = vsel %vm367, %v615, 0.0
      %634 = vadd.xlane.f32.xlu0 %v633
      %v635 = vpop.xlane.xlu0 %634
      %v636 = vadd.f32 %v620, %v626
      %v637 = vadd.f32 %v621, %v629
      %v638 = vadd.f32 %v622, %v632
      %v639 = vadd.f32 %v623, %v635
      %vm640 = vcmask 7168
      %641 = vst.msk [vmem:[#allocation3] sm:$0xff] %vm640, %v636
      %642 = vst.msk [vmem:[#allocation3 + $0x8] sm:$0xff] %vm640, %v637
      %643 = vst.msk [vmem:[#allocation3 + $0x10] sm:$0xff] %vm640, %v638
      %644 = vst.msk [vmem:[#allocation3 + $0x18] sm:$0xff] %vm640, %v639
      %v645 = vpack.c.bf16 %v609, %v609
      %v646 = vpack.c.bf16 %v611, %v611
      %v647 = vpack.c.bf16 %v613, %v613
      %v648 = vpack.c.bf16 %v615, %v615
      %v649 = vld [vmem:[%s314] sm:$0xff]
      %v650 = vld [vmem:[%s314 + $0x8] sm:$0xff]
      %v651 = vld [vmem:[%s314 + $0x10] sm:$0xff]
      %v652 = vld [vmem:[%s314 + $0x18] sm:$0xff]
      %v653 = vpack.c.bf16 %v649, %v649
      %v654 = vpack.c.bf16 %v650, %v650
      %v655 = vpack.c.bf16 %v651, %v651
      %v656 = vpack.c.bf16 %v652, %v652
      %v658 = vsel %vm367, %v645, 0
      %vm660 = vcmask 1043456
      %v662 = vsel %vm660, %v653, 0
      %664 = vmatprep.subr.bf16.mxu0 0
      %665 = vmatpush1.bf16.msra.mxu0 %v662
      %666 = vmatprep.subr.bf16.mxu0 0
      %667 = vmatpush1.bf16.msra.mxu0 0
      %668 = vmatprep.subr.bf16.mxu0 0
      %669 = vmatpush1.bf16.msra.mxu0 0
      %670 = vmatprep.subr.bf16.mxu0 0
      %671 = vmatpush1.bf16.msra.mxu0 0
      %672 = vmatprep.subr.bf16.mxu0 0
      %673 = vmatpush1.bf16.msra.mxu0 0
      %674 = vmatprep.subr.bf16.mxu0 0
      %675 = vmatpush1.bf16.msra.mxu0 0
      %676 = vmatprep.subr.bf16.mxu0 0
      %677 = vmatpush1.bf16.msra.mxu0 0
      %678 = vmatprep.subr.bf16.mxu0 0
      %679 = vmatpush1.bf16.msra.mxu0 0
      %680 = vmatprep.subr.bf16.mxu0 0
      %681 = vmatpush1.bf16.msra.mxu0 0
      %682 = vmatprep.subr.bf16.mxu0 0
      %683 = vmatpush1.bf16.msra.mxu0 0
      %684 = vmatprep.subr.bf16.mxu0 0
      %685 = vmatpush1.bf16.msra.mxu0 0
      %686 = vmatprep.subr.bf16.mxu0 0
      %687 = vmatpush1.bf16.msra.mxu0 0
      %688 = vmatprep.subr.bf16.mxu0 0
      %689 = vmatpush1.bf16.msra.mxu0 0
      %690 = vmatprep.subr.bf16.mxu0 0
      %691 = vmatpush1.bf16.msra.mxu0 0
      %692 = vmatprep.subr.bf16.mxu0 0
      %693 = vmatpush1.bf16.msra.mxu0 0
      %694 = vmatprep.subr.bf16.mxu0 0
      %695 = vmatpush1.bf16.msra.mxu0 0
      %696 = vmatprep.mubr.bf16.mxu0 0
      %697 = vmatmul.mubr.bf16.gmra.mrb[0].mxu0 %v658
      %v698 = vpop.f32.mrb[0].mxu0
      %v699 = vadd.f32 0.0, %v698
      %v700 = vpop.f32.mrb[0].mxu0
      %v701 = vpop.f32.mrb[0].mxu0
      %v702 = vpop.f32.mrb[0].mxu0
      %703 = vdwg.mxu0
      %v705 = vsel %vm367, %v646, 0
      %v708 = vsel %vm660, %v654, 0
      %710 = vmatprep.subr.bf16.mxu0 0
      %711 = vmatpush1.bf16.msra.mxu0 %v708
      %712 = vmatprep.subr.bf16.mxu0 0
      %713 = vmatpush1.bf16.msra.mxu0 0
      %714 = vmatprep.subr.bf16.mxu0 0
      %715 = vmatpush1.bf16.msra.mxu0 0
      %716 = vmatprep.subr.bf16.mxu0 0
      %717 = vmatpush1.bf16.msra.mxu0 0
      %718 = vmatprep.subr.bf16.mxu0 0
      %719 = vmatpush1.bf16.msra.mxu0 0
      %720 = vmatprep.subr.bf16.mxu0 0
      %721 = vmatpush1.bf16.msra.mxu0 0
      %722 = vmatprep.subr.bf16.mxu0 0
      %723 = vmatpush1.bf16.msra.mxu0 0
      %724 = vmatprep.subr.bf16.mxu0 0
      %725 = vmatpush1.bf16.msra.mxu0 0
      %726 = vmatprep.subr.bf16.mxu0 0
      %727 = vmatpush1.bf16.msra.mxu0 0
      %728 = vmatprep.subr.bf16.mxu0 0
      %729 = vmatpush1.bf16.msra.mxu0 0
      %730 = vmatprep.subr.bf16.mxu0 0
      %731 = vmatpush1.bf16.msra.mxu0 0
      %732 = vmatprep.subr.bf16.mxu0 0
      %733 = vmatpush1.bf16.msra.mxu0 0
      %734 = vmatprep.subr.bf16.mxu0 0
      %735 = vmatpush1.bf16.msra.mxu0 0
      %736 = vmatprep.subr.bf16.mxu0 0
      %737 = vmatpush1.bf16.msra.mxu0 0
      %738 = vmatprep.subr.bf16.mxu0 0
      %739 = vmatpush1.bf16.msra.mxu0 0
      %740 = vmatprep.subr.bf16.mxu0 0
      %741 = vmatpush1.bf16.msra.mxu0 0
      %742 = vmatprep.mubr.bf16.mxu0 0
      %743 = vmatmul.mubr.bf16.gmra.mrb[0].mxu0 %v705
      %v744 = vpop.f32.mrb[0].mxu0
      %v745 = vadd.f32 0.0, %v744
      %v746 = vpop.f32.mrb[0].mxu0
      %v747 = vpop.f32.mrb[0].mxu0
      %v748 = vpop.f32.mrb[0].mxu0
      %749 = vdwg.mxu0
      %v751 = vsel %vm367, %v647, 0
      %v754 = vsel %vm660, %v655, 0
      %756 = vmatprep.subr.bf16.mxu0 0
      %757 = vmatpush1.bf16.msra.mxu0 %v754
      %758 = vmatprep.subr.bf16.mxu0 0
      %759 = vmatpush1.bf16.msra.mxu0 0
      %760 = vmatprep.subr.bf16.mxu0 0
      %761 = vmatpush1.bf16.msra.mxu0 0
      %762 = vmatprep.subr.bf16.mxu0 0
      %763 = vmatpush1.bf16.msra.mxu0 0
      %764 = vmatprep.subr.bf16.mxu0 0
      %765 = vmatpush1.bf16.msra.mxu0 0
      %766 = vmatprep.subr.bf16.mxu0 0
      %767 = vmatpush1.bf16.msra.mxu0 0
      %768 = vmatprep.subr.bf16.mxu0 0
      %769 = vmatpush1.bf16.msra.mxu0 0
      %770 = vmatprep.subr.bf16.mxu0 0
      %771 = vmatpush1.bf16.msra.mxu0 0
      %772 = vmatprep.subr.bf16.mxu0 0
      %773 = vmatpush1.bf16.msra.mxu0 0
      %774 = vmatprep.subr.bf16.mxu0 0
      %775 = vmatpush1.bf16.msra.mxu0 0
      %776 = vmatprep.subr.bf16.mxu0 0
      %777 = vmatpush1.bf16.msra.mxu0 0
      %778 = vmatprep.subr.bf16.mxu0 0
      %779 = vmatpush1.bf16.msra.mxu0 0
      %780 = vmatprep.subr.bf16.mxu0 0
      %781 = vmatpush1.bf16.msra.mxu0 0
      %782 = vmatprep.subr.bf16.mxu0 0
      %783 = vmatpush1.bf16.msra.mxu0 0
      %784 = vmatprep.subr.bf16.mxu0 0
      %785 = vmatpush1.bf16.msra.mxu0 0
      %786 = vmatprep.subr.bf16.mxu0 0
      %787 = vmatpush1.bf16.msra.mxu0 0
      %788 = vmatprep.mubr.bf16.mxu0 0
      %789 = vmatmul.mubr.bf16.gmra.mrb[0].mxu0 %v751
      %v790 = vpop.f32.mrb[0].mxu0
      %v791 = vadd.f32 0.0, %v790
      %v792 = vpop.f32.mrb[0].mxu0
      %v793 = vpop.f32.mrb[0].mxu0
      %v794 = vpop.f32.mrb[0].mxu0
      %795 = vdwg.mxu0
      %v797 = vsel %vm367, %v648, 0
      %v800 = vsel %vm660, %v656, 0
      %802 = vmatprep.subr.bf16.mxu0 0
      %803 = vmatpush1.bf16.msra.mxu0 %v800
      %804 = vmatprep.subr.bf16.mxu0 0
      %805 = vmatpush1.bf16.msra.mxu0 0
      %806 = vmatprep.subr.bf16.mxu0 0
      %807 = vmatpush1.bf16.msra.mxu0 0
      %808 = vmatprep.subr.bf16.mxu0 0
      %809 = vmatpush1.bf16.msra.mxu0 0
      %810 = vmatprep.subr.bf16.mxu0 0
      %811 = vmatpush1.bf16.msra.mxu0 0
      %812 = vmatprep.subr.bf16.mxu0 0
      %813 = vmatpush1.bf16.msra.mxu0 0
      %814 = vmatprep.subr.bf16.mxu0 0
      %815 = vmatpush1.bf16.msra.mxu0 0
      %816 = vmatprep.subr.bf16.mxu0 0
      %817 = vmatpush1.bf16.msra.mxu0 0
      %818 = vmatprep.subr.bf16.mxu0 0
      %819 = vmatpush1.bf16.msra.mxu0 0
      %820 = vmatprep.subr.bf16.mxu0 0
      %821 = vmatpush1.bf16.msra.mxu0 0
      %822 = vmatprep.subr.bf16.mxu0 0
      %823 = vmatpush1.bf16.msra.mxu0 0
      %824 = vmatprep.subr.bf16.mxu0 0
      %825 = vmatpush1.bf16.msra.mxu0 0
      %826 = vmatprep.subr.bf16.mxu0 0
      %827 = vmatpush1.bf16.msra.mxu0 0
      %828 = vmatprep.subr.bf16.mxu0 0
      %829 = vmatpush1.bf16.msra.mxu0 0
      %830 = vmatprep.subr.bf16.mxu0 0
      %831 = vmatpush1.bf16.msra.mxu0 0
      %832 = vmatprep.subr.bf16.mxu0 0
      %833 = vmatpush1.bf16.msra.mxu0 0
      %834 = vmatprep.mubr.bf16.mxu0 0
      %835 = vmatmul.mubr.bf16.gmra.mrb[0].mxu0 %v797
      %v836 = vpop.f32.mrb[0].mxu0
      %v837 = vadd.f32 0.0, %v836
      %v838 = vpop.f32.mrb[0].mxu0
      %v839 = vpop.f32.mrb[0].mxu0
      %v840 = vpop.f32.mrb[0].mxu0
      %841 = vdwg.mxu0
      %v842 = vld [vmem:[#allocation4] sm:$0xff]
      %v843 = vld [vmem:[#allocation4 + $0x8] sm:$0xff]
      %v844 = vld [vmem:[#allocation4 + $0x10] sm:$0xff]
      %v845 = vld [vmem:[#allocation4 + $0x18] sm:$0xff]
      %847 = vset.pattern.permute.xlu0 0
      %848 = vperm.xlu0 %847, %v577
      %v849 = vpop.permute.xlu0 %848
      %852 = vset.pattern.permute.xlu0 0
      %853 = vperm.xlu0 %852, %v579
      %v854 = vpop.permute.xlu0 %853
      %857 = vset.pattern.permute.xlu0 0
      %858 = vperm.xlu0 %857, %v581
      %v859 = vpop.permute.xlu0 %858
      %862 = vset.pattern.permute.xlu0 0
      %863 = vperm.xlu0 %862, %v583
      %v864 = vpop.permute.xlu0 %863
      %v866 = vmul.f32 %v849, %v842
      %v867 = vmul.f32 %v854, %v843
      %v868 = vmul.f32 %v859, %v844
      %v869 = vmul.f32 %v864, %v845
      %v870 = vadd.f32 %v866, %v699
      %v871 = vadd.f32 %v867, %v745
      %v872 = vadd.f32 %v868, %v791
      %v873 = vadd.f32 %v869, %v837
      %874 = vst.msk [vmem:[#allocation4] sm:$0xff] %vm367, %v870
      %875 = vst.msk [vmem:[#allocation4 + $0x8] sm:$0xff] %vm367, %v871
      %876 = vst.msk [vmem:[#allocation4 + $0x10] sm:$0xff] %vm367, %v872
      %877 = vst.msk [vmem:[#allocation4 + $0x18] sm:$0xff] %vm367, %v873
      %878 = vst.msk [vmem:[#allocation2] sm:$0xff] %vm640, %v568
      %879 = vst.msk [vmem:[#allocation2 + $0x8] sm:$0xff] %vm640, %v569
      %880 = vst.msk [vmem:[#allocation2 + $0x10] sm:$0xff] %vm640, %v570
      %881 = vst.msk [vmem:[#allocation2 + $0x18] sm:$0xff] %vm640, %v571
      // Predicated region
      $region41: #{transformer_forward.89} parent=35 // pred_check
        %p882 = pneg %p324
      $region42: #{transformer_forward.89} parent=35 // pred_check_branch
        %884 = sbr.rel (%p882) target = $region44
      $region43: #{transformer_forward.89} parent=35 // pred_region
        %v885 = vld [vmem:[#allocation3] sm:$0xff]
        %v886 = vld [vmem:[#allocation3 + $0x8] sm:$0xff]
        %v887 = vld [vmem:[#allocation3 + $0x10] sm:$0xff]
        %v888 = vld [vmem:[#allocation3 + $0x18] sm:$0xff]
        %v889 = vmax.f32 %v885, 1e-30
        %v890 = vmax.f32 %v886, 1e-30
        %v891 = vmax.f32 %v887, 1e-30
        %v892 = vmax.f32 %v888, 1e-30
        %v893 = vld [vmem:[#allocation4] sm:$0xff]
        %v894 = vld [vmem:[#allocation4 + $0x8] sm:$0xff]
        %v895 = vld [vmem:[#allocation4 + $0x10] sm:$0xff]
        %v896 = vld [vmem:[#allocation4 + $0x18] sm:$0xff]
        %v897 = vrcp.pop %v889
        %v898 = vrcp.pop %v890
        %v899 = vrcp.pop %v891
        %v900 = vrcp.pop %v892
        %902 = vset.pattern.permute.xlu0 0
        %903 = vperm.xlu0 %902, %v897
        %v904 = vpop.permute.xlu0 %903
        %907 = vset.pattern.permute.xlu0 0
        %908 = vperm.xlu0 %907, %v898
        %v909 = vpop.permute.xlu0 %908
        %912 = vset.pattern.permute.xlu0 0
        %913 = vperm.xlu0 %912, %v899
        %v914 = vpop.permute.xlu0 %913
        %917 = vset.pattern.permute.xlu0 0
        %918 = vperm.xlu0 %917, %v900
        %v919 = vpop.permute.xlu0 %918
        %v921 = vmul.f32 %v893, %v904
        %v922 = vmul.f32 %v894, %v909
        %v923 = vmul.f32 %v895, %v914
        %v924 = vmul.f32 %v896, %v919
        %925 = vst.msk [vmem:[%s322] sm:$0xff] %vm367, %v921
        %926 = vst.msk [vmem:[%s322 + $0x8] sm:$0xff] %vm367, %v922
        %927 = vst.msk [vmem:[%s322 + $0x10] sm:$0xff] %vm367, %v923
        %928 = vst.msk [vmem:[%s322 + $0x18] sm:$0xff] %vm367, %v924
      $region44: #{transformer_forward.89} parent=35 // pred_fallthru
        _
      %p929 = scmp.lt.s32.totalorder %s20, 1
      %s930 = scalar_select %p929, %s20, 1
      %p931 = scmp.lt.s32.totalorder %s21, 0
      %s932 = scalar_select %p931, %s21, 0
      %s933 = smul.addr %s930, 4
      %s934 = sadd.s32 %s932, %s933
      %s935 = smul.addr %s934, 8
      %s936 = scalar_lea.vmem %s4, %s935
      // Predicated region
      $region45: #{transformer_forward.89} parent=35 // pred_check
        %p937 = pneg %p166
      $region46: #{transformer_forward.89} parent=35 // pred_check_branch
        %939 = sbr.rel (%p937) target = $region48
      $region47: #{transformer_forward.89} parent=35 // pred_region
        _
      $region48: #{transformer_forward.89} parent=35 // pred_fallthru
        _
    $region36: #{transformer_forward.89} parent=5 // pred_fallthru
      _
    %p940 = scmp.le.s32.totalorder 2, %s10
    // Predicated region
    $region49: #{transformer_forward.89} parent=5 // pred_check
      %p941 = pneg %p940
    $region50: #{transformer_forward.89} parent=5 // pred_check_branch
      %943 = sbr.rel (%p941) target = $region52
    $region51: #{transformer_forward.89} parent=5 // pred_region
      %s944 = ssub.s32 %s10, 2
      // Predicated region
      $region53: #{transformer_forward.89} parent=51 // pred_check
        %p945 = pneg %p172
      $region54: #{transformer_forward.89} parent=51 // pred_check_branch
        %947 = sbr.rel (%p945) target = $region56
      $region55: #{transformer_forward.89} parent=51 // pred_region
        %p948 = scmp.lt.s32.totalorder %s23, 1
        %s949 = scalar_select %p948, %s23, 1
        %p950 = scmp.lt.s32.totalorder %s24, 0
        %s951 = scalar_select %p950, %s24, 0
        %s952 = smul.addr %s949, 4
        %s953 = sadd.s32 %s951, %s952
        %s954 = smul.addr %s953, 8
        %s955 = scalar_lea.vmem %s4, %s954
      $region56: #{transformer_forward.89} parent=51 // pred_fallthru
        _
    $region52: #{transformer_forward.89} parent=5 // pred_fallthru
      _
  $region6: #{transformer_forward.89} parent=0 // loop_footer
    %s14 = sadd.s32 1, %s10
  $region7: #{transformer_forward.89} parent=0 // loop_footer_branch
    %9 = sbr.rel target = $region3
  $region8: #{transformer_forward.89} parent=0 // loop_exit
    _

// kernel: transformer_forward.91
$region0: #{transformer_forward.91}
  #allocation0 [shape = 'u32[]', space=smem, size = 0x4, offset = 0x4, fixed_abs, tag = 'smem constant byte address 0x4 - core index']
  #allocation1 [shape = 'u32[144,128]{1,0:T(1,128)}', space=vmem, size = 0x12000, scoped, tag = 'internal scratch']
  %s0 = inlined_call_operand.vmem [shape: f32[16,32], index: 0, kind: input, shape index: {}]
  %s1 = inlined_call_operand.vmem [shape: f32[16,32], index: 1, kind: input, shape index: {}]
  %s2 = inlined_call_operand.vmem [shape: f32[1,32], index: 2, kind: input, shape index: {}]
  %s3 = inlined_call_operand.vmem [shape: f32[1,32], index: 3, kind: input, shape index: {}]
  %s4 = inlined_call_operand.vmem [shape: f32[16,32], index: 4, kind: output, shape index: {}]
  %s5 = sld [smem:[#allocation0]]
  $region26: #{transformer_forward.91} parent=0
    _
  %s7 = ssub.s32 1, %s5
  %s8 = scalar_select 0, %s7, %s5
  // Predicated region
  $region2: #{transformer_forward.91} parent=0 // pred_check
    _
  $region3: #{transformer_forward.91} parent=0 // pred_check_branch
    %10 = sbr.rel (0) target = $region5
  $region4: #{transformer_forward.91} parent=0 // pred_region
    _
  $region5: #{transformer_forward.91} parent=0 // pred_fallthru
    _
  // Predicated region
  $region6: #{transformer_forward.91} parent=0 // pred_check
    _
  $region7: #{transformer_forward.91} parent=0 // pred_check_branch
    %12 = sbr.rel (0) target = $region9
  $region8: #{transformer_forward.91} parent=0 // pred_region
    _
  $region9: #{transformer_forward.91} parent=0 // pred_fallthru
    _
  // Predicated region
  $region10: #{transformer_forward.91} parent=0 // pred_check
    _
  $region11: #{transformer_forward.91} parent=0 // pred_check_branch
    %14 = sbr.rel (0) target = $region13
  $region12: #{transformer_forward.91} parent=0 // pred_region
    _
  $region13: #{transformer_forward.91} parent=0 // pred_fallthru
    _
  // Predicated region
  $region14: #{transformer_forward.91} parent=0 // pred_check
    _
  $region15: #{transformer_forward.91} parent=0 // pred_check_branch
    %16 = sbr.rel (0) target = $region17
  $region16: #{transformer_forward.91} parent=0 // pred_region
    _
  $region17: #{transformer_forward.91} parent=0 // pred_fallthru
    _
  %v17 = vld [vmem:[%s0] sm:$0xff]
  %v18 = vld [vmem:[%s0 + $0x8] sm:$0xff]
  %v19 = vld [vmem:[%s1] sm:$0xff]
  %v20 = vld [vmem:[%s1 + $0x8] sm:$0xff]
  %v21 = vadd.f32 %v17, %v19
  %v22 = vadd.f32 %v18, %v20
  %vm23 = vcmask 261120
  %v24 = vsel %vm23, %v21, 0.0
  %25 = vadd.xlane.f32.xlu0 %v24
  %v26 = vpop.xlane.xlu0 %25
  %v27 = vsel %vm23, %v22, 0.0
  %28 = vadd.xlane.f32.xlu0 %v27
  %v29 = vpop.xlane.xlu0 %28
  %v30 = vrcp.pop 32.0
  %v31 = vmul.f32 %v26, %v30
  %v32 = vmul.f32 %v29, %v30
  %v33 = vsub.f32 %v21, %v31
  %v34 = vsub.f32 %v22, %v32
  %v35 = vmul.f32 %v33, %v33
  %v36 = vmul.f32 %v34, %v34
  %v37 = vsel %vm23, %v35, 0.0
  %38 = vadd.xlane.f32.xlu0 %v37
  %v39 = vpop.xlane.xlu0 %38
  %v40 = vsel %vm23, %v36, 0.0
  %41 = vadd.xlane.f32.xlu0 %v40
  %v42 = vpop.xlane.xlu0 %41
  %v43 = vmul.f32 %v39, %v30
  %v44 = vmul.f32 %v42, %v30
  %v45 = vadd.f32 %v43, 1e-05
  %v46 = vadd.f32 %v44, 1e-05
  %v47 = vrsqrt.pop %v45
  %v48 = vrsqrt.pop %v46
  %v49 = vmul.f32 %v33, %v47
  %v50 = vmul.f32 %v34, %v48
  %v51 = vld [vmem:[%s2] sm:$0x1]
  %v53 = vlaneseq
  %v54 = vshrl.u32 %v53, 7
  %v55 = vsub.s32 0, %v54
  %v56 = vrot.slane %v51, %v55
  %v58 = vmul.f32 %v49, %v56
  %v59 = vmul.f32 %v50, %v56
  %v60 = vld [vmem:[%s3] sm:$0x1]
  %v62 = vlaneseq
  %v63 = vshrl.u32 %v62, 7
  %v64 = vsub.s32 0, %v63
  %v65 = vrot.slane %v60, %v64
  %v67 = vadd.f32 %v58, %v65
  %v68 = vadd.f32 %v59, %v65
  %69 = vst.msk [vmem:[%s4] sm:$0xff] %vm23, %v67
  %70 = vst.msk [vmem:[%s4 + $0x8] sm:$0xff] %vm23, %v68
  // Predicated region
  $region18: #{transformer_forward.91} parent=0 // pred_check
    _
  $region19: #{transformer_forward.91} parent=0 // pred_check_branch
    %72 = sbr.rel (0) target = $region21
  $region20: #{transformer_forward.91} parent=0 // pred_region
    _
  $region21: #{transformer_forward.91} parent=0 // pred_fallthru
    _
  // Predicated region
  $region22: #{transformer_forward.91} parent=0 // pred_check
    _
  $region23: #{transformer_forward.91} parent=0 // pred_check_branch
    %74 = sbr.rel (0) target = $region25
  $region24: #{transformer_forward.91} parent=0 // pred_region
    _
  $region25: #{transformer_forward.91} parent=0 // pred_fallthru
    _

// kernel: transformer_forward.70
$region0: #{transformer_forward.70}
  #allocation0 [shape = 'u32[]', space=smem, size = 0x4, offset = 0x4, fixed_abs, tag = 'smem constant byte address 0x4 - core index']
  #allocation1 [shape = 'u32[144,128]{1,0:T(1,128)}', space=vmem, size = 0x12000, scoped, tag = 'internal scratch']
  #allocation2 [shape = 'f32[16,128]{1,0:T(8,128)}', space=vmem, size = 0x2000, scoped, tag = 'scratch operand']
  %s0 = inlined_call_operand.vmem [shape: f32[16,64], index: 0, kind: input, shape index: {}]
  %s1 = inlined_call_operand.vmem [shape: f32[64,128], index: 1, kind: input, shape index: {}]
  %s2 = inlined_call_operand.vmem [shape: f32[1,128], index: 2, kind: input, shape index: {}]
  %s3 = inlined_call_operand.vmem [shape: f32[16,128], index: 3, kind: output, shape index: {}]
  %s4 = sld [smem:[#allocation0]]
  $region30: #{transformer_forward.70} parent=0
    _
  %s6 = ssub.s32 1, %s4
  %s7 = scalar_select 0, %s6, %s4
  // Predicated region
  $region2: #{transformer_forward.70} parent=0 // pred_check
    _
  $region3: #{transformer_forward.70} parent=0 // pred_check_branch
    %9 = sbr.rel (0) target = $region5
  $region4: #{transformer_forward.70} parent=0 // pred_region
    _
  $region5: #{transformer_forward.70} parent=0 // pred_fallthru
    _
  // Predicated region
  $region6: #{transformer_forward.70} parent=0 // pred_check
    _
  $region7: #{transformer_forward.70} parent=0 // pred_check_branch
    %11 = sbr.rel (0) target = $region9
  $region8: #{transformer_forward.70} parent=0 // pred_region
    _
  $region9: #{transformer_forward.70} parent=0 // pred_fallthru
    _
  // Predicated region
  $region10: #{transformer_forward.70} parent=0 // pred_check
    _
  $region11: #{transformer_forward.70} parent=0 // pred_check_branch
    %13 = sbr.rel (0) target = $region13
  $region12: #{transformer_forward.70} parent=0 // pred_region
    _
  $region13: #{transformer_forward.70} parent=0 // pred_fallthru
    _
  %p15 = scmp.eq.s32.totalorder 0, 0
  // Predicated region
  $region14: #{transformer_forward.70} parent=0 // pred_check
    %p16 = pneg %p15
  $region15: #{transformer_forward.70} parent=0 // pred_check_branch
    %18 = sbr.rel (%p16) target = $region17
  $region16: #{transformer_forward.70} parent=0 // pred_region
    %19 = vst [vmem:[#allocation2] sm:$0xff] 0.0
    %20 = vst [vmem:[#allocation2 + $0x8] sm:$0xff] 0.0
  $region17: #{transformer_forward.70} parent=0 // pred_fallthru
    _
  %v21 = vld [vmem:[#allocation2] sm:$0xff]
  %v22 = vld [vmem:[#allocation2 + $0x8] sm:$0xff]
  %v23 = vld [vmem:[%s0] sm:$0xff]
  %v24 = vld [vmem:[%s0 + $0x8] sm:$0xff]
  %v25 = vpack.c.bf16 %v24, %v23
  %v26 = vld [vmem:[%s1] sm:$0xff]
  %v27 = vld [vmem:[%s1 + $0x8] sm:$0xff]
  %v28 = vld [vmem:[%s1 + $0x10] sm:$0xff]
  %v29 = vld [vmem:[%s1 + $0x18] sm:$0xff]
  %v30 = vld [vmem:[%s1 + $0x20] sm:$0xff]
  %v31 = vld [vmem:[%s1 + $0x28] sm:$0xff]
  %v32 = vld [vmem:[%s1 + $0x30] sm:$0xff]
  %v33 = vld [vmem:[%s1 + $0x38] sm:$0xff]
  %v34 = vpack.c.bf16 %v27, %v26
  %v35 = vpack.c.bf16 %v29, %v28
  %v36 = vpack.c.bf16 %v31, %v30
  %v37 = vpack.c.bf16 %v33, %v32
  %vm38 = vcmask 523264
  %v40 = vsel %vm38, %v25, 0
  %42 = vmatprep.subr.bf16.mxu0 0
  %43 = vmatpush1.bf16.msra.mxu0 %v34
  %44 = vmatprep.subr.bf16.mxu0 0
  %45 = vmatpush1.bf16.msra.mxu0 %v35
  %46 = vmatprep.subr.bf16.mxu0 0
  %47 = vmatpush1.bf16.msra.mxu0 %v36
  %48 = vmatprep.subr.bf16.mxu0 0
  %49 = vmatpush1.bf16.msra.mxu0 %v37
  %50 = vmatprep.subr.bf16.mxu0 0
  %51 = vmatpush1.bf16.msra.mxu0 0
  %52 = vmatprep.subr.bf16.mxu0 0
  %53 = vmatpush1.bf16.msra.mxu0 0
  %54 = vmatprep.subr.bf16.mxu0 0
  %55 = vmatpush1.bf16.msra.mxu0 0
  %56 = vmatprep.subr.bf16.mxu0 0
  %57 = vmatpush1.bf16.msra.mxu0 0
  %58 = vmatprep.subr.bf16.mxu0 0
  %59 = vmatpush1.bf16.msra.mxu0 0
  %60 = vmatprep.subr.bf16.mxu0 0
  %61 = vmatpush1.bf16.msra.mxu0 0
  %62 = vmatprep.subr.bf16.mxu0 0
  %63 = vmatpush1.bf16.msra.mxu0 0
  %64 = vmatprep.subr.bf16.mxu0 0
  %65 = vmatpush1.bf16.msra.mxu0 0
  %66 = vmatprep.subr.bf16.mxu0 0
  %67 = vmatpush1.bf16.msra.mxu0 0
  %68 = vmatprep.subr.bf16.mxu0 0
  %69 = vmatpush1.bf16.msra.mxu0 0
  %70 = vmatprep.subr.bf16.mxu0 0
  %71 = vmatpush1.bf16.msra.mxu0 0
  %72 = vmatprep.subr.bf16.mxu0 0
  %73 = vmatpush1.bf16.msra.mxu0 0
  %74 = vmatprep.mubr.bf16.mxu0 0
  %75 = vmatmul.mubr.bf16.gmra.mrb[0].mxu0 %v40
  %v76 = vpop.f32.mrb[0].mxu0
  %v77 = vadd.f32 0.0, %v76
  %v78 = vpop.f32.mrb[0].mxu0
  %v79 = vpop.f32.mrb[0].mxu0
  %v80 = vadd.f32 0.0, %v79
  %v81 = vpop.f32.mrb[0].mxu0
  %82 = vdwg.mxu0
  %v83 = vadd.f32 %v21, %v77
  %v84 = vadd.f32 %v22, %v80
  %85 = vst [vmem:[#allocation2] sm:$0xff] %v83
  %86 = vst [vmem:[#allocation2 + $0x8] sm:$0xff] %v84
  // Predicated region
  $region18: #{transformer_forward.70} parent=0 // pred_check
    %p87 = pneg %p15
  $region19: #{transformer_forward.70} parent=0 // pred_check_branch
    %89 = sbr.rel (%p87) target = $region21
  $region20: #{transformer_forward.70} parent=0 // pred_region
    %v90 = vld [vmem:[#allocation2] sm:$0xff]
    %v91 = vld [vmem:[#allocation2 + $0x8] sm:$0xff]
    %v92 = vld [vmem:[%s2] sm:$0x1]
    %v94 = vlaneseq
    %v95 = vshrl.u32 %v94, 7
    %v96 = vsub.s32 0, %v95
    %v97 = vrot.slane %v92, %v96
    %v99 = vadd.f32 %v90, %v97
    %v100 = vadd.f32 %v91, %v97
    %101 = vst [vmem:[%s3] sm:$0xff] %v99
    %102 = vst [vmem:[%s3 + $0x8] sm:$0xff] %v100
  $region21: #{transformer_forward.70} parent=0 // pred_fallthru
    _
  // Predicated region
  $region22: #{transformer_forward.70} parent=0 // pred_check
    _
  $region23: #{transformer_forward.70} parent=0 // pred_check_branch
    %104 = sbr.rel (0) target = $region25
  $region24: #{transformer_forward.70} parent=0 // pred_region
    _
  $region25: #{transformer_forward.70} parent=0 // pred_fallthru
    _
  // Predicated region
  $region26: #{transformer_forward.70} parent=0 // pred_check
    _
  $region27: #{transformer_forward.70} parent=0 // pred_check_branch
    %106 = sbr.rel (0) target = $region29
  $region28: #{transformer_forward.70} parent=0 // pred_region
    _
  $region29: #{transformer_forward.70} parent=0 // pred_fallthru
    _

// kernel: transformer_forward.120
$region0: #{transformer_forward.120}
  #allocation0 [shape = 'u32[]', space=smem, size = 0x4, offset = 0x4, fixed_abs, tag = 'smem constant byte address 0x4 - core index']
  #allocation1 [shape = 'u32[144,128]{1,0:T(1,128)}', space=vmem, size = 0x12000, scoped, tag = 'internal scratch']
  %s0 = inlined_call_operand.vmem [shape: f32[16,32], index: 0, kind: input, shape index: {}]
  %s1 = inlined_call_operand.vmem [shape: f32[16,32], index: 1, kind: input, shape index: {}]
  %s2 = inlined_call_operand.vmem [shape: f32[1,32], index: 2, kind: input, shape index: {}]
  %s3 = inlined_call_operand.vmem [shape: f32[1,32], index: 3, kind: input, shape index: {}]
  %s4 = inlined_call_operand.hbm [shape: f32[16,32], index: 4, kind: output, shape index: {}]
  %s5 = sld [smem:[#allocation0]]
  $region26: #{transformer_forward.120} parent=0
    _
  %s7 = ssub.s32 1, %s5
  %s8 = scalar_select 0, %s7, %s5
  $region1: #{transformer_forward.120} parent=0
    #allocation2 [shape = 'u8[8192]{0}', space=vmem, size = 0x2000, scoped, tag = 'output window, operand 0, single buffered']
    #allocation3 [shape = 's32[1]{0}', space=sflag, size = 0x4, scoped, tag = 'scoped memory for transformer_forward.120']
    %9 = vsyncpa [#allocation3], 0
    // Predicated region
    $region2: #{transformer_forward.120} parent=1 // pred_check
      _
    $region3: #{transformer_forward.120} parent=1 // pred_check_branch
      %11 = sbr.rel (0) target = $region5
    $region4: #{transformer_forward.120} parent=1 // pred_region
      _
    $region5: #{transformer_forward.120} parent=1 // pred_fallthru
      _
    // Predicated region
    $region6: #{transformer_forward.120} parent=1 // pred_check
      _
    $region7: #{transformer_forward.120} parent=1 // pred_check_branch
      %13 = sbr.rel (0) target = $region9
    $region8: #{transformer_forward.120} parent=1 // pred_region
      _
    $region9: #{transformer_forward.120} parent=1 // pred_fallthru
      _
    // Predicated region
    $region10: #{transformer_forward.120} parent=1 // pred_check
      _
    $region11: #{transformer_forward.120} parent=1 // pred_check_branch
      %15 = sbr.rel (0) target = $region13
    $region12: #{transformer_forward.120} parent=1 // pred_region
      _
    $region13: #{transformer_forward.120} parent=1 // pred_fallthru
      _
    // Predicated region
    $region14: #{transformer_forward.120} parent=1 // pred_check
      _
    $region15: #{transformer_forward.120} parent=1 // pred_check_branch
      %17 = sbr.rel (0) target = $region17
    $region16: #{transformer_forward.120} parent=1 // pred_region
      _
    $region17: #{transformer_forward.120} parent=1 // pred_fallthru
      _
    %v18 = vld [vmem:[%s0] sm:$0xff]
    %v19 = vld [vmem:[%s0 + $0x8] sm:$0xff]
    %v20 = vld [vmem:[%s1] sm:$0xff]
    %v21 = vld [vmem:[%s1 + $0x8] sm:$0xff]
    %v22 = vadd.f32 %v18, %v20
    %v23 = vadd.f32 %v19, %v21
    %vm24 = vcmask 261120
    %v25 = vsel %vm24, %v22, 0.0
    %26 = vadd.xlane.f32.xlu0 %v25
    %v27 = vpop.xlane.xlu0 %26
    %v28 = vsel %vm24, %v23, 0.0
    %29 = vadd.xlane.f32.xlu0 %v28
    %v30 = vpop.xlane.xlu0 %29
    %v31 = vrcp.pop 32.0
    %v32 = vmul.f32 %v27, %v31
    %v33 = vmul.f32 %v30, %v31
    %v34 = vsub.f32 %v22, %v32
    %v35 = vsub.f32 %v23, %v33
    %v36 = vmul.f32 %v34, %v34
    %v37 = vmul.f32 %v35, %v35
    %v38 = vsel %vm24, %v36, 0.0
    %39 = vadd.xlane.f32.xlu0 %v38
    %v40 = vpop.xlane.xlu0 %39
    %v41 = vsel %vm24, %v37, 0.0
    %42 = vadd.xlane.f32.xlu0 %v41
    %v43 = vpop.xlane.xlu0 %42
    %v44 = vmul.f32 %v40, %v31
    %v45 = vmul.f32 %v43, %v31
    %v46 = vadd.f32 %v44, 1e-05
    %v47 = vadd.f32 %v45, 1e-05
    %v48 = vrsqrt.pop %v46
    %v49 = vrsqrt.pop %v47
    %v50 = vmul.f32 %v34, %v48
    %v51 = vmul.f32 %v35, %v49
    %v52 = vld [vmem:[%s2] sm:$0x1]
    %v54 = vlaneseq
    %v55 = vshrl.u32 %v54, 7
    %v56 = vsub.s32 0, %v55
    %v57 = vrot.slane %v52, %v56
    %v59 = vmul.f32 %v50, %v57
    %v60 = vmul.f32 %v51, %v57
    %v61 = vld [vmem:[%s3] sm:$0x1]
    %v63 = vlaneseq
    %v64 = vshrl.u32 %v63, 7
    %v65 = vsub.s32 0, %v64
    %v66 = vrot.slane %v61, %v65
    %v68 = vadd.f32 %v59, %v66
    %v69 = vadd.f32 %v60, %v66
    %70 = vst.msk [vmem:[#allocation2] sm:$0xff] %vm24, %v68
    %71 = vst.msk [vmem:[#allocation2 + $0x8] sm:$0xff] %vm24, %v69
    // Predicated region
    $region18: #{transformer_forward.120} parent=1 // pred_check
      _
    $region19: #{transformer_forward.120} parent=1 // pred_check_branch
      %73 = sbr.rel (0) target = $region21
    $region20: #{transformer_forward.120} parent=1 // pred_region
      %s75 = ssub.s32 256, 256
      %76 = vsyncadd [#allocation3], %s75
      %s77 = sshll.u32 [#allocation2], 4
      %s78 = int_to_ptr.vmem [resolvable:$true] %s77
      %83 = dma.vmem_to_hbm [thread:$0]  %s78, 256, %s4, [#allocation3], 128, 128, 8
    $region21: #{transformer_forward.120} parent=1 // pred_fallthru
      _
    // Predicated region
    $region22: #{transformer_forward.120} parent=1 // pred_check
      _
    $region23: #{transformer_forward.120} parent=1 // pred_check_branch
      %85 = sbr.rel (0) target = $region25
    $region24: #{transformer_forward.120} parent=1 // pred_region
      %86 = dma.done [#allocation3], 256
    $region25: #{transformer_forward.120} parent=1 // pred_fallthru
      _
    %87 = vsyncpa [#allocation3], 1

// kernel: transformer_forward.69
$region0: #{transformer_forward.69}
  #allocation0 [shape = 'u32[]', space=smem, size = 0x4, offset = 0x4, fixed_abs, tag = 'smem constant byte address 0x4 - core index']
  #allocation1 [shape = 'u32[144,128]{1,0:T(1,128)}', space=vmem, size = 0x12000, scoped, tag = 'internal scratch']
  #allocation2 [shape = 'f32[16,128]{1,0:T(8,128)}', space=vmem, size = 0x2000, scoped, tag = 'scratch operand']
  %s0 = inlined_call_operand.vmem [shape: f32[16,32], index: 0, kind: input, shape index: {}]
  %s1 = inlined_call_operand.vmem [shape: f32[32,128], index: 1, kind: input, shape index: {}]
  %s2 = inlined_call_operand.vmem [shape: f32[1,128], index: 2, kind: input, shape index: {}]
  %s3 = inlined_call_operand.vmem [shape: f32[16,128], index: 3, kind: output, shape index: {}]
  %s4 = sld [smem:[#allocation0]]
  $region30: #{transformer_forward.69} parent=0
    _
  %s6 = ssub.s32 1, %s4
  %s7 = scalar_select 0, %s6, %s4
  // Predicated region
  $region2: #{transformer_forward.69} parent=0 // pred_check
    _
  $region3: #{transformer_forward.69} parent=0 // pred_check_branch
    %9 = sbr.rel (0) target = $region5
  $region4: #{transformer_forward.69} parent=0 // pred_region
    _
  $region5: #{transformer_forward.69} parent=0 // pred_fallthru
    _
  // Predicated region
  $region6: #{transformer_forward.69} parent=0 // pred_check
    _
  $region7: #{transformer_forward.69} parent=0 // pred_check_branch
    %11 = sbr.rel (0) target = $region9
  $region8: #{transformer_forward.69} parent=0 // pred_region
    _
  $region9: #{transformer_forward.69} parent=0 // pred_fallthru
    _
  // Predicated region
  $region10: #{transformer_forward.69} parent=0 // pred_check
    _
  $region11: #{transformer_forward.69} parent=0 // pred_check_branch
    %13 = sbr.rel (0) target = $region13
  $region12: #{transformer_forward.69} parent=0 // pred_region
    _
  $region13: #{transformer_forward.69} parent=0 // pred_fallthru
    _
  %p15 = scmp.eq.s32.totalorder 0, 0
  // Predicated region
  $region14: #{transformer_forward.69} parent=0 // pred_check
    %p16 = pneg %p15
  $region15: #{transformer_forward.69} parent=0 // pred_check_branch
    %18 = sbr.rel (%p16) target = $region17
  $region16: #{transformer_forward.69} parent=0 // pred_region
    %19 = vst [vmem:[#allocation2] sm:$0xff] 0.0
    %20 = vst [vmem:[#allocation2 + $0x8] sm:$0xff] 0.0
  $region17: #{transformer_forward.69} parent=0 // pred_fallthru
    _
  %v21 = vld [vmem:[#allocation2] sm:$0xff]
  %v22 = vld [vmem:[#allocation2 + $0x8] sm:$0xff]
  %v23 = vld [vmem:[%s0] sm:$0xff]
  %v24 = vld [vmem:[%s0 + $0x8] sm:$0xff]
  %v25 = vpack.c.bf16 %v24, %v23
  %v26 = vld [vmem:[%s1] sm:$0xff]
  %v27 = vld [vmem:[%s1 + $0x8] sm:$0xff]
  %v28 = vld [vmem:[%s1 + $0x10] sm:$0xff]
  %v29 = vld [vmem:[%s1 + $0x18] sm:$0xff]
  %v30 = vpack.c.bf16 %v27, %v26
  %v31 = vpack.c.bf16 %v29, %v28
  %vm32 = vcmask 261120
  %v34 = vsel %vm32, %v25, 0
  %36 = vmatprep.subr.bf16.mxu0 0
  %37 = vmatpush1.bf16.msra.mxu0 %v30
  %38 = vmatprep.subr.bf16.mxu0 0
  %39 = vmatpush1.bf16.msra.mxu0 %v31
  %40 = vmatprep.subr.bf16.mxu0 0
  %41 = vmatpush1.bf16.msra.mxu0 0
  %42 = vmatprep.subr.bf16.mxu0 0
  %43 = vmatpush1.bf16.msra.mxu0 0
  %44 = vmatprep.subr.bf16.mxu0 0
  %45 = vmatpush1.bf16.msra.mxu0 0
  %46 = vmatprep.subr.bf16.mxu0 0
  %47 = vmatpush1.bf16.msra.mxu0 0
  %48 = vmatprep.subr.bf16.mxu0 0
  %49 = vmatpush1.bf16.msra.mxu0 0
  %50 = vmatprep.subr.bf16.mxu0 0
  %51 = vmatpush1.bf16.msra.mxu0 0
  %52 = vmatprep.subr.bf16.mxu0 0
  %53 = vmatpush1.bf16.msra.mxu0 0
  %54 = vmatprep.subr.bf16.mxu0 0
  %55 = vmatpush1.bf16.msra.mxu0 0
  %56 = vmatprep.subr.bf16.mxu0 0
  %57 = vmatpush1.bf16.msra.mxu0 0
  %58 = vmatprep.subr.bf16.mxu0 0
  %59 = vmatpush1.bf16.msra.mxu0 0
  %60 = vmatprep.subr.bf16.mxu0 0
  %61 = vmatpush1.bf16.msra.mxu0 0
  %62 = vmatprep.subr.bf16.mxu0 0
  %63 = vmatpush1.bf16.msra.mxu0 0
  %64 = vmatprep.subr.bf16.mxu0 0
  %65 = vmatpush1.bf16.msra.mxu0 0
  %66 = vmatprep.subr.bf16.mxu0 0
  %67 = vmatpush1.bf16.msra.mxu0 0
  %68 = vmatprep.mubr.bf16.mxu0 0
  %69 = vmatmul.mubr.bf16.gmra.mrb[0].mxu0 %v34
  %v70 = vpop.f32.mrb[0].mxu0
  %v71 = vadd.f32 0.0, %v70
  %v72 = vpop.f32.mrb[0].mxu0
  %v73 = vpop.f32.mrb[0].mxu0
  %v74 = vadd.f32 0.0, %v73
  %v75 = vpop.f32.mrb[0].mxu0
  %76 = vdwg.mxu0
  %v77 = vadd.f32 %v21, %v71
  %v78 = vadd.f32 %v22, %v74
  %79 = vst [vmem:[#allocation2] sm:$0xff] %v77
  %80 = vst [vmem:[#allocation2 + $0x8] sm:$0xff] %v78
  // Predicated region
  $region18: #{transformer_forward.69} parent=0 // pred_check
    %p81 = pneg %p15
  $region19: #{transformer_forward.69} parent=0 // pred_check_branch
    %83 = sbr.rel (%p81) target = $region21
  $region20: #{transformer_forward.69} parent=0 // pred_region
    %v84 = vld [vmem:[#allocation2] sm:$0xff]
    %v85 = vld [vmem:[#allocation2 + $0x8] sm:$0xff]
    %v86 = vld [vmem:[%s2] sm:$0x1]
    %v88 = vlaneseq
    %v89 = vshrl.u32 %v88, 7
    %v90 = vsub.s32 0, %v89
    %v91 = vrot.slane %v86, %v90
    %v93 = vadd.f32 %v84, %v91
    %v94 = vadd.f32 %v85, %v91
    %v95 = vmax.f32 %v93, 0.0
    %v96 = vmax.f32 %v94, 0.0
    %97 = vst [vmem:[%s3] sm:$0xff] %v95
    %98 = vst [vmem:[%s3 + $0x8] sm:$0xff] %v96
  $region21: #{transformer_forward.69} parent=0 // pred_fallthru
    _
  // Predicated region
  $region22: #{transformer_forward.69} parent=0 // pred_check
    _
  $region23: #{transformer_forward.69} parent=0 // pred_check_branch
    %100 = sbr.rel (0) target = $region25
  $region24: #{transformer_forward.69} parent=0 // pred_region
    _
  $region25: #{transformer_forward.69} parent=0 // pred_fallthru
    _
  // Predicated region
  $region26: #{transformer_forward.69} parent=0 // pred_check
    _
  $region27: #{transformer_forward.69} parent=0 // pred_check_branch
    %102 = sbr.rel (0) target = $region29
  $region28: #{transformer_forward.69} parent=0 // pred_region
    _
  $region29: #{transformer_forward.69} parent=0 // pred_fallthru
    _

</llo_original>
